<compile_context>
chip_gen: v7x
topology: tpu7x:2x2x1
jax: 0.10.0
libtpu: 0.0.40
codegen_flags: <defaults>
</compile_context>

<pallas_src>
import jax
import jax.numpy as jnp
from jax.experimental import pallas as pl
from jax.experimental.pallas import tpu as pltpu

BN_EPS = 1e-5
LRELU_SLOPE = 0.1
LANE = 128
DEFAULT_TM = 512                     # rows per grid step (VMEM-safe on v7x)
VMEM_LIMIT = 32 * 1024 * 1024


def _round_up(x, m):
    return (x + m - 1) // m * m


def _pad_last(a, target):
    pad = target - a.shape[-1]
    if pad == 0:
        return a
    return jnp.pad(a, [(0, 0)] * (a.ndim - 1) + [(0, pad)])


# ------------------------------ Pallas kernels ------------------------------


def _mm_stats_kernel(p_ref, w_ref, o_ref, s_ref):
    """One M-tile: bf16 matmul with f32 accumulation + per-tile channel stats.

    p_ref: (TM, K)   bf16 patches tile
    w_ref: (K, Cp)   bf16 weights (Cp lane-padded to a multiple of 128)
    o_ref: (TM, Cp)  f32 raw conv output tile
    s_ref: (8, Cp)   f32; row 0 = per-channel sum, row 1 = sum of squares
    """
    acc = jnp.dot(p_ref[...], w_ref[...], preferred_element_type=jnp.float32)
    o_ref[...] = acc
    ssum = jnp.sum(acc, axis=0, keepdims=True)           # (1, Cp) XLU reduce
    ssq = jnp.sum(acc * acc, axis=0, keepdims=True)      # (1, Cp)
    rows = jax.lax.broadcasted_iota(jnp.int32, s_ref.shape, 0)
    s_ref[...] = jnp.where(rows == 0, ssum, jnp.where(rows == 1, ssq, 0.0))


def _affine_lrelu_kernel(x_ref, scale_ref, shift_ref, o_ref):
    """y = x * scale + shift (folded BatchNorm), then LeakyReLU(0.1)."""
    y = x_ref[...] * scale_ref[...] + shift_ref[...]
    o_ref[...] = jnp.where(y > 0, y, LRELU_SLOPE * y).astype(o_ref.dtype)


# --------------------------- tiled pallas wrappers ---------------------------


def _tiled_matmul_stats(patches, w_padded, tm):
    """patches (M, K) bf16 @ w (K, Cp) bf16 -> raw (Mp, Cp) f32 + column sums."""
    m, k = patches.shape
    cp = w_padded.shape[1]
    mp = _round_up(m, tm)
    if mp != m:                       # zero rows: contribute 0 to sum / sumsq
        patches = jnp.pad(patches, ((0, mp - m), (0, 0)))
    nt = mp // tm

    flops = 2 * mp * k * cp
    bytes_accessed = int(mp * k * patches.dtype.itemsize
                         + k * cp * w_padded.dtype.itemsize
                         + mp * cp * 4 + nt * 8 * cp * 4)

    raw, stats = pl.pallas_call(
        _mm_stats_kernel,
        out_shape=(jax.ShapeDtypeStruct((mp, cp), jnp.float32),
                   jax.ShapeDtypeStruct((nt * 8, cp), jnp.float32)),
        grid=(nt,),
        in_specs=[pl.BlockSpec((tm, k), lambda i: (i, 0)),
                  pl.BlockSpec((k, cp), lambda i: (0, 0))],
        out_specs=(pl.BlockSpec((tm, cp), lambda i: (i, 0)),
                   pl.BlockSpec((8, cp), lambda i: (i, 0))),
        compiler_params=pltpu.CompilerParams(
            dimension_semantics=("parallel",),
            vmem_limit_bytes=VMEM_LIMIT),
        cost_estimate=pl.CostEstimate(flops=flops, transcendentals=0,
                                      bytes_accessed=bytes_accessed),
    )(patches, w_padded)

    stats = stats.reshape(nt, 8, cp)
    return raw, jnp.sum(stats[:, 0, :], axis=0), jnp.sum(stats[:, 1, :], axis=0)


def _tiled_affine_lrelu(raw, scale_cols, shift_cols, out_dtype, tm):
    """Tiled per-column affine + LeakyReLU over the raw (Mp, Cp) conv output."""
    mp, cp = raw.shape
    nt = mp // tm
    bytes_accessed = int(mp * cp * (4 + jnp.dtype(out_dtype).itemsize)
                         + 2 * cp * 4)
    return pl.pallas_call(
        _affine_lrelu_kernel,
        out_shape=jax.ShapeDtypeStruct((mp, cp), out_dtype),
        grid=(nt,),
        in_specs=[pl.BlockSpec((tm, cp), lambda i: (i, 0)),
                  pl.BlockSpec((1, cp), lambda i: (0, 0)),
                  pl.BlockSpec((1, cp), lambda i: (0, 0))],
        out_specs=pl.BlockSpec((tm, cp), lambda i: (i, 0)),
        compiler_params=pltpu.CompilerParams(
            dimension_semantics=("parallel",),
            vmem_limit_bytes=VMEM_LIMIT),
        cost_estimate=pl.CostEstimate(flops=3 * mp * cp, transcendentals=0,
                                      bytes_accessed=bytes_accessed),
    )(raw, scale_cols.reshape(1, cp).astype(jnp.float32),
      shift_cols.reshape(1, cp).astype(jnp.float32))


def _bn_scale_shift(colsum, colsq, count, gamma, beta):
    # NOTE: E[x^2]-mean^2 in f32; fine here because conv outputs of ~zero-mean
    # activations have small |mean|/sigma.
    mean = colsum / count
    var = colsq / count - mean * mean
    scale = gamma * jax.lax.rsqrt(var + BN_EPS)
    return scale, beta - mean * scale


# --------------------------- JAX-side data plumbing --------------------------


def _im2col_3x3(xpad, oh, ow):
    """xpad: (N, oh+2, ow+2, C) -> (N*oh*ow, 9*C), tap order (kh, kw, c)."""
    n, c = xpad.shape[0], xpad.shape[-1]
    cols = [xpad[:, kh:kh + oh, kw:kw + ow, :]
            for kh in range(3) for kw in range(3)]
    p = jnp.stack(cols, axis=3)                       # (N, oh, ow, 9, C)
    return p.reshape(n * oh * ow, 9 * c)


def _subpixel_deconv_patches(x_nhwc):
    """(N,H,W,Cin) -> (N*H*W, 4*Cin): 2x2 neighborhood taps, zero pad b/r."""
    n, h, w, c = x_nhwc.shape
    xp = jnp.pad(x_nhwc, ((0, 0), (0, 1), (0, 1), (0, 0)))
    taps = [xp[:, ti:ti + h, tj:tj + w, :] for ti in range(2) for tj in range(2)]
    return jnp.concatenate(taps, axis=-1).reshape(n * h * w, 4 * c)


def _subpixel_deconv_weight(wt):
    """ConvTranspose2d weight (Cin, Cout, 3, 3) -> (4*Cin, 4*Cout) operand.

    Row blocks = 2x2 input taps (ti, tj); column blocks = output parity
    (di, dj).  Tap (ti,tj) contributes to parity (di,dj) through kernel
    position (kh, kw) = (di+1-2*ti, dj+1-2*tj) when it lies in [0, 2].
    """
    cin, cout = wt.shape[0], wt.shape[1]
    rows = []
    for ti in range(2):
        for tj in range(2):
            cols = []
            for di in range(2):
                for dj in range(2):
                    kh = di + 1 - 2 * ti
                    kw = dj + 1 - 2 * tj
                    if 0 <= kh <= 2 and 0 <= kw <= 2:
                        cols.append(wt[:, :, kh, kw])
                    else:
                        cols.append(jnp.zeros((cin, cout), wt.dtype))
            rows.append(jnp.concatenate(cols, axis=1))
    return jnp.concatenate(rows, axis=0)


# ------------------------------ forward pass --------------------------------


def decoder_block_forward(params, x_nchw, skip_nchw, *, tm=DEFAULT_TM):
    """DecoderBlock.forward(x, skip) with upsample_mode='transpose'."""
    n, cin, h, w = x_nchw.shape
    cout = params["deconv_w"].shape[1]
    oh, ow = 2 * h, 2 * w

    # ---- deconv: ConvTranspose2d(k=3,s=2,p=1,op=1) via sub-pixel decomposition
    x = jnp.transpose(x_nchw, (0, 2, 3, 1)).astype(jnp.bfloat16)   # NHWC bf16
    m1 = n * h * w
    tm1 = min(tm, _round_up(m1, 8))
    patches1 = _subpixel_deconv_patches(x)                         # (M1, 4*Cin)
    cp1 = _round_up(4 * cout, LANE)
    wd = _pad_last(_subpixel_deconv_weight(params["deconv_w"]), cp1)
    raw1, csum1, csq1 = _tiled_matmul_stats(patches1,
                                            wd.astype(jnp.bfloat16), tm1)

    # BN over (N, 2H, 2W): fold the 4 parity column-groups into per-channel
    # stats (padded rows / lanes contribute exact zeros).
    ch_sum = jnp.sum(csum1[:4 * cout].reshape(4, cout), axis=0)
    ch_sq = jnp.sum(csq1[:4 * cout].reshape(4, cout), axis=0)
    scale1, shift1 = _bn_scale_shift(ch_sum, ch_sq, 4.0 * m1,
                                     params["bn1_gamma"], params["bn1_beta"])
    y1 = _tiled_affine_lrelu(raw1,
                             _pad_last(jnp.tile(scale1, 4), cp1),
                             _pad_last(jnp.tile(shift1, 4), cp1),
                             jnp.bfloat16, tm1)
    deconv = (y1[:m1, :4 * cout]
              .reshape(n, h, w, 2, 2, cout)
              .transpose(0, 1, 3, 2, 4, 5)
              .reshape(n, oh, ow, cout))                           # NHWC bf16

    # ---- concat + ReflectionPad2d(1) + Conv2d(k=3,s=1) + BN + LeakyReLU
    if skip_nchw is not None and skip_nchw.shape[1] > 0:
        skip = jnp.transpose(skip_nchw, (0, 2, 3, 1)).astype(jnp.bfloat16)
        concat = jnp.concatenate([deconv, skip], axis=-1)
    else:
        concat = deconv
    cc = concat.shape[-1]
    # TODO(synk): pull the reflection pad + 3x3 patch extraction into the
    # matmul kernel via halo'd manual DMAs to avoid the 9x im2col HBM blowup.
    cpad = jnp.pad(concat, ((0, 0), (1, 1), (1, 1), (0, 0)), mode="reflect")
    patches2 = _im2col_3x3(cpad, oh, ow)                           # (M2, 9*Cc)
    m2 = n * oh * ow
    tm2 = min(tm, _round_up(m2, 8))
    cp2 = _round_up(cout, LANE)
    w2 = jnp.transpose(params["conv_w"], (2, 3, 1, 0)).reshape(9 * cc, cout)
    w2 = _pad_last(w2, cp2).astype(jnp.bfloat16)
    raw2, csum2, csq2 = _tiled_matmul_stats(patches2, w2, tm2)
    scale2, shift2 = _bn_scale_shift(csum2[:cout], csq2[:cout], float(m2),
                                     params["bn2_gamma"], params["bn2_beta"])
    y2 = _tiled_affine_lrelu(raw2, _pad_last(scale2, cp2),
                             _pad_last(shift2, cp2), jnp.float32, tm2)
    out = y2[:m2, :cout].reshape(n, oh, ow, cout)
    return jnp.transpose(out, (0, 3, 1, 2))                        # NCHW


# ---------------- pure-JAX reference (correctness check only) ----------------
def _bn_lrelu_ref(x, gamma, beta):
    mean = x.mean(axis=(0, 2, 3), keepdims=True)
    var = x.var(axis=(0, 2, 3), keepdims=True)
    y = (x - mean) / jnp.sqrt(var + BN_EPS)
    y = y * gamma.reshape(1, -1, 1, 1) + beta.reshape(1, -1, 1, 1)
    return jnp.where(y > 0, y, LRELU_SLOPE * y)


def _reference(params, x, skip):
    wt = params["deconv_w"]
    w_equiv = jnp.transpose(wt[:, :, ::-1, ::-1], (1, 0, 2, 3))
    y = jax.lax.conv_general_dilated(
        x, w_equiv, window_strides=(1, 1), padding=((1, 2), (1, 2)),
        lhs_dilation=(2, 2), dimension_numbers=("NCHW", "OIHW", "NCHW"),
        precision=jax.lax.Precision.HIGHEST)
    y = _bn_lrelu_ref(y, params["bn1_gamma"], params["bn1_beta"])
    cat = jnp.concatenate([y, skip], axis=1)
    catp = jnp.pad(cat, ((0, 0), (0, 0), (1, 1), (1, 1)), mode="reflect")
    z = jax.lax.conv_general_dilated(
        catp, params["conv_w"], window_strides=(1, 1), padding="VALID",
        dimension_numbers=("NCHW", "OIHW", "NCHW"),
        precision=jax.lax.Precision.HIGHEST)
    return _bn_lrelu_ref(z, params["bn2_gamma"], params["bn2_beta"])


if __name__ == "__main__":
    key = jax.random.PRNGKey(0)
    n, cin, cskip, cout, h, w = 2, 8, 4, 8, 16, 16
    ks = jax.random.split(key, 8)

    x = jax.random.normal(ks[0], (n, cin, h, w), jnp.float32)
    skip = jax.random.normal(ks[1], (n, cskip, 2 * h, 2 * w), jnp.float32)

    params = {
        # ConvTranspose2d weight: (in_channels, out_channels, 3, 3)
        "deconv_w": 0.1 * jax.random.normal(ks[2], (cin, cout, 3, 3), jnp.float32),
        "bn1_gamma": 1.0 + 0.1 * jax.random.normal(ks[3], (cout,), jnp.float32),
        "bn1_beta": 0.1 * jax.random.normal(ks[4], (cout,), jnp.float32),
        # Conv2d weight: (out_channels, skip+out channels, 3, 3)
        "conv_w": 0.1 * jax.random.normal(ks[5], (cout, cout + cskip, 3, 3),
                                          jnp.float32),
        "bn2_gamma": 1.0 + 0.1 * jax.random.normal(ks[6], (cout,), jnp.float32),
        "bn2_beta": 0.1 * jax.random.normal(ks[7], (cout,), jnp.float32),
    }

    out = jax.jit(decoder_block_forward)(params, x, skip)
    out = jax.block_until_ready(out)

    assert out.shape == (n, cout, 2 * h, 2 * w), out.shape
    ref = _reference(params, x, skip)
    err = float(jnp.max(jnp.abs(out - ref)))
    # bf16 MXU operands across two conv+BN layers on ~unit-variance outputs.
    assert err < 1e-1, f"mismatch vs JAX reference: max abs err = {err}"

    print("KERNEL_OK")
</pallas_src>

<mosaic_0001>
module attributes {stable_mosaic.version = 11 : i64} {
  func.func @_mm_stats_kernel(%arg0: i32, %arg1: memref<512x32xbf16, #tpu.memory_space<vmem>>, %arg2: memref<32x128xbf16, #tpu.memory_space<vmem>>, %arg3: memref<512x128xf32, #tpu.memory_space<vmem>>, %arg4: memref<8x128xf32, #tpu.memory_space<vmem>>) attributes {dimension_semantics = [#tpu.dimension_semantics<parallel>], iteration_bounds = array<i64: 1>, scalar_prefetch = 0 : i64, scratch_operands = 0 : i64, tpu.core_type = #tpu.core_type<tc>, window_params = [{transform_indices = @transform_0, window_bounds = array<i64: 512, 32>}, {pipeline_mode = #tpu.pipeline_mode<synchronous>, transform_indices = @transform_1, window_bounds = array<i64: 32, 128>}, {transform_indices = @transform_2, window_bounds = array<i64: 512, 128>}, {transform_indices = @transform_3, window_bounds = array<i64: 8, 128>}]} {
    %c0 = arith.constant 0 : index
    %c0_0 = arith.constant 0 : index
    %0 = vector.load %arg1[%c0, %c0_0] : memref<512x32xbf16, #tpu.memory_space<vmem>>, vector<512x32xbf16>
    %c0_1 = arith.constant 0 : index
    %c0_2 = arith.constant 0 : index
    %1 = vector.load %arg2[%c0_1, %c0_2] : memref<32x128xbf16, #tpu.memory_space<vmem>>, vector<32x128xbf16>
    %cst = arith.constant dense<0.000000e+00> : vector<512x128xf32>
    %2 = tpu.matmul %0, %1, %cst {dimension_numbers = #tpu.dot_dimension_numbers<[1], [0], [0], [1], [0, 0, 1, 1], [], []>} : vector<512x32xbf16>, vector<32x128xbf16>, vector<512x128xf32> -> vector<512x128xf32>
    %c0_3 = arith.constant 0 : index
    %c0_4 = arith.constant 0 : index
    %3 = vector.load %arg3[%c0_3, %c0_4] : memref<512x128xf32, #tpu.memory_space<vmem>>, vector<512x128xf32>
    tpu.vector_store %arg3[%c0_3, %c0_4], %2 {strides = array<i32>} : memref<512x128xf32, #tpu.memory_space<vmem>>, vector<512x128xf32>,
    %cst_5 = arith.constant dense<0.000000e+00> : vector<128xf32>
    %4 = vector.multi_reduction <add>, %2, %cst_5 [0] : vector<512x128xf32> to vector<128xf32>
    %5 = vector.shape_cast %4 : vector<128xf32> to vector<1x128xf32>
    %6 = arith.mulf %2, %2 : vector<512x128xf32>
    %cst_6 = arith.constant dense<0.000000e+00> : vector<128xf32>
    %7 = vector.multi_reduction <add>, %6, %cst_6 [0] : vector<512x128xf32> to vector<128xf32>
    %8 = vector.shape_cast %7 : vector<128xf32> to vector<1x128xf32>
    %9 = tpu.iota {dimensions = array<i32: 0>} : vector<8x128xi32>
    %c0_i32 = arith.constant 0 : i32
    %10 = vector.broadcast %c0_i32 : i32 to vector<8x128xi32>
    %11 = arith.cmpi eq, %9, %10 : vector<8x128xi32>
    %c1_i32 = arith.constant 1 : i32
    %12 = vector.broadcast %c1_i32 : i32 to vector<8x128xi32>
    %13 = arith.cmpi eq, %9, %12 : vector<8x128xi32>
    %cst_7 = arith.constant 0.000000e+00 : f32
    %14 = vector.shape_cast %8 : vector<1x128xf32> to vector<1x128xf32>
    %15 = vector.broadcast %14 : vector<1x128xf32> to vector<8x128xf32>
    %16 = vector.broadcast %cst_7 : f32 to vector<8x128xf32>
    %17 = arith.select %13, %15, %16 : vector<8x128xi1>, vector<8x128xf32>
    %18 = vector.shape_cast %5 : vector<1x128xf32> to vector<1x128xf32>
    %19 = vector.broadcast %18 : vector<1x128xf32> to vector<8x128xf32>
    %20 = arith.select %11, %19, %17 : vector<8x128xi1>, vector<8x128xf32>
    %c0_8 = arith.constant 0 : index
    %c0_9 = arith.constant 0 : index
    %21 = vector.load %arg4[%c0_8, %c0_9] : memref<8x128xf32, #tpu.memory_space<vmem>>, vector<8x128xf32>
    tpu.vector_store %arg4[%c0_8, %c0_9], %20 {strides = array<i32>} : memref<8x128xf32, #tpu.memory_space<vmem>>, vector<8x128xf32>,
    return
  }
  func.func @transform_0(%arg0: i32) -> (i32, i32) {
    %c0_i32 = arith.constant 0 : i32
    %c0_i32_0 = arith.constant 0 : i32
    return %arg0, %c0_i32 : i32, i32
  }
  func.func @transform_1(%arg0: i32) -> (i32, i32) {
    %c0_i32 = arith.constant 0 : i32
    %c0_i32_0 = arith.constant 0 : i32
    %c0_i32_1 = arith.constant 0 : i32
    return %c0_i32, %c0_i32_0 : i32, i32
  }
  func.func @transform_2(%arg0: i32) -> (i32, i32) {
    %c0_i32 = arith.constant 0 : i32
    %c0_i32_0 = arith.constant 0 : i32
    return %arg0, %c0_i32 : i32, i32
  }
  func.func @transform_3(%arg0: i32) -> (i32, i32) {
    %c0_i32 = arith.constant 0 : i32
    %c0_i32_0 = arith.constant 0 : i32
    return %arg0, %c0_i32 : i32, i32
  }
}

module attributes {stable_mosaic.version = 11 : i64} {
  func.func @_affine_lrelu_kernel(%arg0: i32, %arg1: memref<512x128xf32, #tpu.memory_space<vmem>>, %arg2: memref<1x128xf32, #tpu.memory_space<vmem>>, %arg3: memref<1x128xf32, #tpu.memory_space<vmem>>, %arg4: memref<512x128xbf16, #tpu.memory_space<vmem>>) attributes {dimension_semantics = [#tpu.dimension_semantics<parallel>], iteration_bounds = array<i64: 1>, scalar_prefetch = 0 : i64, scratch_operands = 0 : i64, tpu.core_type = #tpu.core_type<tc>, window_params = [{transform_indices = @transform_0, window_bounds = array<i64: 512, 128>}, {pipeline_mode = #tpu.pipeline_mode<synchronous>, transform_indices = @transform_1, window_bounds = array<i64: 1, 128>}, {pipeline_mode = #tpu.pipeline_mode<synchronous>, transform_indices = @transform_2, window_bounds = array<i64: 1, 128>}, {transform_indices = @transform_3, window_bounds = array<i64: 512, 128>}]} {
    %c0 = arith.constant 0 : index
    %c0_0 = arith.constant 0 : index
    %0 = vector.load %arg1[%c0, %c0_0] : memref<512x128xf32, #tpu.memory_space<vmem>>, vector<512x128xf32>
    %c0_1 = arith.constant 0 : index
    %c0_2 = arith.constant 0 : index
    %1 = vector.load %arg2[%c0_1, %c0_2] : memref<1x128xf32, #tpu.memory_space<vmem>>, vector<1x128xf32>
    %2 = vector.broadcast %1 : vector<1x128xf32> to vector<512x128xf32>
    %3 = arith.mulf %0, %2 : vector<512x128xf32>
    %c0_3 = arith.constant 0 : index
    %c0_4 = arith.constant 0 : index
    %4 = vector.load %arg3[%c0_3, %c0_4] : memref<1x128xf32, #tpu.memory_space<vmem>>, vector<1x128xf32>
    %5 = vector.broadcast %4 : vector<1x128xf32> to vector<512x128xf32>
    %6 = arith.addf %3, %5 : vector<512x128xf32>
    %cst = arith.constant 0.000000e+00 : f32
    %7 = vector.broadcast %cst : f32 to vector<512x128xf32>
    %8 = arith.cmpf ogt, %6, %7 : vector<512x128xf32>
    %cst_5 = arith.constant 1.000000e-01 : f32
    %9 = vector.broadcast %cst_5 : f32 to vector<512x128xf32>
    %10 = arith.mulf %9, %6 : vector<512x128xf32>
    %11 = arith.select %8, %6, %10 : vector<512x128xi1>, vector<512x128xf32>
    %12 = arith.truncf %11 : vector<512x128xf32> to vector<512x128xbf16>
    %c0_6 = arith.constant 0 : index
    %c0_7 = arith.constant 0 : index
    %13 = vector.load %arg4[%c0_6, %c0_7] : memref<512x128xbf16, #tpu.memory_space<vmem>>, vector<512x128xbf16>
    tpu.vector_store %arg4[%c0_6, %c0_7], %12 {strides = array<i32>} : memref<512x128xbf16, #tpu.memory_space<vmem>>, vector<512x128xbf16>,
    return
  }
  func.func @transform_0(%arg0: i32) -> (i32, i32) {
    %c0_i32 = arith.constant 0 : i32
    %c0_i32_0 = arith.constant 0 : i32
    return %arg0, %c0_i32 : i32, i32
  }
  func.func @transform_1(%arg0: i32) -> (i32, i32) {
    %c0_i32 = arith.constant 0 : i32
    %c0_i32_0 = arith.constant 0 : i32
    %c0_i32_1 = arith.constant 0 : i32
    return %c0_i32, %c0_i32_0 : i32, i32
  }
  func.func @transform_2(%arg0: i32) -> (i32, i32) {
    %c0_i32 = arith.constant 0 : i32
    %c0_i32_0 = arith.constant 0 : i32
    %c0_i32_1 = arith.constant 0 : i32
    return %c0_i32, %c0_i32_0 : i32, i32
  }
  func.func @transform_3(%arg0: i32) -> (i32, i32) {
    %c0_i32 = arith.constant 0 : i32
    %c0_i32_0 = arith.constant 0 : i32
    return %arg0, %c0_i32 : i32, i32
  }
}

module attributes {stable_mosaic.version = 11 : i64} {
  func.func @_mm_stats_kernel(%arg0: i32, %arg1: memref<512x108xbf16, #tpu.memory_space<vmem>>, %arg2: memref<108x128xbf16, #tpu.memory_space<vmem>>, %arg3: memref<512x128xf32, #tpu.memory_space<vmem>>, %arg4: memref<8x128xf32, #tpu.memory_space<vmem>>) attributes {dimension_semantics = [#tpu.dimension_semantics<parallel>], iteration_bounds = array<i64: 4>, scalar_prefetch = 0 : i64, scratch_operands = 0 : i64, tpu.core_type = #tpu.core_type<tc>, window_params = [{transform_indices = @transform_0, window_bounds = array<i64: 512, 108>}, {pipeline_mode = #tpu.pipeline_mode<synchronous>, transform_indices = @transform_1, window_bounds = array<i64: 108, 128>}, {transform_indices = @transform_2, window_bounds = array<i64: 512, 128>}, {transform_indices = @transform_3, window_bounds = array<i64: 8, 128>}]} {
    %c0 = arith.constant 0 : index
    %c0_0 = arith.constant 0 : index
    %0 = vector.load %arg1[%c0, %c0_0] : memref<512x108xbf16, #tpu.memory_space<vmem>>, vector<512x108xbf16>
    %c0_1 = arith.constant 0 : index
    %c0_2 = arith.constant 0 : index
    %1 = vector.load %arg2[%c0_1, %c0_2] : memref<108x128xbf16, #tpu.memory_space<vmem>>, vector<108x128xbf16>
    %cst = arith.constant dense<0.000000e+00> : vector<512x128xf32>
    %2 = tpu.matmul %0, %1, %cst {dimension_numbers = #tpu.dot_dimension_numbers<[1], [0], [0], [1], [0, 0, 1, 1], [], []>} : vector<512x108xbf16>, vector<108x128xbf16>, vector<512x128xf32> -> vector<512x128xf32>
    %c0_3 = arith.constant 0 : index
    %c0_4 = arith.constant 0 : index
    %3 = vector.load %arg3[%c0_3, %c0_4] : memref<512x128xf32, #tpu.memory_space<vmem>>, vector<512x128xf32>
    tpu.vector_store %arg3[%c0_3, %c0_4], %2 {strides = array<i32>} : memref<512x128xf32, #tpu.memory_space<vmem>>, vector<512x128xf32>,
    %cst_5 = arith.constant dense<0.000000e+00> : vector<128xf32>
    %4 = vector.multi_reduction <add>, %2, %cst_5 [0] : vector<512x128xf32> to vector<128xf32>
    %5 = vector.shape_cast %4 : vector<128xf32> to vector<1x128xf32>
    %6 = arith.mulf %2, %2 : vector<512x128xf32>
    %cst_6 = arith.constant dense<0.000000e+00> : vector<128xf32>
    %7 = vector.multi_reduction <add>, %6, %cst_6 [0] : vector<512x128xf32> to vector<128xf32>
    %8 = vector.shape_cast %7 : vector<128xf32> to vector<1x128xf32>
    %9 = tpu.iota {dimensions = array<i32: 0>} : vector<8x128xi32>
    %c0_i32 = arith.constant 0 : i32
    %10 = vector.broadcast %c0_i32 : i32 to vector<8x128xi32>
    %11 = arith.cmpi eq, %9, %10 : vector<8x128xi32>
    %c1_i32 = arith.constant 1 : i32
    %12 = vector.broadcast %c1_i32 : i32 to vector<8x128xi32>
    %13 = arith.cmpi eq, %9, %12 : vector<8x128xi32>
    %cst_7 = arith.constant 0.000000e+00 : f32
    %14 = vector.shape_cast %8 : vector<1x128xf32> to vector<1x128xf32>
    %15 = vector.broadcast %14 : vector<1x128xf32> to vector<8x128xf32>
    %16 = vector.broadcast %cst_7 : f32 to vector<8x128xf32>
    %17 = arith.select %13, %15, %16 : vector<8x128xi1>, vector<8x128xf32>
    %18 = vector.shape_cast %5 : vector<1x128xf32> to vector<1x128xf32>
    %19 = vector.broadcast %18 : vector<1x128xf32> to vector<8x128xf32>
    %20 = arith.select %11, %19, %17 : vector<8x128xi1>, vector<8x128xf32>
    %c0_8 = arith.constant 0 : index
    %c0_9 = arith.constant 0 : index
    %21 = vector.load %arg4[%c0_8, %c0_9] : memref<8x128xf32, #tpu.memory_space<vmem>>, vector<8x128xf32>
    tpu.vector_store %arg4[%c0_8, %c0_9], %20 {strides = array<i32>} : memref<8x128xf32, #tpu.memory_space<vmem>>, vector<8x128xf32>,
    return
  }
  func.func @transform_0(%arg0: i32) -> (i32, i32) {
    %c0_i32 = arith.constant 0 : i32
    %c0_i32_0 = arith.constant 0 : i32
    return %arg0, %c0_i32 : i32, i32
  }
  func.func @transform_1(%arg0: i32) -> (i32, i32) {
    %c0_i32 = arith.constant 0 : i32
    %c0_i32_0 = arith.constant 0 : i32
    %c0_i32_1 = arith.constant 0 : i32
    return %c0_i32, %c0_i32_0 : i32, i32
  }
  func.func @transform_2(%arg0: i32) -> (i32, i32) {
    %c0_i32 = arith.constant 0 : i32
    %c0_i32_0 = arith.constant 0 : i32
    return %arg0, %c0_i32 : i32, i32
  }
  func.func @transform_3(%arg0: i32) -> (i32, i32) {
    %c0_i32 = arith.constant 0 : i32
    %c0_i32_0 = arith.constant 0 : i32
    return %arg0, %c0_i32 : i32, i32
  }
}

module attributes {stable_mosaic.version = 11 : i64} {
  func.func @_affine_lrelu_kernel(%arg0: i32, %arg1: memref<512x128xf32, #tpu.memory_space<vmem>>, %arg2: memref<1x128xf32, #tpu.memory_space<vmem>>, %arg3: memref<1x128xf32, #tpu.memory_space<vmem>>, %arg4: memref<512x128xf32, #tpu.memory_space<vmem>>) attributes {dimension_semantics = [#tpu.dimension_semantics<parallel>], iteration_bounds = array<i64: 4>, scalar_prefetch = 0 : i64, scratch_operands = 0 : i64, tpu.core_type = #tpu.core_type<tc>, window_params = [{transform_indices = @transform_0, window_bounds = array<i64: 512, 128>}, {pipeline_mode = #tpu.pipeline_mode<synchronous>, transform_indices = @transform_1, window_bounds = array<i64: 1, 128>}, {pipeline_mode = #tpu.pipeline_mode<synchronous>, transform_indices = @transform_2, window_bounds = array<i64: 1, 128>}, {transform_indices = @transform_3, window_bounds = array<i64: 512, 128>}]} {
    %c0 = arith.constant 0 : index
    %c0_0 = arith.constant 0 : index
    %0 = vector.load %arg1[%c0, %c0_0] : memref<512x128xf32, #tpu.memory_space<vmem>>, vector<512x128xf32>
    %c0_1 = arith.constant 0 : index
    %c0_2 = arith.constant 0 : index
    %1 = vector.load %arg2[%c0_1, %c0_2] : memref<1x128xf32, #tpu.memory_space<vmem>>, vector<1x128xf32>
    %2 = vector.broadcast %1 : vector<1x128xf32> to vector<512x128xf32>
    %3 = arith.mulf %0, %2 : vector<512x128xf32>
    %c0_3 = arith.constant 0 : index
    %c0_4 = arith.constant 0 : index
    %4 = vector.load %arg3[%c0_3, %c0_4] : memref<1x128xf32, #tpu.memory_space<vmem>>, vector<1x128xf32>
    %5 = vector.broadcast %4 : vector<1x128xf32> to vector<512x128xf32>
    %6 = arith.addf %3, %5 : vector<512x128xf32>
    %cst = arith.constant 0.000000e+00 : f32
    %7 = vector.broadcast %cst : f32 to vector<512x128xf32>
    %8 = arith.cmpf ogt, %6, %7 : vector<512x128xf32>
    %cst_5 = arith.constant 1.000000e-01 : f32
    %9 = vector.broadcast %cst_5 : f32 to vector<512x128xf32>
    %10 = arith.mulf %9, %6 : vector<512x128xf32>
    %11 = arith.select %8, %6, %10 : vector<512x128xi1>, vector<512x128xf32>
    %c0_6 = arith.constant 0 : index
    %c0_7 = arith.constant 0 : index
    %12 = vector.load %arg4[%c0_6, %c0_7] : memref<512x128xf32, #tpu.memory_space<vmem>>, vector<512x128xf32>
    tpu.vector_store %arg4[%c0_6, %c0_7], %11 {strides = array<i32>} : memref<512x128xf32, #tpu.memory_space<vmem>>, vector<512x128xf32>,
    return
  }
  func.func @transform_0(%arg0: i32) -> (i32, i32) {
    %c0_i32 = arith.constant 0 : i32
    %c0_i32_0 = arith.constant 0 : i32
    return %arg0, %c0_i32 : i32, i32
  }
  func.func @transform_1(%arg0: i32) -> (i32, i32) {
    %c0_i32 = arith.constant 0 : i32
    %c0_i32_0 = arith.constant 0 : i32
    %c0_i32_1 = arith.constant 0 : i32
    return %c0_i32, %c0_i32_0 : i32, i32
  }
  func.func @transform_2(%arg0: i32) -> (i32, i32) {
    %c0_i32 = arith.constant 0 : i32
    %c0_i32_0 = arith.constant 0 : i32
    %c0_i32_1 = arith.constant 0 : i32
    return %c0_i32, %c0_i32_0 : i32, i32
  }
  func.func @transform_3(%arg0: i32) -> (i32, i32) {
    %c0_i32 = arith.constant 0 : i32
    %c0_i32_0 = arith.constant 0 : i32
    return %arg0, %c0_i32 : i32, i32
  }
}

</mosaic_0001>

<llo_original>
// kernel: tile.18
$region0: #{tile.18}
  #allocation0 [shape = 's32[1]{0}', space=sflag, size = 0x4, scoped, tag = 'scoped memory for tile.18']
  %s0 = inlined_call_operand.vmem [shape: f32[8], index: 0, kind: input, shape index: {}]
  %s1 = inlined_call_operand.vmem [shape: f32[4,8], index: 1, kind: output, shape index: {}]
  // Predicated region
  $region2: #{tile.18} parent=0 // pred_check
    _
  $region3: #{tile.18} parent=0 // pred_check_branch
    %3 = sbr.rel (0) target = $region5
  $region4: #{tile.18} parent=0 // pred_region
    _
  $region5: #{tile.18} parent=0 // pred_fallthru
    _
  %v4 = vld [vmem:[%s0] ss:$0 sm:$0xff]
  %5 = vst [vmem:[%s1] sm:$0xf] %v4

// kernel: tile.19
$region0: #{tile.19}
  %s0 = inlined_call_operand.vmem [shape: f32[4,8], index: 0, kind: input, shape index: {}]
  %s1 = inlined_call_operand.vmem [shape: f32[32], index: 1, kind: output, shape index: {}]
  $region1: #{tile.19} parent=0
    #allocation0 [shape = 'u8[4096]{0}', space=vmem, size = 0x1000, scoped, tag = 'scoped mem for output reshape']
    #allocation1 [shape = 'u8[4096]{0}', space=vmem, size = 0x1000, scoped, tag = 'scoped mem for input reshape']
    %s3 = sshllo.u32 0, 4
    %v4 = vld [vmem:[%s0] sm:%s3]
    %5 = vst [vmem:[#allocation1] sm:%s3] %v4
    %v6 = vld [vmem:[#allocation1] sm:$0x1]
    %vm7 = vcmask 64512
    %8 = vst.msk [vmem:[#allocation0] sm:$0x1] %vm7, %v6
    %s9 = scalar_lea.vmem [#allocation1], 3
    %v10 = vld [vmem:[%s9] sm:$0x1]
    %11 = vrot.lane.b32.xlu0 %v10, 24
    %v12 = vpop.permute.xlu0 %11
    %vm13 = vcmask 261312
    %14 = vst.msk [vmem:[#allocation0] sm:$0x1] %vm13, %v12
    %s15 = scalar_lea.vmem [#allocation1], 2
    %v16 = vld [vmem:[%s15] sm:$0x1]
    %17 = vrot.lane.b32.xlu0 %v16, 16
    %v18 = vpop.permute.xlu0 %17
    %vm19 = vcmask 195712
    %20 = vst.msk [vmem:[#allocation0] sm:$0x1] %vm19, %v18
    %s21 = scalar_lea.vmem [#allocation1], 1
    %v22 = vld [vmem:[%s21] sm:$0x1]
    %23 = vrot.lane.b32.xlu0 %v22, 8
    %v24 = vpop.permute.xlu0 %23
    %vm25 = vcmask 130112
    %26 = vst.msk [vmem:[#allocation0] sm:$0x1] %vm25, %v24
    %s28 = sshllo.u32 0, 1
    %v30 = vld [vmem:[#allocation0] sm:%s28]
    %s31 = sshllo.u32 0, 1
    %32 = vst [vmem:[%s1] sm:%s31] %v30

// kernel: decoder_block_forward.4
$region0: #{decoder_block_forward.4}
  #allocation0 [shape = 'u32[]', space=smem, size = 0x4, offset = 0x4, fixed_abs, tag = 'smem constant byte address 0x4 - core index']
  #allocation1 [shape = 'u32[144,128]{1,0:T(1,128)}', space=vmem, size = 0x12000, scoped, tag = 'internal scratch']
  %s0 = inlined_call_operand.vmem [shape: bf16[512,32], index: 0, kind: input, shape index: {}]
  %s1 = inlined_call_operand.vmem [shape: bf16[32,128], index: 1, kind: input, shape index: {}]
  %s2 = inlined_call_operand.vmem [shape: f32[512,128], index: 2, kind: output, shape index: {0}]
  %s3 = inlined_call_operand.vmem [shape: f32[8,128], index: 3, kind: output, shape index: {1}]
  %4 = xla_tuple %s2, %s3
  %s5 = sld [smem:[#allocation0]]
  $region26: #{decoder_block_forward.4} parent=0
    _
  %s7 = ssub.s32 1, %s5
  %s8 = scalar_select 0, %s7, %s5
  // Predicated region
  $region2: #{decoder_block_forward.4} parent=0 // pred_check
    _
  $region3: #{decoder_block_forward.4} parent=0 // pred_check_branch
    %10 = sbr.rel (0) target = $region5
  $region4: #{decoder_block_forward.4} parent=0 // pred_region
    _
  $region5: #{decoder_block_forward.4} parent=0 // pred_fallthru
    _
  // Predicated region
  $region6: #{decoder_block_forward.4} parent=0 // pred_check
    _
  $region7: #{decoder_block_forward.4} parent=0 // pred_check_branch
    %12 = sbr.rel (0) target = $region9
  $region8: #{decoder_block_forward.4} parent=0 // pred_region
    _
  $region9: #{decoder_block_forward.4} parent=0 // pred_fallthru
    _
  %v14 = vld [vmem:[%s0] sm:$0xf]
  %v15 = vld [vmem:[%s0 + $0x4] sm:$0xf]
  %v16 = vld [vmem:[%s0 + $0x8] sm:$0xf]
  %v17 = vld [vmem:[%s0 + $0xc] sm:$0xf]
  %v18 = vld [vmem:[%s0 + $0x10] sm:$0xf]
  %v19 = vld [vmem:[%s0 + $0x14] sm:$0xf]
  %v20 = vld [vmem:[%s0 + $0x18] sm:$0xf]
  %v21 = vld [vmem:[%s0 + $0x1c] sm:$0xf]
  %v22 = vld [vmem:[%s0 + $0x20] sm:$0xf]
  %v23 = vld [vmem:[%s0 + $0x24] sm:$0xf]
  %v24 = vld [vmem:[%s0 + $0x28] sm:$0xf]
  %v25 = vld [vmem:[%s0 + $0x2c] sm:$0xf]
  %v26 = vld [vmem:[%s0 + $0x30] sm:$0xf]
  %v27 = vld [vmem:[%s0 + $0x34] sm:$0xf]
  %v28 = vld [vmem:[%s0 + $0x38] sm:$0xf]
  %v29 = vld [vmem:[%s0 + $0x3c] sm:$0xf]
  %v30 = vld [vmem:[%s0 + $0x40] sm:$0xf]
  %v31 = vld [vmem:[%s0 + $0x44] sm:$0xf]
  %v32 = vld [vmem:[%s0 + $0x48] sm:$0xf]
  %v33 = vld [vmem:[%s0 + $0x4c] sm:$0xf]
  %v34 = vld [vmem:[%s0 + $0x50] sm:$0xf]
  %v35 = vld [vmem:[%s0 + $0x54] sm:$0xf]
  %v36 = vld [vmem:[%s0 + $0x58] sm:$0xf]
  %v37 = vld [vmem:[%s0 + $0x5c] sm:$0xf]
  %v38 = vld [vmem:[%s0 + $0x60] sm:$0xf]
  %v39 = vld [vmem:[%s0 + $0x64] sm:$0xf]
  %v40 = vld [vmem:[%s0 + $0x68] sm:$0xf]
  %v41 = vld [vmem:[%s0 + $0x6c] sm:$0xf]
  %v42 = vld [vmem:[%s0 + $0x70] sm:$0xf]
  %v43 = vld [vmem:[%s0 + $0x74] sm:$0xf]
  %v44 = vld [vmem:[%s0 + $0x78] sm:$0xf]
  %v45 = vld [vmem:[%s0 + $0x7c] sm:$0xf]
  %v46 = vld [vmem:[%s0 + $0x80] sm:$0xf]
  %v47 = vld [vmem:[%s0 + $0x84] sm:$0xf]
  %v48 = vld [vmem:[%s0 + $0x88] sm:$0xf]
  %v49 = vld [vmem:[%s0 + $0x8c] sm:$0xf]
  %v50 = vld [vmem:[%s0 + $0x90] sm:$0xf]
  %v51 = vld [vmem:[%s0 + $0x94] sm:$0xf]
  %v52 = vld [vmem:[%s0 + $0x98] sm:$0xf]
  %v53 = vld [vmem:[%s0 + $0x9c] sm:$0xf]
  %v54 = vld [vmem:[%s0 + $0xa0] sm:$0xf]
  %v55 = vld [vmem:[%s0 + $0xa4] sm:$0xf]
  %v56 = vld [vmem:[%s0 + $0xa8] sm:$0xf]
  %v57 = vld [vmem:[%s0 + $0xac] sm:$0xf]
  %v58 = vld [vmem:[%s0 + $0xb0] sm:$0xf]
  %v59 = vld [vmem:[%s0 + $0xb4] sm:$0xf]
  %v60 = vld [vmem:[%s0 + $0xb8] sm:$0xf]
  %v61 = vld [vmem:[%s0 + $0xbc] sm:$0xf]
  %v62 = vld [vmem:[%s0 + $0xc0] sm:$0xf]
  %v63 = vld [vmem:[%s0 + $0xc4] sm:$0xf]
  %v64 = vld [vmem:[%s0 + $0xc8] sm:$0xf]
  %v65 = vld [vmem:[%s0 + $0xcc] sm:$0xf]
  %v66 = vld [vmem:[%s0 + $0xd0] sm:$0xf]
  %v67 = vld [vmem:[%s0 + $0xd4] sm:$0xf]
  %v68 = vld [vmem:[%s0 + $0xd8] sm:$0xf]
  %v69 = vld [vmem:[%s0 + $0xdc] sm:$0xf]
  %v70 = vld [vmem:[%s0 + $0xe0] sm:$0xf]
  %v71 = vld [vmem:[%s0 + $0xe4] sm:$0xf]
  %v72 = vld [vmem:[%s0 + $0xe8] sm:$0xf]
  %v73 = vld [vmem:[%s0 + $0xec] sm:$0xf]
  %v74 = vld [vmem:[%s0 + $0xf0] sm:$0xf]
  %v75 = vld [vmem:[%s0 + $0xf4] sm:$0xf]
  %v76 = vld [vmem:[%s0 + $0xf8] sm:$0xf]
  %v77 = vld [vmem:[%s0 + $0xfc] sm:$0xf]
  %v78 = vld [vmem:[%s1] sm:$0xf]
  %v79 = vld [vmem:[%s1 + $0x4] sm:$0xf]
  %v80 = vld [vmem:[%s1 + $0x8] sm:$0xf]
  %v81 = vld [vmem:[%s1 + $0xc] sm:$0xf]
  %v146 = vunpack.c.l.b16 %v14
  %v147 = vunpack.c.l.b16 %v15
  %v148 = vunpack.c.l.b16 %v16
  %v149 = vunpack.c.l.b16 %v17
  %v150 = vunpack.c.l.b16 %v18
  %v151 = vunpack.c.l.b16 %v19
  %v152 = vunpack.c.l.b16 %v20
  %v153 = vunpack.c.l.b16 %v21
  %v154 = vunpack.c.l.b16 %v22
  %v155 = vunpack.c.l.b16 %v23
  %v156 = vunpack.c.l.b16 %v24
  %v157 = vunpack.c.l.b16 %v25
  %v158 = vunpack.c.l.b16 %v26
  %v159 = vunpack.c.l.b16 %v27
  %v160 = vunpack.c.l.b16 %v28
  %v161 = vunpack.c.l.b16 %v29
  %v162 = vunpack.c.l.b16 %v30
  %v163 = vunpack.c.l.b16 %v31
  %v164 = vunpack.c.l.b16 %v32
  %v165 = vunpack.c.l.b16 %v33
  %v166 = vunpack.c.l.b16 %v34
  %v167 = vunpack.c.l.b16 %v35
  %v168 = vunpack.c.l.b16 %v36
  %v169 = vunpack.c.l.b16 %v37
  %v170 = vunpack.c.l.b16 %v38
  %v171 = vunpack.c.l.b16 %v39
  %v172 = vunpack.c.l.b16 %v40
  %v173 = vunpack.c.l.b16 %v41
  %v174 = vunpack.c.l.b16 %v42
  %v175 = vunpack.c.l.b16 %v43
  %v176 = vunpack.c.l.b16 %v44
  %v177 = vunpack.c.l.b16 %v45
  %v178 = vunpack.c.l.b16 %v46
  %v179 = vunpack.c.l.b16 %v47
  %v180 = vunpack.c.l.b16 %v48
  %v181 = vunpack.c.l.b16 %v49
  %v182 = vunpack.c.l.b16 %v50
  %v183 = vunpack.c.l.b16 %v51
  %v184 = vunpack.c.l.b16 %v52
  %v185 = vunpack.c.l.b16 %v53
  %v186 = vunpack.c.l.b16 %v54
  %v187 = vunpack.c.l.b16 %v55
  %v188 = vunpack.c.l.b16 %v56
  %v189 = vunpack.c.l.b16 %v57
  %v190 = vunpack.c.l.b16 %v58
  %v191 = vunpack.c.l.b16 %v59
  %v192 = vunpack.c.l.b16 %v60
  %v193 = vunpack.c.l.b16 %v61
  %v194 = vunpack.c.l.b16 %v62
  %v195 = vunpack.c.l.b16 %v63
  %v196 = vunpack.c.l.b16 %v64
  %v197 = vunpack.c.l.b16 %v65
  %v198 = vunpack.c.l.b16 %v66
  %v199 = vunpack.c.l.b16 %v67
  %v200 = vunpack.c.l.b16 %v68
  %v201 = vunpack.c.l.b16 %v69
  %v202 = vunpack.c.l.b16 %v70
  %v203 = vunpack.c.l.b16 %v71
  %v204 = vunpack.c.l.b16 %v72
  %v205 = vunpack.c.l.b16 %v73
  %v206 = vunpack.c.l.b16 %v74
  %v207 = vunpack.c.l.b16 %v75
  %v208 = vunpack.c.l.b16 %v76
  %v209 = vunpack.c.l.b16 %v77
  %v210 = vpack.c.b16 %v147, %v146
  %v211 = vpack.c.b16 %v149, %v148
  %v212 = vpack.c.b16 %v151, %v150
  %v213 = vpack.c.b16 %v153, %v152
  %v214 = vpack.c.b16 %v155, %v154
  %v215 = vpack.c.b16 %v157, %v156
  %v216 = vpack.c.b16 %v159, %v158
  %v217 = vpack.c.b16 %v161, %v160
  %v218 = vpack.c.b16 %v163, %v162
  %v219 = vpack.c.b16 %v165, %v164
  %v220 = vpack.c.b16 %v167, %v166
  %v221 = vpack.c.b16 %v169, %v168
  %v222 = vpack.c.b16 %v171, %v170
  %v223 = vpack.c.b16 %v173, %v172
  %v224 = vpack.c.b16 %v175, %v174
  %v225 = vpack.c.b16 %v177, %v176
  %v226 = vpack.c.b16 %v179, %v178
  %v227 = vpack.c.b16 %v181, %v180
  %v228 = vpack.c.b16 %v183, %v182
  %v229 = vpack.c.b16 %v185, %v184
  %v230 = vpack.c.b16 %v187, %v186
  %v231 = vpack.c.b16 %v189, %v188
  %v232 = vpack.c.b16 %v191, %v190
  %v233 = vpack.c.b16 %v193, %v192
  %v234 = vpack.c.b16 %v195, %v194
  %v235 = vpack.c.b16 %v197, %v196
  %v236 = vpack.c.b16 %v199, %v198
  %v237 = vpack.c.b16 %v201, %v200
  %v238 = vpack.c.b16 %v203, %v202
  %v239 = vpack.c.b16 %v205, %v204
  %v240 = vpack.c.b16 %v207, %v206
  %v241 = vpack.c.b16 %v209, %v208
  %v246 = vunpack.c.l.b16 %v78
  %v247 = vunpack.c.l.b16 %v79
  %v248 = vunpack.c.l.b16 %v80
  %v249 = vunpack.c.l.b16 %v81
  %v250 = vpack.c.b16 %v247, %v246
  %v251 = vpack.c.b16 %v249, %v248
  %vm254 = vcmask 261120
  %v256 = vsel %vm254, %v210, 0
  %v259 = vsel %vm254, %v211, 0
  %v262 = vsel %vm254, %v212, 0
  %v265 = vsel %vm254, %v213, 0
  %v268 = vsel %vm254, %v214, 0
  %v271 = vsel %vm254, %v215, 0
  %v274 = vsel %vm254, %v216, 0
  %v277 = vsel %vm254, %v217, 0
  %v280 = vsel %vm254, %v218, 0
  %v283 = vsel %vm254, %v219, 0
  %v286 = vsel %vm254, %v220, 0
  %v289 = vsel %vm254, %v221, 0
  %v292 = vsel %vm254, %v222, 0
  %v295 = vsel %vm254, %v223, 0
  %v298 = vsel %vm254, %v224, 0
  %v301 = vsel %vm254, %v225, 0
  %v304 = vsel %vm254, %v226, 0
  %v307 = vsel %vm254, %v227, 0
  %v310 = vsel %vm254, %v228, 0
  %v313 = vsel %vm254, %v229, 0
  %v316 = vsel %vm254, %v230, 0
  %v319 = vsel %vm254, %v231, 0
  %v322 = vsel %vm254, %v232, 0
  %v325 = vsel %vm254, %v233, 0
  %v328 = vsel %vm254, %v234, 0
  %v331 = vsel %vm254, %v235, 0
  %v334 = vsel %vm254, %v236, 0
  %v337 = vsel %vm254, %v237, 0
  %v340 = vsel %vm254, %v238, 0
  %v343 = vsel %vm254, %v239, 0
  %v346 = vsel %vm254, %v240, 0
  %v349 = vsel %vm254, %v241, 0
  %351 = vmatprep.subr.bf16.mxu0 0
  %352 = vmatpush1.bf16.msra.mxu0 %v250
  %353 = vmatprep.subr.bf16.mxu0 0
  %354 = vmatpush1.bf16.msra.mxu0 %v251
  %355 = vmatprep.subr.bf16.mxu0 0
  %356 = vmatpush1.bf16.msra.mxu0 0
  %357 = vmatprep.subr.bf16.mxu0 0
  %358 = vmatpush1.bf16.msra.mxu0 0
  %359 = vmatprep.subr.bf16.mxu0 0
  %360 = vmatpush1.bf16.msra.mxu0 0
  %361 = vmatprep.subr.bf16.mxu0 0
  %362 = vmatpush1.bf16.msra.mxu0 0
  %363 = vmatprep.subr.bf16.mxu0 0
  %364 = vmatpush1.bf16.msra.mxu0 0
  %365 = vmatprep.subr.bf16.mxu0 0
  %366 = vmatpush1.bf16.msra.mxu0 0
  %367 = vmatprep.subr.bf16.mxu0 0
  %368 = vmatpush1.bf16.msra.mxu0 0
  %369 = vmatprep.subr.bf16.mxu0 0
  %370 = vmatpush1.bf16.msra.mxu0 0
  %371 = vmatprep.subr.bf16.mxu0 0
  %372 = vmatpush1.bf16.msra.mxu0 0
  %373 = vmatprep.subr.bf16.mxu0 0
  %374 = vmatpush1.bf16.msra.mxu0 0
  %375 = vmatprep.subr.bf16.mxu0 0
  %376 = vmatpush1.bf16.msra.mxu0 0
  %377 = vmatprep.subr.bf16.mxu0 0
  %378 = vmatpush1.bf16.msra.mxu0 0
  %379 = vmatprep.subr.bf16.mxu0 0
  %380 = vmatpush1.bf16.msra.mxu0 0
  %381 = vmatprep.subr.bf16.mxu0 0
  %382 = vmatpush1.bf16.msra.mxu0 0
  %383 = vmatprep.mubr.bf16.mxu0 0
  %384 = vmatmul.mubr.bf16.gmra.mrb[0].mxu0 %v256
  %v385 = vpop.f32.mrb[0].mxu0
  %v386 = vadd.f32 0.0, %v385
  %v387 = vpop.f32.mrb[0].mxu0
  %v388 = vpop.f32.mrb[0].mxu0
  %v389 = vadd.f32 0.0, %v388
  %v390 = vpop.f32.mrb[0].mxu0
  %391 = vmatprep.mubr.bf16.mxu0 0
  %392 = vmatmul.mubr.bf16.gmra.mrb[0].mxu0 %v259
  %v393 = vpop.f32.mrb[0].mxu0
  %v394 = vadd.f32 0.0, %v393
  %v395 = vpop.f32.mrb[0].mxu0
  %v396 = vpop.f32.mrb[0].mxu0
  %v397 = vadd.f32 0.0, %v396
  %v398 = vpop.f32.mrb[0].mxu0
  %399 = vmatprep.mubr.bf16.mxu0 0
  %400 = vmatmul.mubr.bf16.gmra.mrb[0].mxu0 %v262
  %v401 = vpop.f32.mrb[0].mxu0
  %v402 = vadd.f32 0.0, %v401
  %v403 = vpop.f32.mrb[0].mxu0
  %v404 = vpop.f32.mrb[0].mxu0
  %v405 = vadd.f32 0.0, %v404
  %v406 = vpop.f32.mrb[0].mxu0
  %407 = vmatprep.mubr.bf16.mxu0 0
  %408 = vmatmul.mubr.bf16.gmra.mrb[0].mxu0 %v265
  %v409 = vpop.f32.mrb[0].mxu0
  %v410 = vadd.f32 0.0, %v409
  %v411 = vpop.f32.mrb[0].mxu0
  %v412 = vpop.f32.mrb[0].mxu0
  %v413 = vadd.f32 0.0, %v412
  %v414 = vpop.f32.mrb[0].mxu0
  %415 = vmatprep.mubr.bf16.mxu0 0
  %416 = vmatmul.mubr.bf16.gmra.mrb[0].mxu0 %v268
  %v417 = vpop.f32.mrb[0].mxu0
  %v418 = vadd.f32 0.0, %v417
  %v419 = vpop.f32.mrb[0].mxu0
  %v420 = vpop.f32.mrb[0].mxu0
  %v421 = vadd.f32 0.0, %v420
  %v422 = vpop.f32.mrb[0].mxu0
  %423 = vmatprep.mubr.bf16.mxu0 0
  %424 = vmatmul.mubr.bf16.gmra.mrb[0].mxu0 %v271
  %v425 = vpop.f32.mrb[0].mxu0
  %v426 = vadd.f32 0.0, %v425
  %v427 = vpop.f32.mrb[0].mxu0
  %v428 = vpop.f32.mrb[0].mxu0
  %v429 = vadd.f32 0.0, %v428
  %v430 = vpop.f32.mrb[0].mxu0
  %431 = vmatprep.mubr.bf16.mxu0 0
  %432 = vmatmul.mubr.bf16.gmra.mrb[0].mxu0 %v274
  %v433 = vpop.f32.mrb[0].mxu0
  %v434 = vadd.f32 0.0, %v433
  %v435 = vpop.f32.mrb[0].mxu0
  %v436 = vpop.f32.mrb[0].mxu0
  %v437 = vadd.f32 0.0, %v436
  %v438 = vpop.f32.mrb[0].mxu0
  %439 = vmatprep.mubr.bf16.mxu0 0
  %440 = vmatmul.mubr.bf16.gmra.mrb[0].mxu0 %v277
  %v441 = vpop.f32.mrb[0].mxu0
  %v442 = vadd.f32 0.0, %v441
  %v443 = vpop.f32.mrb[0].mxu0
  %v444 = vpop.f32.mrb[0].mxu0
  %v445 = vadd.f32 0.0, %v444
  %v446 = vpop.f32.mrb[0].mxu0
  %447 = vmatprep.mubr.bf16.mxu0 0
  %448 = vmatmul.mubr.bf16.gmra.mrb[0].mxu0 %v280
  %v449 = vpop.f32.mrb[0].mxu0
  %v450 = vadd.f32 0.0, %v449
  %v451 = vpop.f32.mrb[0].mxu0
  %v452 = vpop.f32.mrb[0].mxu0
  %v453 = vadd.f32 0.0, %v452
  %v454 = vpop.f32.mrb[0].mxu0
  %455 = vmatprep.mubr.bf16.mxu0 0
  %456 = vmatmul.mubr.bf16.gmra.mrb[0].mxu0 %v283
  %v457 = vpop.f32.mrb[0].mxu0
  %v458 = vadd.f32 0.0, %v457
  %v459 = vpop.f32.mrb[0].mxu0
  %v460 = vpop.f32.mrb[0].mxu0
  %v461 = vadd.f32 0.0, %v460
  %v462 = vpop.f32.mrb[0].mxu0
  %463 = vmatprep.mubr.bf16.mxu0 0
  %464 = vmatmul.mubr.bf16.gmra.mrb[0].mxu0 %v286
  %v465 = vpop.f32.mrb[0].mxu0
  %v466 = vadd.f32 0.0, %v465
  %v467 = vpop.f32.mrb[0].mxu0
  %v468 = vpop.f32.mrb[0].mxu0
  %v469 = vadd.f32 0.0, %v468
  %v470 = vpop.f32.mrb[0].mxu0
  %471 = vmatprep.mubr.bf16.mxu0 0
  %472 = vmatmul.mubr.bf16.gmra.mrb[0].mxu0 %v289
  %v473 = vpop.f32.mrb[0].mxu0
  %v474 = vadd.f32 0.0, %v473
  %v475 = vpop.f32.mrb[0].mxu0
  %v476 = vpop.f32.mrb[0].mxu0
  %v477 = vadd.f32 0.0, %v476
  %v478 = vpop.f32.mrb[0].mxu0
  %479 = vmatprep.mubr.bf16.mxu0 0
  %480 = vmatmul.mubr.bf16.gmra.mrb[0].mxu0 %v292
  %v481 = vpop.f32.mrb[0].mxu0
  %v482 = vadd.f32 0.0, %v481
  %v483 = vpop.f32.mrb[0].mxu0
  %v484 = vpop.f32.mrb[0].mxu0
  %v485 = vadd.f32 0.0, %v484
  %v486 = vpop.f32.mrb[0].mxu0
  %487 = vmatprep.mubr.bf16.mxu0 0
  %488 = vmatmul.mubr.bf16.gmra.mrb[0].mxu0 %v295
  %v489 = vpop.f32.mrb[0].mxu0
  %v490 = vadd.f32 0.0, %v489
  %v491 = vpop.f32.mrb[0].mxu0
  %v492 = vpop.f32.mrb[0].mxu0
  %v493 = vadd.f32 0.0, %v492
  %v494 = vpop.f32.mrb[0].mxu0
  %495 = vmatprep.mubr.bf16.mxu0 0
  %496 = vmatmul.mubr.bf16.gmra.mrb[0].mxu0 %v298
  %v497 = vpop.f32.mrb[0].mxu0
  %v498 = vadd.f32 0.0, %v497
  %v499 = vpop.f32.mrb[0].mxu0
  %v500 = vpop.f32.mrb[0].mxu0
  %v501 = vadd.f32 0.0, %v500
  %v502 = vpop.f32.mrb[0].mxu0
  %503 = vmatprep.mubr.bf16.mxu0 0
  %504 = vmatmul.mubr.bf16.gmra.mrb[0].mxu0 %v301
  %v505 = vpop.f32.mrb[0].mxu0
  %v506 = vadd.f32 0.0, %v505
  %v507 = vpop.f32.mrb[0].mxu0
  %v508 = vpop.f32.mrb[0].mxu0
  %v509 = vadd.f32 0.0, %v508
  %v510 = vpop.f32.mrb[0].mxu0
  %511 = vmatprep.mubr.bf16.mxu0 0
  %512 = vmatmul.mubr.bf16.gmra.mrb[0].mxu0 %v304
  %v513 = vpop.f32.mrb[0].mxu0
  %v514 = vadd.f32 0.0, %v513
  %v515 = vpop.f32.mrb[0].mxu0
  %v516 = vpop.f32.mrb[0].mxu0
  %v517 = vadd.f32 0.0, %v516
  %v518 = vpop.f32.mrb[0].mxu0
  %519 = vmatprep.mubr.bf16.mxu0 0
  %520 = vmatmul.mubr.bf16.gmra.mrb[0].mxu0 %v307
  %v521 = vpop.f32.mrb[0].mxu0
  %v522 = vadd.f32 0.0, %v521
  %v523 = vpop.f32.mrb[0].mxu0
  %v524 = vpop.f32.mrb[0].mxu0
  %v525 = vadd.f32 0.0, %v524
  %v526 = vpop.f32.mrb[0].mxu0
  %527 = vmatprep.mubr.bf16.mxu0 0
  %528 = vmatmul.mubr.bf16.gmra.mrb[0].mxu0 %v310
  %v529 = vpop.f32.mrb[0].mxu0
  %v530 = vadd.f32 0.0, %v529
  %v531 = vpop.f32.mrb[0].mxu0
  %v532 = vpop.f32.mrb[0].mxu0
  %v533 = vadd.f32 0.0, %v532
  %v534 = vpop.f32.mrb[0].mxu0
  %535 = vmatprep.mubr.bf16.mxu0 0
  %536 = vmatmul.mubr.bf16.gmra.mrb[0].mxu0 %v313
  %v537 = vpop.f32.mrb[0].mxu0
  %v538 = vadd.f32 0.0, %v537
  %v539 = vpop.f32.mrb[0].mxu0
  %v540 = vpop.f32.mrb[0].mxu0
  %v541 = vadd.f32 0.0, %v540
  %v542 = vpop.f32.mrb[0].mxu0
  %543 = vmatprep.mubr.bf16.mxu0 0
  %544 = vmatmul.mubr.bf16.gmra.mrb[0].mxu0 %v316
  %v545 = vpop.f32.mrb[0].mxu0
  %v546 = vadd.f32 0.0, %v545
  %v547 = vpop.f32.mrb[0].mxu0
  %v548 = vpop.f32.mrb[0].mxu0
  %v549 = vadd.f32 0.0, %v548
  %v550 = vpop.f32.mrb[0].mxu0
  %551 = vmatprep.mubr.bf16.mxu0 0
  %552 = vmatmul.mubr.bf16.gmra.mrb[0].mxu0 %v319
  %v553 = vpop.f32.mrb[0].mxu0
  %v554 = vadd.f32 0.0, %v553
  %v555 = vpop.f32.mrb[0].mxu0
  %v556 = vpop.f32.mrb[0].mxu0
  %v557 = vadd.f32 0.0, %v556
  %v558 = vpop.f32.mrb[0].mxu0
  %559 = vmatprep.mubr.bf16.mxu0 0
  %560 = vmatmul.mubr.bf16.gmra.mrb[0].mxu0 %v322
  %v561 = vpop.f32.mrb[0].mxu0
  %v562 = vadd.f32 0.0, %v561
  %v563 = vpop.f32.mrb[0].mxu0
  %v564 = vpop.f32.mrb[0].mxu0
  %v565 = vadd.f32 0.0, %v564
  %v566 = vpop.f32.mrb[0].mxu0
  %567 = vmatprep.mubr.bf16.mxu0 0
  %568 = vmatmul.mubr.bf16.gmra.mrb[0].mxu0 %v325
  %v569 = vpop.f32.mrb[0].mxu0
  %v570 = vadd.f32 0.0, %v569
  %v571 = vpop.f32.mrb[0].mxu0
  %v572 = vpop.f32.mrb[0].mxu0
  %v573 = vadd.f32 0.0, %v572
  %v574 = vpop.f32.mrb[0].mxu0
  %575 = vmatprep.mubr.bf16.mxu0 0
  %576 = vmatmul.mubr.bf16.gmra.mrb[0].mxu0 %v328
  %v577 = vpop.f32.mrb[0].mxu0
  %v578 = vadd.f32 0.0, %v577
  %v579 = vpop.f32.mrb[0].mxu0
  %v580 = vpop.f32.mrb[0].mxu0
  %v581 = vadd.f32 0.0, %v580
  %v582 = vpop.f32.mrb[0].mxu0
  %583 = vmatprep.mubr.bf16.mxu0 0
  %584 = vmatmul.mubr.bf16.gmra.mrb[0].mxu0 %v331
  %v585 = vpop.f32.mrb[0].mxu0
  %v586 = vadd.f32 0.0, %v585
  %v587 = vpop.f32.mrb[0].mxu0
  %v588 = vpop.f32.mrb[0].mxu0
  %v589 = vadd.f32 0.0, %v588
  %v590 = vpop.f32.mrb[0].mxu0
  %591 = vmatprep.mubr.bf16.mxu0 0
  %592 = vmatmul.mubr.bf16.gmra.mrb[0].mxu0 %v334
  %v593 = vpop.f32.mrb[0].mxu0
  %v594 = vadd.f32 0.0, %v593
  %v595 = vpop.f32.mrb[0].mxu0
  %v596 = vpop.f32.mrb[0].mxu0
  %v597 = vadd.f32 0.0, %v596
  %v598 = vpop.f32.mrb[0].mxu0
  %599 = vmatprep.mubr.bf16.mxu0 0
  %600 = vmatmul.mubr.bf16.gmra.mrb[0].mxu0 %v337
  %v601 = vpop.f32.mrb[0].mxu0
  %v602 = vadd.f32 0.0, %v601
  %v603 = vpop.f32.mrb[0].mxu0
  %v604 = vpop.f32.mrb[0].mxu0
  %v605 = vadd.f32 0.0, %v604
  %v606 = vpop.f32.mrb[0].mxu0
  %607 = vmatprep.mubr.bf16.mxu0 0
  %608 = vmatmul.mubr.bf16.gmra.mrb[0].mxu0 %v340
  %v609 = vpop.f32.mrb[0].mxu0
  %v610 = vadd.f32 0.0, %v609
  %v611 = vpop.f32.mrb[0].mxu0
  %v612 = vpop.f32.mrb[0].mxu0
  %v613 = vadd.f32 0.0, %v612
  %v614 = vpop.f32.mrb[0].mxu0
  %615 = vmatprep.mubr.bf16.mxu0 0
  %616 = vmatmul.mubr.bf16.gmra.mrb[0].mxu0 %v343
  %v617 = vpop.f32.mrb[0].mxu0
  %v618 = vadd.f32 0.0, %v617
  %v619 = vpop.f32.mrb[0].mxu0
  %v620 = vpop.f32.mrb[0].mxu0
  %v621 = vadd.f32 0.0, %v620
  %v622 = vpop.f32.mrb[0].mxu0
  %623 = vmatprep.mubr.bf16.mxu0 0
  %624 = vmatmul.mubr.bf16.gmra.mrb[0].mxu0 %v346
  %v625 = vpop.f32.mrb[0].mxu0
  %v626 = vadd.f32 0.0, %v625
  %v627 = vpop.f32.mrb[0].mxu0
  %v628 = vpop.f32.mrb[0].mxu0
  %v629 = vadd.f32 0.0, %v628
  %v630 = vpop.f32.mrb[0].mxu0
  %631 = vmatprep.mubr.bf16.mxu0 0
  %632 = vmatmul.mubr.bf16.gmra.mrb[0].mxu0 %v349
  %v633 = vpop.f32.mrb[0].mxu0
  %v634 = vadd.f32 0.0, %v633
  %v635 = vpop.f32.mrb[0].mxu0
  %v636 = vpop.f32.mrb[0].mxu0
  %v637 = vadd.f32 0.0, %v636
  %v638 = vpop.f32.mrb[0].mxu0
  %639 = vdwg.mxu0
  %640 = vst [vmem:[%s2] sm:$0xff] %v386
  %641 = vst [vmem:[%s2 + $0x8] sm:$0xff] %v389
  %642 = vst [vmem:[%s2 + $0x10] sm:$0xff] %v394
  %643 = vst [vmem:[%s2 + $0x18] sm:$0xff] %v397
  %644 = vst [vmem:[%s2 + $0x20] sm:$0xff] %v402
  %645 = vst [vmem:[%s2 + $0x28] sm:$0xff] %v405
  %646 = vst [vmem:[%s2 + $0x30] sm:$0xff] %v410
  %647 = vst [vmem:[%s2 + $0x38] sm:$0xff] %v413
  %648 = vst [vmem:[%s2 + $0x40] sm:$0xff] %v418
  %649 = vst [vmem:[%s2 + $0x48] sm:$0xff] %v421
  %650 = vst [vmem:[%s2 + $0x50] sm:$0xff] %v426
  %651 = vst [vmem:[%s2 + $0x58] sm:$0xff] %v429
  %652 = vst [vmem:[%s2 + $0x60] sm:$0xff] %v434
  %653 = vst [vmem:[%s2 + $0x68] sm:$0xff] %v437
  %654 = vst [vmem:[%s2 + $0x70] sm:$0xff] %v442
  %655 = vst [vmem:[%s2 + $0x78] sm:$0xff] %v445
  %656 = vst [vmem:[%s2 + $0x80] sm:$0xff] %v450
  %657 = vst [vmem:[%s2 + $0x88] sm:$0xff] %v453
  %658 = vst [vmem:[%s2 + $0x90] sm:$0xff] %v458
  %659 = vst [vmem:[%s2 + $0x98] sm:$0xff] %v461
  %660 = vst [vmem:[%s2 + $0xa0] sm:$0xff] %v466
  %661 = vst [vmem:[%s2 + $0xa8] sm:$0xff] %v469
  %662 = vst [vmem:[%s2 + $0xb0] sm:$0xff] %v474
  %663 = vst [vmem:[%s2 + $0xb8] sm:$0xff] %v477
  %664 = vst [vmem:[%s2 + $0xc0] sm:$0xff] %v482
  %665 = vst [vmem:[%s2 + $0xc8] sm:$0xff] %v485
  %666 = vst [vmem:[%s2 + $0xd0] sm:$0xff] %v490
  %667 = vst [vmem:[%s2 + $0xd8] sm:$0xff] %v493
  %668 = vst [vmem:[%s2 + $0xe0] sm:$0xff] %v498
  %669 = vst [vmem:[%s2 + $0xe8] sm:$0xff] %v501
  %670 = vst [vmem:[%s2 + $0xf0] sm:$0xff] %v506
  %671 = vst [vmem:[%s2 + $0xf8] sm:$0xff] %v509
  %672 = vst [vmem:[%s2 + $0x100] sm:$0xff] %v514
  %673 = vst [vmem:[%s2 + $0x108] sm:$0xff] %v517
  %674 = vst [vmem:[%s2 + $0x110] sm:$0xff] %v522
  %675 = vst [vmem:[%s2 + $0x118] sm:$0xff] %v525
  %676 = vst [vmem:[%s2 + $0x120] sm:$0xff] %v530
  %677 = vst [vmem:[%s2 + $0x128] sm:$0xff] %v533
  %678 = vst [vmem:[%s2 + $0x130] sm:$0xff] %v538
  %679 = vst [vmem:[%s2 + $0x138] sm:$0xff] %v541
  %680 = vst [vmem:[%s2 + $0x140] sm:$0xff] %v546
  %681 = vst [vmem:[%s2 + $0x148] sm:$0xff] %v549
  %682 = vst [vmem:[%s2 + $0x150] sm:$0xff] %v554
  %683 = vst [vmem:[%s2 + $0x158] sm:$0xff] %v557
  %684 = vst [vmem:[%s2 + $0x160] sm:$0xff] %v562
  %685 = vst [vmem:[%s2 + $0x168] sm:$0xff] %v565
  %686 = vst [vmem:[%s2 + $0x170] sm:$0xff] %v570
  %687 = vst [vmem:[%s2 + $0x178] sm:$0xff] %v573
  %688 = vst [vmem:[%s2 + $0x180] sm:$0xff] %v578
  %689 = vst [vmem:[%s2 + $0x188] sm:$0xff] %v581
  %690 = vst [vmem:[%s2 + $0x190] sm:$0xff] %v586
  %691 = vst [vmem:[%s2 + $0x198] sm:$0xff] %v589
  %692 = vst [vmem:[%s2 + $0x1a0] sm:$0xff] %v594
  %693 = vst [vmem:[%s2 + $0x1a8] sm:$0xff] %v597
  %694 = vst [vmem:[%s2 + $0x1b0] sm:$0xff] %v602
  %695 = vst [vmem:[%s2 + $0x1b8] sm:$0xff] %v605
  %696 = vst [vmem:[%s2 + $0x1c0] sm:$0xff] %v610
  %697 = vst [vmem:[%s2 + $0x1c8] sm:$0xff] %v613
  %698 = vst [vmem:[%s2 + $0x1d0] sm:$0xff] %v618
  %699 = vst [vmem:[%s2 + $0x1d8] sm:$0xff] %v621
  %700 = vst [vmem:[%s2 + $0x1e0] sm:$0xff] %v626
  %701 = vst [vmem:[%s2 + $0x1e8] sm:$0xff] %v629
  %702 = vst [vmem:[%s2 + $0x1f0] sm:$0xff] %v634
  %703 = vst [vmem:[%s2 + $0x1f8] sm:$0xff] %v637
  %v704 = vadd.f32 %v386, %v389
  %v705 = vadd.f32 %v704, %v394
  %v706 = vadd.f32 %v705, %v397
  %v707 = vadd.f32 %v706, %v402
  %v708 = vadd.f32 %v707, %v405
  %v709 = vadd.f32 %v708, %v410
  %v710 = vadd.f32 %v709, %v413
  %v711 = vadd.f32 %v710, %v418
  %v712 = vadd.f32 %v711, %v421
  %v713 = vadd.f32 %v712, %v426
  %v714 = vadd.f32 %v713, %v429
  %v715 = vadd.f32 %v714, %v434
  %v716 = vadd.f32 %v715, %v437
  %v717 = vadd.f32 %v716, %v442
  %v718 = vadd.f32 %v717, %v445
  %v719 = vadd.f32 %v718, %v450
  %v720 = vadd.f32 %v719, %v453
  %v721 = vadd.f32 %v720, %v458
  %v722 = vadd.f32 %v721, %v461
  %v723 = vadd.f32 %v722, %v466
  %v724 = vadd.f32 %v723, %v469
  %v725 = vadd.f32 %v724, %v474
  %v726 = vadd.f32 %v725, %v477
  %v727 = vadd.f32 %v726, %v482
  %v728 = vadd.f32 %v727, %v485
  %v729 = vadd.f32 %v728, %v490
  %v730 = vadd.f32 %v729, %v493
  %v731 = vadd.f32 %v730, %v498
  %v732 = vadd.f32 %v731, %v501
  %v733 = vadd.f32 %v732, %v506
  %v734 = vadd.f32 %v733, %v509
  %v735 = vadd.f32 %v734, %v514
  %v736 = vadd.f32 %v735, %v517
  %v737 = vadd.f32 %v736, %v522
  %v738 = vadd.f32 %v737, %v525
  %v739 = vadd.f32 %v738, %v530
  %v740 = vadd.f32 %v739, %v533
  %v741 = vadd.f32 %v740, %v538
  %v742 = vadd.f32 %v741, %v541
  %v743 = vadd.f32 %v742, %v546
  %v744 = vadd.f32 %v743, %v549
  %v745 = vadd.f32 %v744, %v554
  %v746 = vadd.f32 %v745, %v557
  %v747 = vadd.f32 %v746, %v562
  %v748 = vadd.f32 %v747, %v565
  %v749 = vadd.f32 %v748, %v570
  %v750 = vadd.f32 %v749, %v573
  %v751 = vadd.f32 %v750, %v578
  %v752 = vadd.f32 %v751, %v581
  %v753 = vadd.f32 %v752, %v586
  %v754 = vadd.f32 %v753, %v589
  %v755 = vadd.f32 %v754, %v594
  %v756 = vadd.f32 %v755, %v597
  %v757 = vadd.f32 %v756, %v602
  %v758 = vadd.f32 %v757, %v605
  %v759 = vadd.f32 %v758, %v610
  %v760 = vadd.f32 %v759, %v613
  %v761 = vadd.f32 %v760, %v618
  %v762 = vadd.f32 %v761, %v621
  %v763 = vadd.f32 %v762, %v626
  %v764 = vadd.f32 %v763, %v629
  %v765 = vadd.f32 %v764, %v634
  %v766 = vadd.f32 %v765, %v637
  %v767 = vrot.slane %v766, 4
  %v768 = vadd.f32 %v766, %v767
  %v769 = vrot.slane %v768, 2
  %v770 = vadd.f32 %v768, %v769
  %v771 = vrot.slane %v770, 1
  %v772 = vadd.f32 %v770, %v771
  %v773 = vmul.f32 %v386, %v386
  %v774 = vmul.f32 %v389, %v389
  %v775 = vmul.f32 %v394, %v394
  %v776 = vmul.f32 %v397, %v397
  %v777 = vmul.f32 %v402, %v402
  %v778 = vmul.f32 %v405, %v405
  %v779 = vmul.f32 %v410, %v410
  %v780 = vmul.f32 %v413, %v413
  %v781 = vmul.f32 %v418, %v418
  %v782 = vmul.f32 %v421, %v421
  %v783 = vmul.f32 %v426, %v426
  %v784 = vmul.f32 %v429, %v429
  %v785 = vmul.f32 %v434, %v434
  %v786 = vmul.f32 %v437, %v437
  %v787 = vmul.f32 %v442, %v442
  %v788 = vmul.f32 %v445, %v445
  %v789 = vmul.f32 %v450, %v450
  %v790 = vmul.f32 %v453, %v453
  %v791 = vmul.f32 %v458, %v458
  %v792 = vmul.f32 %v461, %v461
  %v793 = vmul.f32 %v466, %v466
  %v794 = vmul.f32 %v469, %v469
  %v795 = vmul.f32 %v474, %v474
  %v796 = vmul.f32 %v477, %v477
  %v797 = vmul.f32 %v482, %v482
  %v798 = vmul.f32 %v485, %v485
  %v799 = vmul.f32 %v490, %v490
  %v800 = vmul.f32 %v493, %v493
  %v801 = vmul.f32 %v498, %v498
  %v802 = vmul.f32 %v501, %v501
  %v803 = vmul.f32 %v506, %v506
  %v804 = vmul.f32 %v509, %v509
  %v805 = vmul.f32 %v514, %v514
  %v806 = vmul.f32 %v517, %v517
  %v807 = vmul.f32 %v522, %v522
  %v808 = vmul.f32 %v525, %v525
  %v809 = vmul.f32 %v530, %v530
  %v810 = vmul.f32 %v533, %v533
  %v811 = vmul.f32 %v538, %v538
  %v812 = vmul.f32 %v541, %v541
  %v813 = vmul.f32 %v546, %v546
  %v814 = vmul.f32 %v549, %v549
  %v815 = vmul.f32 %v554, %v554
  %v816 = vmul.f32 %v557, %v557
  %v817 = vmul.f32 %v562, %v562
  %v818 = vmul.f32 %v565, %v565
  %v819 = vmul.f32 %v570, %v570
  %v820 = vmul.f32 %v573, %v573
  %v821 = vmul.f32 %v578, %v578
  %v822 = vmul.f32 %v581, %v581
  %v823 = vmul.f32 %v586, %v586
  %v824 = vmul.f32 %v589, %v589
  %v825 = vmul.f32 %v594, %v594
  %v826 = vmul.f32 %v597, %v597
  %v827 = vmul.f32 %v602, %v602
  %v828 = vmul.f32 %v605, %v605
  %v829 = vmul.f32 %v610, %v610
  %v830 = vmul.f32 %v613, %v613
  %v831 = vmul.f32 %v618, %v618
  %v832 = vmul.f32 %v621, %v621
  %v833 = vmul.f32 %v626, %v626
  %v834 = vmul.f32 %v629, %v629
  %v835 = vmul.f32 %v634, %v634
  %v836 = vmul.f32 %v637, %v637
  %v837 = vadd.f32 %v773, %v774
  %v838 = vadd.f32 %v837, %v775
  %v839 = vadd.f32 %v838, %v776
  %v840 = vadd.f32 %v839, %v777
  %v841 = vadd.f32 %v840, %v778
  %v842 = vadd.f32 %v841, %v779
  %v843 = vadd.f32 %v842, %v780
  %v844 = vadd.f32 %v843, %v781
  %v845 = vadd.f32 %v844, %v782
  %v846 = vadd.f32 %v845, %v783
  %v847 = vadd.f32 %v846, %v784
  %v848 = vadd.f32 %v847, %v785
  %v849 = vadd.f32 %v848, %v786
  %v850 = vadd.f32 %v849, %v787
  %v851 = vadd.f32 %v850, %v788
  %v852 = vadd.f32 %v851, %v789
  %v853 = vadd.f32 %v852, %v790
  %v854 = vadd.f32 %v853, %v791
  %v855 = vadd.f32 %v854, %v792
  %v856 = vadd.f32 %v855, %v793
  %v857 = vadd.f32 %v856, %v794
  %v858 = vadd.f32 %v857, %v795
  %v859 = vadd.f32 %v858, %v796
  %v860 = vadd.f32 %v859, %v797
  %v861 = vadd.f32 %v860, %v798
  %v862 = vadd.f32 %v861, %v799
  %v863 = vadd.f32 %v862, %v800
  %v864 = vadd.f32 %v863, %v801
  %v865 = vadd.f32 %v864, %v802
  %v866 = vadd.f32 %v865, %v803
  %v867 = vadd.f32 %v866, %v804
  %v868 = vadd.f32 %v867, %v805
  %v869 = vadd.f32 %v868, %v806
  %v870 = vadd.f32 %v869, %v807
  %v871 = vadd.f32 %v870, %v808
  %v872 = vadd.f32 %v871, %v809
  %v873 = vadd.f32 %v872, %v810
  %v874 = vadd.f32 %v873, %v811
  %v875 = vadd.f32 %v874, %v812
  %v876 = vadd.f32 %v875, %v813
  %v877 = vadd.f32 %v876, %v814
  %v878 = vadd.f32 %v877, %v815
  %v879 = vadd.f32 %v878, %v816
  %v880 = vadd.f32 %v879, %v817
  %v881 = vadd.f32 %v880, %v818
  %v882 = vadd.f32 %v881, %v819
  %v883 = vadd.f32 %v882, %v820
  %v884 = vadd.f32 %v883, %v821
  %v885 = vadd.f32 %v884, %v822
  %v886 = vadd.f32 %v885, %v823
  %v887 = vadd.f32 %v886, %v824
  %v888 = vadd.f32 %v887, %v825
  %v889 = vadd.f32 %v888, %v826
  %v890 = vadd.f32 %v889, %v827
  %v891 = vadd.f32 %v890, %v828
  %v892 = vadd.f32 %v891, %v829
  %v893 = vadd.f32 %v892, %v830
  %v894 = vadd.f32 %v893, %v831
  %v895 = vadd.f32 %v894, %v832
  %v896 = vadd.f32 %v895, %v833
  %v897 = vadd.f32 %v896, %v834
  %v898 = vadd.f32 %v897, %v835
  %v899 = vadd.f32 %v898, %v836
  %v900 = vrot.slane %v899, 4
  %v901 = vadd.f32 %v899, %v900
  %v902 = vrot.slane %v901, 2
  %v903 = vadd.f32 %v901, %v902
  %v904 = vrot.slane %v903, 1
  %v905 = vadd.f32 %v903, %v904
  %v906 = vlaneseq
  %v907 = vshrl.u32 %v906, 7
  %vm908 = vcmp.eq.s32.totalorder %v907, 0
  %vm909 = vcmp.eq.s32.totalorder %v907, 1
  %v910 = vsel %vm909, %v905, 0.0
  %v911 = vsel %vm908, %v772, %v910
  %912 = vst [vmem:[%s3] sm:$0xff] %v911
  // Predicated region
  $region10: #{decoder_block_forward.4} parent=0 // pred_check
    _
  $region11: #{decoder_block_forward.4} parent=0 // pred_check_branch
    %914 = sbr.rel (0) target = $region13
  $region12: #{decoder_block_forward.4} parent=0 // pred_region
    _
  $region13: #{decoder_block_forward.4} parent=0 // pred_fallthru
    _
  // Predicated region
  $region14: #{decoder_block_forward.4} parent=0 // pred_check
    _
  $region15: #{decoder_block_forward.4} parent=0 // pred_check_branch
    %916 = sbr.rel (0) target = $region17
  $region16: #{decoder_block_forward.4} parent=0 // pred_region
    _
  $region17: #{decoder_block_forward.4} parent=0 // pred_fallthru
    _
  // Predicated region
  $region18: #{decoder_block_forward.4} parent=0 // pred_check
    _
  $region19: #{decoder_block_forward.4} parent=0 // pred_check_branch
    %918 = sbr.rel (0) target = $region21
  $region20: #{decoder_block_forward.4} parent=0 // pred_region
    _
  $region21: #{decoder_block_forward.4} parent=0 // pred_fallthru
    _
  // Predicated region
  $region22: #{decoder_block_forward.4} parent=0 // pred_check
    _
  $region23: #{decoder_block_forward.4} parent=0 // pred_check_branch
    %920 = sbr.rel (0) target = $region25
  $region24: #{decoder_block_forward.4} parent=0 // pred_region
    _
  $region25: #{decoder_block_forward.4} parent=0 // pred_fallthru
    _

// kernel: decoder_block_forward.5
$region0: #{decoder_block_forward.5}
  #allocation0 [shape = 'u32[]', space=smem, size = 0x4, offset = 0x4, fixed_abs, tag = 'smem constant byte address 0x4 - core index']
  #allocation1 [shape = 'u32[144,128]{1,0:T(1,128)}', space=vmem, size = 0x12000, scoped, tag = 'internal scratch']
  %s0 = inlined_call_operand.vmem [shape: f32[512,128], index: 0, kind: input, shape index: {}]
  %s1 = inlined_call_operand.vmem [shape: f32[1,128], index: 1, kind: input, shape index: {}]
  %s2 = inlined_call_operand.vmem [shape: f32[1,128], index: 2, kind: input, shape index: {}]
  %s3 = inlined_call_operand.vmem [shape: bf16[512,128], index: 3, kind: output, shape index: {}]
  %s4 = sld [smem:[#allocation0]]
  $region22: #{decoder_block_forward.5} parent=0
    _
  %s6 = ssub.s32 1, %s4
  %s7 = scalar_select 0, %s6, %s4
  // Predicated region
  $region2: #{decoder_block_forward.5} parent=0 // pred_check
    _
  $region3: #{decoder_block_forward.5} parent=0 // pred_check_branch
    %9 = sbr.rel (0) target = $region5
  $region4: #{decoder_block_forward.5} parent=0 // pred_region
    _
  $region5: #{decoder_block_forward.5} parent=0 // pred_fallthru
    _
  // Predicated region
  $region6: #{decoder_block_forward.5} parent=0 // pred_check
    _
  $region7: #{decoder_block_forward.5} parent=0 // pred_check_branch
    %11 = sbr.rel (0) target = $region9
  $region8: #{decoder_block_forward.5} parent=0 // pred_region
    _
  $region9: #{decoder_block_forward.5} parent=0 // pred_fallthru
    _
  // Predicated region
  $region10: #{decoder_block_forward.5} parent=0 // pred_check
    _
  $region11: #{decoder_block_forward.5} parent=0 // pred_check_branch
    %13 = sbr.rel (0) target = $region13
  $region12: #{decoder_block_forward.5} parent=0 // pred_region
    _
  $region13: #{decoder_block_forward.5} parent=0 // pred_fallthru
    _
  %v14 = vld [vmem:[%s0] sm:$0xff]
  %v15 = vld [vmem:[%s0 + $0x8] sm:$0xff]
  %v16 = vld [vmem:[%s0 + $0x10] sm:$0xff]
  %v17 = vld [vmem:[%s0 + $0x18] sm:$0xff]
  %v18 = vld [vmem:[%s0 + $0x20] sm:$0xff]
  %v19 = vld [vmem:[%s0 + $0x28] sm:$0xff]
  %v20 = vld [vmem:[%s0 + $0x30] sm:$0xff]
  %v21 = vld [vmem:[%s0 + $0x38] sm:$0xff]
  %v22 = vld [vmem:[%s0 + $0x40] sm:$0xff]
  %v23 = vld [vmem:[%s0 + $0x48] sm:$0xff]
  %v24 = vld [vmem:[%s0 + $0x50] sm:$0xff]
  %v25 = vld [vmem:[%s0 + $0x58] sm:$0xff]
  %v26 = vld [vmem:[%s0 + $0x60] sm:$0xff]
  %v27 = vld [vmem:[%s0 + $0x68] sm:$0xff]
  %v28 = vld [vmem:[%s0 + $0x70] sm:$0xff]
  %v29 = vld [vmem:[%s0 + $0x78] sm:$0xff]
  %v30 = vld [vmem:[%s0 + $0x80] sm:$0xff]
  %v31 = vld [vmem:[%s0 + $0x88] sm:$0xff]
  %v32 = vld [vmem:[%s0 + $0x90] sm:$0xff]
  %v33 = vld [vmem:[%s0 + $0x98] sm:$0xff]
  %v34 = vld [vmem:[%s0 + $0xa0] sm:$0xff]
  %v35 = vld [vmem:[%s0 + $0xa8] sm:$0xff]
  %v36 = vld [vmem:[%s0 + $0xb0] sm:$0xff]
  %v37 = vld [vmem:[%s0 + $0xb8] sm:$0xff]
  %v38 = vld [vmem:[%s0 + $0xc0] sm:$0xff]
  %v39 = vld [vmem:[%s0 + $0xc8] sm:$0xff]
  %v40 = vld [vmem:[%s0 + $0xd0] sm:$0xff]
  %v41 = vld [vmem:[%s0 + $0xd8] sm:$0xff]
  %v42 = vld [vmem:[%s0 + $0xe0] sm:$0xff]
  %v43 = vld [vmem:[%s0 + $0xe8] sm:$0xff]
  %v44 = vld [vmem:[%s0 + $0xf0] sm:$0xff]
  %v45 = vld [vmem:[%s0 + $0xf8] sm:$0xff]
  %v46 = vld [vmem:[%s0 + $0x100] sm:$0xff]
  %v47 = vld [vmem:[%s0 + $0x108] sm:$0xff]
  %v48 = vld [vmem:[%s0 + $0x110] sm:$0xff]
  %v49 = vld [vmem:[%s0 + $0x118] sm:$0xff]
  %v50 = vld [vmem:[%s0 + $0x120] sm:$0xff]
  %v51 = vld [vmem:[%s0 + $0x128] sm:$0xff]
  %v52 = vld [vmem:[%s0 + $0x130] sm:$0xff]
  %v53 = vld [vmem:[%s0 + $0x138] sm:$0xff]
  %v54 = vld [vmem:[%s0 + $0x140] sm:$0xff]
  %v55 = vld [vmem:[%s0 + $0x148] sm:$0xff]
  %v56 = vld [vmem:[%s0 + $0x150] sm:$0xff]
  %v57 = vld [vmem:[%s0 + $0x158] sm:$0xff]
  %v58 = vld [vmem:[%s0 + $0x160] sm:$0xff]
  %v59 = vld [vmem:[%s0 + $0x168] sm:$0xff]
  %v60 = vld [vmem:[%s0 + $0x170] sm:$0xff]
  %v61 = vld [vmem:[%s0 + $0x178] sm:$0xff]
  %v62 = vld [vmem:[%s0 + $0x180] sm:$0xff]
  %v63 = vld [vmem:[%s0 + $0x188] sm:$0xff]
  %v64 = vld [vmem:[%s0 + $0x190] sm:$0xff]
  %v65 = vld [vmem:[%s0 + $0x198] sm:$0xff]
  %v66 = vld [vmem:[%s0 + $0x1a0] sm:$0xff]
  %v67 = vld [vmem:[%s0 + $0x1a8] sm:$0xff]
  %v68 = vld [vmem:[%s0 + $0x1b0] sm:$0xff]
  %v69 = vld [vmem:[%s0 + $0x1b8] sm:$0xff]
  %v70 = vld [vmem:[%s0 + $0x1c0] sm:$0xff]
  %v71 = vld [vmem:[%s0 + $0x1c8] sm:$0xff]
  %v72 = vld [vmem:[%s0 + $0x1d0] sm:$0xff]
  %v73 = vld [vmem:[%s0 + $0x1d8] sm:$0xff]
  %v74 = vld [vmem:[%s0 + $0x1e0] sm:$0xff]
  %v75 = vld [vmem:[%s0 + $0x1e8] sm:$0xff]
  %v76 = vld [vmem:[%s0 + $0x1f0] sm:$0xff]
  %v77 = vld [vmem:[%s0 + $0x1f8] sm:$0xff]
  %v78 = vld [vmem:[%s1] sm:$0x1]
  %v80 = vlaneseq
  %v81 = vshrl.u32 %v80, 7
  %v82 = vsub.s32 0, %v81
  %v83 = vrot.slane %v78, %v82
  %v85 = vmul.f32 %v14, %v83
  %v86 = vmul.f32 %v15, %v83
  %v87 = vmul.f32 %v16, %v83
  %v88 = vmul.f32 %v17, %v83
  %v89 = vmul.f32 %v18, %v83
  %v90 = vmul.f32 %v19, %v83
  %v91 = vmul.f32 %v20, %v83
  %v92 = vmul.f32 %v21, %v83
  %v93 = vmul.f32 %v22, %v83
  %v94 = vmul.f32 %v23, %v83
  %v95 = vmul.f32 %v24, %v83
  %v96 = vmul.f32 %v25, %v83
  %v97 = vmul.f32 %v26, %v83
  %v98 = vmul.f32 %v27, %v83
  %v99 = vmul.f32 %v28, %v83
  %v100 = vmul.f32 %v29, %v83
  %v101 = vmul.f32 %v30, %v83
  %v102 = vmul.f32 %v31, %v83
  %v103 = vmul.f32 %v32, %v83
  %v104 = vmul.f32 %v33, %v83
  %v105 = vmul.f32 %v34, %v83
  %v106 = vmul.f32 %v35, %v83
  %v107 = vmul.f32 %v36, %v83
  %v108 = vmul.f32 %v37, %v83
  %v109 = vmul.f32 %v38, %v83
  %v110 = vmul.f32 %v39, %v83
  %v111 = vmul.f32 %v40, %v83
  %v112 = vmul.f32 %v41, %v83
  %v113 = vmul.f32 %v42, %v83
  %v114 = vmul.f32 %v43, %v83
  %v115 = vmul.f32 %v44, %v83
  %v116 = vmul.f32 %v45, %v83
  %v117 = vmul.f32 %v46, %v83
  %v118 = vmul.f32 %v47, %v83
  %v119 = vmul.f32 %v48, %v83
  %v120 = vmul.f32 %v49, %v83
  %v121 = vmul.f32 %v50, %v83
  %v122 = vmul.f32 %v51, %v83
  %v123 = vmul.f32 %v52, %v83
  %v124 = vmul.f32 %v53, %v83
  %v125 = vmul.f32 %v54, %v83
  %v126 = vmul.f32 %v55, %v83
  %v127 = vmul.f32 %v56, %v83
  %v128 = vmul.f32 %v57, %v83
  %v129 = vmul.f32 %v58, %v83
  %v130 = vmul.f32 %v59, %v83
  %v131 = vmul.f32 %v60, %v83
  %v132 = vmul.f32 %v61, %v83
  %v133 = vmul.f32 %v62, %v83
  %v134 = vmul.f32 %v63, %v83
  %v135 = vmul.f32 %v64, %v83
  %v136 = vmul.f32 %v65, %v83
  %v137 = vmul.f32 %v66, %v83
  %v138 = vmul.f32 %v67, %v83
  %v139 = vmul.f32 %v68, %v83
  %v140 = vmul.f32 %v69, %v83
  %v141 = vmul.f32 %v70, %v83
  %v142 = vmul.f32 %v71, %v83
  %v143 = vmul.f32 %v72, %v83
  %v144 = vmul.f32 %v73, %v83
  %v145 = vmul.f32 %v74, %v83
  %v146 = vmul.f32 %v75, %v83
  %v147 = vmul.f32 %v76, %v83
  %v148 = vmul.f32 %v77, %v83
  %v149 = vld [vmem:[%s2] sm:$0x1]
  %v151 = vlaneseq
  %v152 = vshrl.u32 %v151, 7
  %v153 = vsub.s32 0, %v152
  %v154 = vrot.slane %v149, %v153
  %v156 = vadd.f32 %v85, %v154
  %v157 = vadd.f32 %v86, %v154
  %v158 = vadd.f32 %v87, %v154
  %v159 = vadd.f32 %v88, %v154
  %v160 = vadd.f32 %v89, %v154
  %v161 = vadd.f32 %v90, %v154
  %v162 = vadd.f32 %v91, %v154
  %v163 = vadd.f32 %v92, %v154
  %v164 = vadd.f32 %v93, %v154
  %v165 = vadd.f32 %v94, %v154
  %v166 = vadd.f32 %v95, %v154
  %v167 = vadd.f32 %v96, %v154
  %v168 = vadd.f32 %v97, %v154
  %v169 = vadd.f32 %v98, %v154
  %v170 = vadd.f32 %v99, %v154
  %v171 = vadd.f32 %v100, %v154
  %v172 = vadd.f32 %v101, %v154
  %v173 = vadd.f32 %v102, %v154
  %v174 = vadd.f32 %v103, %v154
  %v175 = vadd.f32 %v104, %v154
  %v176 = vadd.f32 %v105, %v154
  %v177 = vadd.f32 %v106, %v154
  %v178 = vadd.f32 %v107, %v154
  %v179 = vadd.f32 %v108, %v154
  %v180 = vadd.f32 %v109, %v154
  %v181 = vadd.f32 %v110, %v154
  %v182 = vadd.f32 %v111, %v154
  %v183 = vadd.f32 %v112, %v154
  %v184 = vadd.f32 %v113, %v154
  %v185 = vadd.f32 %v114, %v154
  %v186 = vadd.f32 %v115, %v154
  %v187 = vadd.f32 %v116, %v154
  %v188 = vadd.f32 %v117, %v154
  %v189 = vadd.f32 %v118, %v154
  %v190 = vadd.f32 %v119, %v154
  %v191 = vadd.f32 %v120, %v154
  %v192 = vadd.f32 %v121, %v154
  %v193 = vadd.f32 %v122, %v154
  %v194 = vadd.f32 %v123, %v154
  %v195 = vadd.f32 %v124, %v154
  %v196 = vadd.f32 %v125, %v154
  %v197 = vadd.f32 %v126, %v154
  %v198 = vadd.f32 %v127, %v154
  %v199 = vadd.f32 %v128, %v154
  %v200 = vadd.f32 %v129, %v154
  %v201 = vadd.f32 %v130, %v154
  %v202 = vadd.f32 %v131, %v154
  %v203 = vadd.f32 %v132, %v154
  %v204 = vadd.f32 %v133, %v154
  %v205 = vadd.f32 %v134, %v154
  %v206 = vadd.f32 %v135, %v154
  %v207 = vadd.f32 %v136, %v154
  %v208 = vadd.f32 %v137, %v154
  %v209 = vadd.f32 %v138, %v154
  %v210 = vadd.f32 %v139, %v154
  %v211 = vadd.f32 %v140, %v154
  %v212 = vadd.f32 %v141, %v154
  %v213 = vadd.f32 %v142, %v154
  %v214 = vadd.f32 %v143, %v154
  %v215 = vadd.f32 %v144, %v154
  %v216 = vadd.f32 %v145, %v154
  %v217 = vadd.f32 %v146, %v154
  %v218 = vadd.f32 %v147, %v154
  %v219 = vadd.f32 %v148, %v154
  %vm220 = vcmp.gt.f32.partialorder %v156, 0.0
  %vm221 = vcmp.gt.f32.partialorder %v157, 0.0
  %vm222 = vcmp.gt.f32.partialorder %v158, 0.0
  %vm223 = vcmp.gt.f32.partialorder %v159, 0.0
  %vm224 = vcmp.gt.f32.partialorder %v160, 0.0
  %vm225 = vcmp.gt.f32.partialorder %v161, 0.0
  %vm226 = vcmp.gt.f32.partialorder %v162, 0.0
  %vm227 = vcmp.gt.f32.partialorder %v163, 0.0
  %vm228 = vcmp.gt.f32.partialorder %v164, 0.0
  %vm229 = vcmp.gt.f32.partialorder %v165, 0.0
  %vm230 = vcmp.gt.f32.partialorder %v166, 0.0
  %vm231 = vcmp.gt.f32.partialorder %v167, 0.0
  %vm232 = vcmp.gt.f32.partialorder %v168, 0.0
  %vm233 = vcmp.gt.f32.partialorder %v169, 0.0
  %vm234 = vcmp.gt.f32.partialorder %v170, 0.0
  %vm235 = vcmp.gt.f32.partialorder %v171, 0.0
  %vm236 = vcmp.gt.f32.partialorder %v172, 0.0
  %vm237 = vcmp.gt.f32.partialorder %v173, 0.0
  %vm238 = vcmp.gt.f32.partialorder %v174, 0.0
  %vm239 = vcmp.gt.f32.partialorder %v175, 0.0
  %vm240 = vcmp.gt.f32.partialorder %v176, 0.0
  %vm241 = vcmp.gt.f32.partialorder %v177, 0.0
  %vm242 = vcmp.gt.f32.partialorder %v178, 0.0
  %vm243 = vcmp.gt.f32.partialorder %v179, 0.0
  %vm244 = vcmp.gt.f32.partialorder %v180, 0.0
  %vm245 = vcmp.gt.f32.partialorder %v181, 0.0
  %vm246 = vcmp.gt.f32.partialorder %v182, 0.0
  %vm247 = vcmp.gt.f32.partialorder %v183, 0.0
  %vm248 = vcmp.gt.f32.partialorder %v184, 0.0
  %vm249 = vcmp.gt.f32.partialorder %v185, 0.0
  %vm250 = vcmp.gt.f32.partialorder %v186, 0.0
  %vm251 = vcmp.gt.f32.partialorder %v187, 0.0
  %vm252 = vcmp.gt.f32.partialorder %v188, 0.0
  %vm253 = vcmp.gt.f32.partialorder %v189, 0.0
  %vm254 = vcmp.gt.f32.partialorder %v190, 0.0
  %vm255 = vcmp.gt.f32.partialorder %v191, 0.0
  %vm256 = vcmp.gt.f32.partialorder %v192, 0.0
  %vm257 = vcmp.gt.f32.partialorder %v193, 0.0
  %vm258 = vcmp.gt.f32.partialorder %v194, 0.0
  %vm259 = vcmp.gt.f32.partialorder %v195, 0.0
  %vm260 = vcmp.gt.f32.partialorder %v196, 0.0
  %vm261 = vcmp.gt.f32.partialorder %v197, 0.0
  %vm262 = vcmp.gt.f32.partialorder %v198, 0.0
  %vm263 = vcmp.gt.f32.partialorder %v199, 0.0
  %vm264 = vcmp.gt.f32.partialorder %v200, 0.0
  %vm265 = vcmp.gt.f32.partialorder %v201, 0.0
  %vm266 = vcmp.gt.f32.partialorder %v202, 0.0
  %vm267 = vcmp.gt.f32.partialorder %v203, 0.0
  %vm268 = vcmp.gt.f32.partialorder %v204, 0.0
  %vm269 = vcmp.gt.f32.partialorder %v205, 0.0
  %vm270 = vcmp.gt.f32.partialorder %v206, 0.0
  %vm271 = vcmp.gt.f32.partialorder %v207, 0.0
  %vm272 = vcmp.gt.f32.partialorder %v208, 0.0
  %vm273 = vcmp.gt.f32.partialorder %v209, 0.0
  %vm274 = vcmp.gt.f32.partialorder %v210, 0.0
  %vm275 = vcmp.gt.f32.partialorder %v211, 0.0
  %vm276 = vcmp.gt.f32.partialorder %v212, 0.0
  %vm277 = vcmp.gt.f32.partialorder %v213, 0.0
  %vm278 = vcmp.gt.f32.partialorder %v214, 0.0
  %vm279 = vcmp.gt.f32.partialorder %v215, 0.0
  %vm280 = vcmp.gt.f32.partialorder %v216, 0.0
  %vm281 = vcmp.gt.f32.partialorder %v217, 0.0
  %vm282 = vcmp.gt.f32.partialorder %v218, 0.0
  %vm283 = vcmp.gt.f32.partialorder %v219, 0.0
  %v284 = vmul.f32 %v156, 0.1
  %v285 = vmul.f32 %v157, 0.1
  %v286 = vmul.f32 %v158, 0.1
  %v287 = vmul.f32 %v159, 0.1
  %v288 = vmul.f32 %v160, 0.1
  %v289 = vmul.f32 %v161, 0.1
  %v290 = vmul.f32 %v162, 0.1
  %v291 = vmul.f32 %v163, 0.1
  %v292 = vmul.f32 %v164, 0.1
  %v293 = vmul.f32 %v165, 0.1
  %v294 = vmul.f32 %v166, 0.1
  %v295 = vmul.f32 %v167, 0.1
  %v296 = vmul.f32 %v168, 0.1
  %v297 = vmul.f32 %v169, 0.1
  %v298 = vmul.f32 %v170, 0.1
  %v299 = vmul.f32 %v171, 0.1
  %v300 = vmul.f32 %v172, 0.1
  %v301 = vmul.f32 %v173, 0.1
  %v302 = vmul.f32 %v174, 0.1
  %v303 = vmul.f32 %v175, 0.1
  %v304 = vmul.f32 %v176, 0.1
  %v305 = vmul.f32 %v177, 0.1
  %v306 = vmul.f32 %v178, 0.1
  %v307 = vmul.f32 %v179, 0.1
  %v308 = vmul.f32 %v180, 0.1
  %v309 = vmul.f32 %v181, 0.1
  %v310 = vmul.f32 %v182, 0.1
  %v311 = vmul.f32 %v183, 0.1
  %v312 = vmul.f32 %v184, 0.1
  %v313 = vmul.f32 %v185, 0.1
  %v314 = vmul.f32 %v186, 0.1
  %v315 = vmul.f32 %v187, 0.1
  %v316 = vmul.f32 %v188, 0.1
  %v317 = vmul.f32 %v189, 0.1
  %v318 = vmul.f32 %v190, 0.1
  %v319 = vmul.f32 %v191, 0.1
  %v320 = vmul.f32 %v192, 0.1
  %v321 = vmul.f32 %v193, 0.1
  %v322 = vmul.f32 %v194, 0.1
  %v323 = vmul.f32 %v195, 0.1
  %v324 = vmul.f32 %v196, 0.1
  %v325 = vmul.f32 %v197, 0.1
  %v326 = vmul.f32 %v198, 0.1
  %v327 = vmul.f32 %v199, 0.1
  %v328 = vmul.f32 %v200, 0.1
  %v329 = vmul.f32 %v201, 0.1
  %v330 = vmul.f32 %v202, 0.1
  %v331 = vmul.f32 %v203, 0.1
  %v332 = vmul.f32 %v204, 0.1
  %v333 = vmul.f32 %v205, 0.1
  %v334 = vmul.f32 %v206, 0.1
  %v335 = vmul.f32 %v207, 0.1
  %v336 = vmul.f32 %v208, 0.1
  %v337 = vmul.f32 %v209, 0.1
  %v338 = vmul.f32 %v210, 0.1
  %v339 = vmul.f32 %v211, 0.1
  %v340 = vmul.f32 %v212, 0.1
  %v341 = vmul.f32 %v213, 0.1
  %v342 = vmul.f32 %v214, 0.1
  %v343 = vmul.f32 %v215, 0.1
  %v344 = vmul.f32 %v216, 0.1
  %v345 = vmul.f32 %v217, 0.1
  %v346 = vmul.f32 %v218, 0.1
  %v347 = vmul.f32 %v219, 0.1
  %v348 = vsel %vm220, %v156, %v284
  %v349 = vsel %vm221, %v157, %v285
  %v350 = vsel %vm222, %v158, %v286
  %v351 = vsel %vm223, %v159, %v287
  %v352 = vsel %vm224, %v160, %v288
  %v353 = vsel %vm225, %v161, %v289
  %v354 = vsel %vm226, %v162, %v290
  %v355 = vsel %vm227, %v163, %v291
  %v356 = vsel %vm228, %v164, %v292
  %v357 = vsel %vm229, %v165, %v293
  %v358 = vsel %vm230, %v166, %v294
  %v359 = vsel %vm231, %v167, %v295
  %v360 = vsel %vm232, %v168, %v296
  %v361 = vsel %vm233, %v169, %v297
  %v362 = vsel %vm234, %v170, %v298
  %v363 = vsel %vm235, %v171, %v299
  %v364 = vsel %vm236, %v172, %v300
  %v365 = vsel %vm237, %v173, %v301
  %v366 = vsel %vm238, %v174, %v302
  %v367 = vsel %vm239, %v175, %v303
  %v368 = vsel %vm240, %v176, %v304
  %v369 = vsel %vm241, %v177, %v305
  %v370 = vsel %vm242, %v178, %v306
  %v371 = vsel %vm243, %v179, %v307
  %v372 = vsel %vm244, %v180, %v308
  %v373 = vsel %vm245, %v181, %v309
  %v374 = vsel %vm246, %v182, %v310
  %v375 = vsel %vm247, %v183, %v311
  %v376 = vsel %vm248, %v184, %v312
  %v377 = vsel %vm249, %v185, %v313
  %v378 = vsel %vm250, %v186, %v314
  %v379 = vsel %vm251, %v187, %v315
  %v380 = vsel %vm252, %v188, %v316
  %v381 = vsel %vm253, %v189, %v317
  %v382 = vsel %vm254, %v190, %v318
  %v383 = vsel %vm255, %v191, %v319
  %v384 = vsel %vm256, %v192, %v320
  %v385 = vsel %vm257, %v193, %v321
  %v386 = vsel %vm258, %v194, %v322
  %v387 = vsel %vm259, %v195, %v323
  %v388 = vsel %vm260, %v196, %v324
  %v389 = vsel %vm261, %v197, %v325
  %v390 = vsel %vm262, %v198, %v326
  %v391 = vsel %vm263, %v199, %v327
  %v392 = vsel %vm264, %v200, %v328
  %v393 = vsel %vm265, %v201, %v329
  %v394 = vsel %vm266, %v202, %v330
  %v395 = vsel %vm267, %v203, %v331
  %v396 = vsel %vm268, %v204, %v332
  %v397 = vsel %vm269, %v205, %v333
  %v398 = vsel %vm270, %v206, %v334
  %v399 = vsel %vm271, %v207, %v335
  %v400 = vsel %vm272, %v208, %v336
  %v401 = vsel %vm273, %v209, %v337
  %v402 = vsel %vm274, %v210, %v338
  %v403 = vsel %vm275, %v211, %v339
  %v404 = vsel %vm276, %v212, %v340
  %v405 = vsel %vm277, %v213, %v341
  %v406 = vsel %vm278, %v214, %v342
  %v407 = vsel %vm279, %v215, %v343
  %v408 = vsel %vm280, %v216, %v344
  %v409 = vsel %vm281, %v217, %v345
  %v410 = vsel %vm282, %v218, %v346
  %v411 = vsel %vm283, %v219, %v347
  %v412 = vpack.c.bf16 %v349, %v348
  %v413 = vpack.c.bf16 %v351, %v350
  %v414 = vpack.c.bf16 %v353, %v352
  %v415 = vpack.c.bf16 %v355, %v354
  %v416 = vpack.c.bf16 %v357, %v356
  %v417 = vpack.c.bf16 %v359, %v358
  %v418 = vpack.c.bf16 %v361, %v360
  %v419 = vpack.c.bf16 %v363, %v362
  %v420 = vpack.c.bf16 %v365, %v364
  %v421 = vpack.c.bf16 %v367, %v366
  %v422 = vpack.c.bf16 %v369, %v368
  %v423 = vpack.c.bf16 %v371, %v370
  %v424 = vpack.c.bf16 %v373, %v372
  %v425 = vpack.c.bf16 %v375, %v374
  %v426 = vpack.c.bf16 %v377, %v376
  %v427 = vpack.c.bf16 %v379, %v378
  %v428 = vpack.c.bf16 %v381, %v380
  %v429 = vpack.c.bf16 %v383, %v382
  %v430 = vpack.c.bf16 %v385, %v384
  %v431 = vpack.c.bf16 %v387, %v386
  %v432 = vpack.c.bf16 %v389, %v388
  %v433 = vpack.c.bf16 %v391, %v390
  %v434 = vpack.c.bf16 %v393, %v392
  %v435 = vpack.c.bf16 %v395, %v394
  %v436 = vpack.c.bf16 %v397, %v396
  %v437 = vpack.c.bf16 %v399, %v398
  %v438 = vpack.c.bf16 %v401, %v400
  %v439 = vpack.c.bf16 %v403, %v402
  %v440 = vpack.c.bf16 %v405, %v404
  %v441 = vpack.c.bf16 %v407, %v406
  %v442 = vpack.c.bf16 %v409, %v408
  %v443 = vpack.c.bf16 %v411, %v410
  %v476 = vunpack.c.l.b16 %v412
  %v477 = vunpack.c.h.b16 %v412
  %v478 = vunpack.c.l.b16 %v413
  %v479 = vunpack.c.h.b16 %v413
  %v480 = vunpack.c.l.b16 %v414
  %v481 = vunpack.c.h.b16 %v414
  %v482 = vunpack.c.l.b16 %v415
  %v483 = vunpack.c.h.b16 %v415
  %v484 = vunpack.c.l.b16 %v416
  %v485 = vunpack.c.h.b16 %v416
  %v486 = vunpack.c.l.b16 %v417
  %v487 = vunpack.c.h.b16 %v417
  %v488 = vunpack.c.l.b16 %v418
  %v489 = vunpack.c.h.b16 %v418
  %v490 = vunpack.c.l.b16 %v419
  %v491 = vunpack.c.h.b16 %v419
  %v492 = vunpack.c.l.b16 %v420
  %v493 = vunpack.c.h.b16 %v420
  %v494 = vunpack.c.l.b16 %v421
  %v495 = vunpack.c.h.b16 %v421
  %v496 = vunpack.c.l.b16 %v422
  %v497 = vunpack.c.h.b16 %v422
  %v498 = vunpack.c.l.b16 %v423
  %v499 = vunpack.c.h.b16 %v423
  %v500 = vunpack.c.l.b16 %v424
  %v501 = vunpack.c.h.b16 %v424
  %v502 = vunpack.c.l.b16 %v425
  %v503 = vunpack.c.h.b16 %v425
  %v504 = vunpack.c.l.b16 %v426
  %v505 = vunpack.c.h.b16 %v426
  %v506 = vunpack.c.l.b16 %v427
  %v507 = vunpack.c.h.b16 %v427
  %v508 = vunpack.c.l.b16 %v428
  %v509 = vunpack.c.h.b16 %v428
  %v510 = vunpack.c.l.b16 %v429
  %v511 = vunpack.c.h.b16 %v429
  %v512 = vunpack.c.l.b16 %v430
  %v513 = vunpack.c.h.b16 %v430
  %v514 = vunpack.c.l.b16 %v431
  %v515 = vunpack.c.h.b16 %v431
  %v516 = vunpack.c.l.b16 %v432
  %v517 = vunpack.c.h.b16 %v432
  %v518 = vunpack.c.l.b16 %v433
  %v519 = vunpack.c.h.b16 %v433
  %v520 = vunpack.c.l.b16 %v434
  %v521 = vunpack.c.h.b16 %v434
  %v522 = vunpack.c.l.b16 %v435
  %v523 = vunpack.c.h.b16 %v435
  %v524 = vunpack.c.l.b16 %v436
  %v525 = vunpack.c.h.b16 %v436
  %v526 = vunpack.c.l.b16 %v437
  %v527 = vunpack.c.h.b16 %v437
  %v528 = vunpack.c.l.b16 %v438
  %v529 = vunpack.c.h.b16 %v438
  %v530 = vunpack.c.l.b16 %v439
  %v531 = vunpack.c.h.b16 %v439
  %v532 = vunpack.c.l.b16 %v440
  %v533 = vunpack.c.h.b16 %v440
  %v534 = vunpack.c.l.b16 %v441
  %v535 = vunpack.c.h.b16 %v441
  %v536 = vunpack.c.l.b16 %v442
  %v537 = vunpack.c.h.b16 %v442
  %v538 = vunpack.c.l.b16 %v443
  %v539 = vunpack.c.h.b16 %v443
  %v540 = vpack.c.b16 %v476, %v476
  %v541 = vpack.c.b16 %v477, %v477
  %v542 = vpack.c.b16 %v478, %v478
  %v543 = vpack.c.b16 %v479, %v479
  %v544 = vpack.c.b16 %v480, %v480
  %v545 = vpack.c.b16 %v481, %v481
  %v546 = vpack.c.b16 %v482, %v482
  %v547 = vpack.c.b16 %v483, %v483
  %v548 = vpack.c.b16 %v484, %v484
  %v549 = vpack.c.b16 %v485, %v485
  %v550 = vpack.c.b16 %v486, %v486
  %v551 = vpack.c.b16 %v487, %v487
  %v552 = vpack.c.b16 %v488, %v488
  %v553 = vpack.c.b16 %v489, %v489
  %v554 = vpack.c.b16 %v490, %v490
  %v555 = vpack.c.b16 %v491, %v491
  %v556 = vpack.c.b16 %v492, %v492
  %v557 = vpack.c.b16 %v493, %v493
  %v558 = vpack.c.b16 %v494, %v494
  %v559 = vpack.c.b16 %v495, %v495
  %v560 = vpack.c.b16 %v496, %v496
  %v561 = vpack.c.b16 %v497, %v497
  %v562 = vpack.c.b16 %v498, %v498
  %v563 = vpack.c.b16 %v499, %v499
  %v564 = vpack.c.b16 %v500, %v500
  %v565 = vpack.c.b16 %v501, %v501
  %v566 = vpack.c.b16 %v502, %v502
  %v567 = vpack.c.b16 %v503, %v503
  %v568 = vpack.c.b16 %v504, %v504
  %v569 = vpack.c.b16 %v505, %v505
  %v570 = vpack.c.b16 %v506, %v506
  %v571 = vpack.c.b16 %v507, %v507
  %v572 = vpack.c.b16 %v508, %v508
  %v573 = vpack.c.b16 %v509, %v509
  %v574 = vpack.c.b16 %v510, %v510
  %v575 = vpack.c.b16 %v511, %v511
  %v576 = vpack.c.b16 %v512, %v512
  %v577 = vpack.c.b16 %v513, %v513
  %v578 = vpack.c.b16 %v514, %v514
  %v579 = vpack.c.b16 %v515, %v515
  %v580 = vpack.c.b16 %v516, %v516
  %v581 = vpack.c.b16 %v517, %v517
  %v582 = vpack.c.b16 %v518, %v518
  %v583 = vpack.c.b16 %v519, %v519
  %v584 = vpack.c.b16 %v520, %v520
  %v585 = vpack.c.b16 %v521, %v521
  %v586 = vpack.c.b16 %v522, %v522
  %v587 = vpack.c.b16 %v523, %v523
  %v588 = vpack.c.b16 %v524, %v524
  %v589 = vpack.c.b16 %v525, %v525
  %v590 = vpack.c.b16 %v526, %v526
  %v591 = vpack.c.b16 %v527, %v527
  %v592 = vpack.c.b16 %v528, %v528
  %v593 = vpack.c.b16 %v529, %v529
  %v594 = vpack.c.b16 %v530, %v530
  %v595 = vpack.c.b16 %v531, %v531
  %v596 = vpack.c.b16 %v532, %v532
  %v597 = vpack.c.b16 %v533, %v533
  %v598 = vpack.c.b16 %v534, %v534
  %v599 = vpack.c.b16 %v535, %v535
  %v600 = vpack.c.b16 %v536, %v536
  %v601 = vpack.c.b16 %v537, %v537
  %v602 = vpack.c.b16 %v538, %v538
  %v603 = vpack.c.b16 %v539, %v539
  %668 = vst [vmem:[%s3] sm:$0xf] %v540
  %669 = vst [vmem:[%s3 + $0x4] sm:$0xf] %v541
  %670 = vst [vmem:[%s3 + $0x8] sm:$0xf] %v542
  %671 = vst [vmem:[%s3 + $0xc] sm:$0xf] %v543
  %672 = vst [vmem:[%s3 + $0x10] sm:$0xf] %v544
  %673 = vst [vmem:[%s3 + $0x14] sm:$0xf] %v545
  %674 = vst [vmem:[%s3 + $0x18] sm:$0xf] %v546
  %675 = vst [vmem:[%s3 + $0x1c] sm:$0xf] %v547
  %676 = vst [vmem:[%s3 + $0x20] sm:$0xf] %v548
  %677 = vst [vmem:[%s3 + $0x24] sm:$0xf] %v549
  %678 = vst [vmem:[%s3 + $0x28] sm:$0xf] %v550
  %679 = vst [vmem:[%s3 + $0x2c] sm:$0xf] %v551
  %680 = vst [vmem:[%s3 + $0x30] sm:$0xf] %v552
  %681 = vst [vmem:[%s3 + $0x34] sm:$0xf] %v553
  %682 = vst [vmem:[%s3 + $0x38] sm:$0xf] %v554
  %683 = vst [vmem:[%s3 + $0x3c] sm:$0xf] %v555
  %684 = vst [vmem:[%s3 + $0x40] sm:$0xf] %v556
  %685 = vst [vmem:[%s3 + $0x44] sm:$0xf] %v557
  %686 = vst [vmem:[%s3 + $0x48] sm:$0xf] %v558
  %687 = vst [vmem:[%s3 + $0x4c] sm:$0xf] %v559
  %688 = vst [vmem:[%s3 + $0x50] sm:$0xf] %v560
  %689 = vst [vmem:[%s3 + $0x54] sm:$0xf] %v561
  %690 = vst [vmem:[%s3 + $0x58] sm:$0xf] %v562
  %691 = vst [vmem:[%s3 + $0x5c] sm:$0xf] %v563
  %692 = vst [vmem:[%s3 + $0x60] sm:$0xf] %v564
  %693 = vst [vmem:[%s3 + $0x64] sm:$0xf] %v565
  %694 = vst [vmem:[%s3 + $0x68] sm:$0xf] %v566
  %695 = vst [vmem:[%s3 + $0x6c] sm:$0xf] %v567
  %696 = vst [vmem:[%s3 + $0x70] sm:$0xf] %v568
  %697 = vst [vmem:[%s3 + $0x74] sm:$0xf] %v569
  %698 = vst [vmem:[%s3 + $0x78] sm:$0xf] %v570
  %699 = vst [vmem:[%s3 + $0x7c] sm:$0xf] %v571
  %700 = vst [vmem:[%s3 + $0x80] sm:$0xf] %v572
  %701 = vst [vmem:[%s3 + $0x84] sm:$0xf] %v573
  %702 = vst [vmem:[%s3 + $0x88] sm:$0xf] %v574
  %703 = vst [vmem:[%s3 + $0x8c] sm:$0xf] %v575
  %704 = vst [vmem:[%s3 + $0x90] sm:$0xf] %v576
  %705 = vst [vmem:[%s3 + $0x94] sm:$0xf] %v577
  %706 = vst [vmem:[%s3 + $0x98] sm:$0xf] %v578
  %707 = vst [vmem:[%s3 + $0x9c] sm:$0xf] %v579
  %708 = vst [vmem:[%s3 + $0xa0] sm:$0xf] %v580
  %709 = vst [vmem:[%s3 + $0xa4] sm:$0xf] %v581
  %710 = vst [vmem:[%s3 + $0xa8] sm:$0xf] %v582
  %711 = vst [vmem:[%s3 + $0xac] sm:$0xf] %v583
  %712 = vst [vmem:[%s3 + $0xb0] sm:$0xf] %v584
  %713 = vst [vmem:[%s3 + $0xb4] sm:$0xf] %v585
  %714 = vst [vmem:[%s3 + $0xb8] sm:$0xf] %v586
  %715 = vst [vmem:[%s3 + $0xbc] sm:$0xf] %v587
  %716 = vst [vmem:[%s3 + $0xc0] sm:$0xf] %v588
  %717 = vst [vmem:[%s3 + $0xc4] sm:$0xf] %v589
  %718 = vst [vmem:[%s3 + $0xc8] sm:$0xf] %v590
  %719 = vst [vmem:[%s3 + $0xcc] sm:$0xf] %v591
  %720 = vst [vmem:[%s3 + $0xd0] sm:$0xf] %v592
  %721 = vst [vmem:[%s3 + $0xd4] sm:$0xf] %v593
  %722 = vst [vmem:[%s3 + $0xd8] sm:$0xf] %v594
  %723 = vst [vmem:[%s3 + $0xdc] sm:$0xf] %v595
  %724 = vst [vmem:[%s3 + $0xe0] sm:$0xf] %v596
  %725 = vst [vmem:[%s3 + $0xe4] sm:$0xf] %v597
  %726 = vst [vmem:[%s3 + $0xe8] sm:$0xf] %v598
  %727 = vst [vmem:[%s3 + $0xec] sm:$0xf] %v599
  %728 = vst [vmem:[%s3 + $0xf0] sm:$0xf] %v600
  %729 = vst [vmem:[%s3 + $0xf4] sm:$0xf] %v601
  %730 = vst [vmem:[%s3 + $0xf8] sm:$0xf] %v602
  %731 = vst [vmem:[%s3 + $0xfc] sm:$0xf] %v603
  // Predicated region
  $region14: #{decoder_block_forward.5} parent=0 // pred_check
    _
  $region15: #{decoder_block_forward.5} parent=0 // pred_check_branch
    %733 = sbr.rel (0) target = $region17
  $region16: #{decoder_block_forward.5} parent=0 // pred_region
    _
  $region17: #{decoder_block_forward.5} parent=0 // pred_fallthru
    _
  // Predicated region
  $region18: #{decoder_block_forward.5} parent=0 // pred_check
    _
  $region19: #{decoder_block_forward.5} parent=0 // pred_check_branch
    %735 = sbr.rel (0) target = $region21
  $region20: #{decoder_block_forward.5} parent=0 // pred_region
    _
  $region21: #{decoder_block_forward.5} parent=0 // pred_fallthru
    _

// kernel: decoder_block_forward.6
$region0: #{decoder_block_forward.6}
  #allocation0 [shape = 'u32[]', space=smem, size = 0x4, offset = 0x4, fixed_abs, tag = 'smem constant byte address 0x4 - core index']
  #allocation1 [shape = 'u32[144,128]{1,0:T(1,128)}', space=vmem, size = 0x12000, scoped, tag = 'internal scratch']
  %s0 = inlined_call_operand.vmem [shape: bf16[2048,108], index: 0, kind: input, shape index: {}]
  %s1 = inlined_call_operand.vmem [shape: bf16[108,128], index: 1, kind: input, shape index: {}]
  %s2 = inlined_call_operand.vmem [shape: f32[2048,128], index: 2, kind: output, shape index: {0}]
  %s3 = inlined_call_operand.vmem [shape: f32[32,128], index: 3, kind: output, shape index: {1}]
  %4 = xla_tuple %s2, %s3
  %s5 = sld [smem:[#allocation0]]
  $region49: #{decoder_block_forward.6} parent=0
    _
  %s7 = ssub.s32 1, %s5
  %s8 = scalar_select 0, %s7, %s5
  loop: start=0, step=1, limit=6
  $region2: #{decoder_block_forward.6} parent=0 // loop_pre_header
    _
  $region3: #{decoder_block_forward.6} parent=0 // loop_header
    %s10 = sphi 0, %s14
    %p11 = scmp.ge.s32.totalorder %s10, 6
    %s20 = sphi 0, %s22
    %s23 = sphi 0, %s20
    %s24 = sphi 0, %s23
    %s40 = sphi 0, %s24
    %s44 = sphi 0, %s44
    %s46 = sphi 0, %s44
    %s47 = sphi 0, %s46
    %s61 = sphi 0, %s47
    %s67 = sphi 0, %s69
    %s70 = sphi 0, %s67
    %s71 = sphi 0, %s70
    %s87 = sphi 0, %s71
    %s93 = sphi 0, %s95
    %s96 = sphi 0, %s93
    %s97 = sphi 0, %s96
    %s113 = sphi 0, %s97
  $region4: #{decoder_block_forward.6} parent=0 // loop_header_branch
    %13 = sbr.rel (%p11) target = $region8
  $region5: #{decoder_block_forward.6} parent=0 // loop_body
    %s15 = ssub.s32 %s10, 1
    %s16 = ssub.s32 %s10, 2
    %s17 = sadd.s32 %s10, 1
    %s18 = ssub.s32 %s10, %s17
    %p19 = scmp.eq.s32.totalorder %s18, 0
    %s21 = sadd.s32 %s20, 1
    %s22 = scalar_select %p19, %s20, %s21
    %p25 = pneg %p19
    %p26 = scmp.eq.s32.totalorder %s10, 3
    %p27 = por %p25, %p26
    %p28 = scmp.ne.s32.totalorder %s20, %s23
    %p29 = scmp.eq.s32.totalorder %s10, 0
    %p30 = por %p28, %p29
    %p31 = scmp.ne.s32.totalorder %s20, %s23
    %p32 = scmp.eq.s32.totalorder %s15, 3
    %p33 = por %p31, %p32
    %p34 = scmp.ne.s32.totalorder %s23, %s24
    %p35 = scmp.eq.s32.totalorder %s15, 0
    %p36 = por %p34, %p35
    %p37 = scmp.ne.s32.totalorder %s23, %s24
    %p38 = scmp.eq.s32.totalorder %s16, 3
    %p39 = por %p37, %p38
    %p41 = scmp.ne.s32.totalorder %s24, %s40
    %p42 = scmp.eq.s32.totalorder %s16, 0
    %p43 = por %p41, %p42
    %s45 = sadd.s32 %s44, 1
    %p48 = scmp.eq.s32.totalorder %s10, 3
    %p49 = scmp.ne.s32.totalorder %s44, %s46
    %p50 = scmp.eq.s32.totalorder %s10, 0
    %p51 = por %p49, %p50
    %p52 = scmp.ne.s32.totalorder %s44, %s46
    %p53 = scmp.eq.s32.totalorder %s15, 3
    %p54 = por %p52, %p53
    %p55 = scmp.ne.s32.totalorder %s46, %s47
    %p56 = scmp.eq.s32.totalorder %s15, 0
    %p57 = por %p55, %p56
    %p58 = scmp.ne.s32.totalorder %s46, %s47
    %p59 = scmp.eq.s32.totalorder %s16, 3
    %p60 = por %p58, %p59
    %p62 = scmp.ne.s32.totalorder %s47, %s61
    %p63 = scmp.eq.s32.totalorder %s16, 0
    %p64 = por %p62, %p63
    %s65 = ssub.s32 %s10, %s17
    %p66 = scmp.eq.s32.totalorder %s65, 0
    %s68 = sadd.s32 %s67, 1
    %s69 = scalar_select %p66, %s67, %s68
    %p72 = pneg %p66
    %p73 = scmp.eq.s32.totalorder %s10, 3
    %p74 = por %p72, %p73
    %p75 = scmp.ne.s32.totalorder %s67, %s70
    %p76 = scmp.eq.s32.totalorder %s10, 0
    %p77 = por %p75, %p76
    %p78 = scmp.ne.s32.totalorder %s67, %s70
    %p79 = scmp.eq.s32.totalorder %s15, 3
    %p80 = por %p78, %p79
    %p81 = scmp.ne.s32.totalorder %s70, %s71
    %p82 = scmp.eq.s32.totalorder %s15, 0
    %p83 = por %p81, %p82
    %p84 = scmp.ne.s32.totalorder %s70, %s71
    %p85 = scmp.eq.s32.totalorder %s16, 3
    %p86 = por %p84, %p85
    %p88 = scmp.ne.s32.totalorder %s71, %s87
    %p89 = scmp.eq.s32.totalorder %s16, 0
    %p90 = por %p88, %p89
    %s91 = ssub.s32 %s10, %s17
    %p92 = scmp.eq.s32.totalorder %s91, 0
    %s94 = sadd.s32 %s93, 1
    %s95 = scalar_select %p92, %s93, %s94
    %p98 = pneg %p92
    %p99 = scmp.eq.s32.totalorder %s10, 3
    %p100 = por %p98, %p99
    %p101 = scmp.ne.s32.totalorder %s93, %s96
    %p102 = scmp.eq.s32.totalorder %s10, 0
    %p103 = por %p101, %p102
    %p104 = scmp.ne.s32.totalorder %s93, %s96
    %p105 = scmp.eq.s32.totalorder %s15, 3
    %p106 = por %p104, %p105
    %p107 = scmp.ne.s32.totalorder %s96, %s97
    %p108 = scmp.eq.s32.totalorder %s15, 0
    %p109 = por %p107, %p108
    %p110 = scmp.ne.s32.totalorder %s96, %s97
    %p111 = scmp.eq.s32.totalorder %s16, 3
    %p112 = por %p110, %p111
    %p114 = scmp.ne.s32.totalorder %s97, %s113
    %p115 = scmp.eq.s32.totalorder %s16, 0
    %p116 = por %p114, %p115
    %p117 = scmp.le.s32.totalorder 1, %s10
    %p118 = scmp.lt.s32.totalorder %s10, 5
    %p119 = pnand %p117, %p118
    %p120 = pneg %p119
    // Predicated region
    $region9: #{decoder_block_forward.6} parent=5 // pred_check
      _
    $region10: #{decoder_block_forward.6} parent=5 // pred_check_branch
      %122 = sbr.rel (%p119) target = $region12
    $region11: #{decoder_block_forward.6} parent=5 // pred_region
      %s123 = ssub.s32 %s10, 1
      // Predicated region
      $region13: #{decoder_block_forward.6} parent=11 // pred_check
        %p124 = pneg %p57
      $region14: #{decoder_block_forward.6} parent=11 // pred_check_branch
        %126 = sbr.rel (%p124) target = $region16
      $region15: #{decoder_block_forward.6} parent=11 // pred_region
        _
      $region16: #{decoder_block_forward.6} parent=11 // pred_fallthru
        _
    $region12: #{decoder_block_forward.6} parent=5 // pred_fallthru
      _
    %p127 = scmp.lt.s32.totalorder %s10, 4
    // Predicated region
    $region17: #{decoder_block_forward.6} parent=5 // pred_check
      %p128 = pneg %p127
    $region18: #{decoder_block_forward.6} parent=5 // pred_check_branch
      %130 = sbr.rel (%p128) target = $region20
    $region19: #{decoder_block_forward.6} parent=5 // pred_region
      // Predicated region
      $region21: #{decoder_block_forward.6} parent=19 // pred_check
        %p131 = pneg %p30
      $region22: #{decoder_block_forward.6} parent=19 // pred_check_branch
        %133 = sbr.rel (%p131) target = $region24
      $region23: #{decoder_block_forward.6} parent=19 // pred_region
        %s134 = smul.u32 64, %s10
        %p135 = scmp.lt.s32.totalorder %s134, 255
        %s136 = scalar_select %p135, %s134, 255
        %s137 = smul.addr %s136, 4
        %s138 = scalar_lea.vmem %s0, %s137
        %s139 = smul.u32 64, %s10
      $region24: #{decoder_block_forward.6} parent=19 // pred_fallthru
        _
    $region20: #{decoder_block_forward.6} parent=5 // pred_fallthru
      _
    %p140 = scmp.le.s32.totalorder 1, %s10
    %p141 = scmp.lt.s32.totalorder %s10, 5
    %p142 = pnand %p140, %p141
    %p143 = pneg %p142
    // Predicated region
    $region25: #{decoder_block_forward.6} parent=5 // pred_check
      _
    $region26: #{decoder_block_forward.6} parent=5 // pred_check_branch
      %145 = sbr.rel (%p142) target = $region28
    $region27: #{decoder_block_forward.6} parent=5 // pred_region
      %s146 = ssub.s32 %s10, 1
      %s147 = smul.u32 64, %s15
      %p148 = scmp.lt.s32.totalorder %s147, 255
      %s149 = scalar_select %p148, %s147, 255
      %s150 = smul.addr %s149, 4
      %s151 = scalar_lea.vmem %s0, %s150
      %p152 = pneg %p36
      %p153 = pneg %p33
      %p154 = pneg %p57
      %p155 = pneg %p54
      %p156 = pneg %p83
      %p157 = pneg %p80
      %s158 = smul.u32 64, %s15
      %p159 = scmp.lt.s32.totalorder %s158, 255
      %s160 = scalar_select %p159, %s158, 255
      %s161 = smul.addr %s160, 8
      %s162 = scalar_lea.vmem %s2, %s161
      %p163 = pneg %p109
      %p164 = pneg %p106
      %p165 = scmp.lt.s32.totalorder %s15, 3
      %s166 = scalar_select %p165, %s15, 3
      %s167 = smul.addr %s166, 8
      %s168 = scalar_lea.vmem %s3, %s167
      %s169 = smul.u32 64, %s15
      %p170 = scmp.lt.s32.totalorder %s169, 255
      %s171 = scalar_select %p170, %s169, 255
      %s172 = smul.addr %s171, 4
      %s173 = scalar_lea.vmem %s0, %s172
      %s174 = smul.u32 64, %s15
      %s175 = smul.u32 64, %s15
      %p176 = scmp.lt.s32.totalorder %s175, 255
      %s177 = scalar_select %p176, %s175, 255
      %s178 = smul.addr %s177, 8
      %s179 = scalar_lea.vmem %s2, %s178
      %s180 = smul.u32 64, %s15
      %p181 = scmp.lt.s32.totalorder %s15, 3
      %s182 = scalar_select %p181, %s15, 3
      %s183 = smul.addr %s182, 8
      %s184 = scalar_lea.vmem %s3, %s183
      %v186 = vld [vmem:[%s173] sm:$0xf]
      %v187 = vld [vmem:[%s173 + $0x4] sm:$0xf]
      %v188 = vld [vmem:[%s173 + $0x8] sm:$0xf]
      %v189 = vld [vmem:[%s173 + $0xc] sm:$0xf]
      %v190 = vld [vmem:[%s173 + $0x10] sm:$0xf]
      %v191 = vld [vmem:[%s173 + $0x14] sm:$0xf]
      %v192 = vld [vmem:[%s173 + $0x18] sm:$0xf]
      %v193 = vld [vmem:[%s173 + $0x1c] sm:$0xf]
      %v194 = vld [vmem:[%s173 + $0x20] sm:$0xf]
      %v195 = vld [vmem:[%s173 + $0x24] sm:$0xf]
      %v196 = vld [vmem:[%s173 + $0x28] sm:$0xf]
      %v197 = vld [vmem:[%s173 + $0x2c] sm:$0xf]
      %v198 = vld [vmem:[%s173 + $0x30] sm:$0xf]
      %v199 = vld [vmem:[%s173 + $0x34] sm:$0xf]
      %v200 = vld [vmem:[%s173 + $0x38] sm:$0xf]
      %v201 = vld [vmem:[%s173 + $0x3c] sm:$0xf]
      %v202 = vld [vmem:[%s173 + $0x40] sm:$0xf]
      %v203 = vld [vmem:[%s173 + $0x44] sm:$0xf]
      %v204 = vld [vmem:[%s173 + $0x48] sm:$0xf]
      %v205 = vld [vmem:[%s173 + $0x4c] sm:$0xf]
      %v206 = vld [vmem:[%s173 + $0x50] sm:$0xf]
      %v207 = vld [vmem:[%s173 + $0x54] sm:$0xf]
      %v208 = vld [vmem:[%s173 + $0x58] sm:$0xf]
      %v209 = vld [vmem:[%s173 + $0x5c] sm:$0xf]
      %v210 = vld [vmem:[%s173 + $0x60] sm:$0xf]
      %v211 = vld [vmem:[%s173 + $0x64] sm:$0xf]
      %v212 = vld [vmem:[%s173 + $0x68] sm:$0xf]
      %v213 = vld [vmem:[%s173 + $0x6c] sm:$0xf]
      %v214 = vld [vmem:[%s173 + $0x70] sm:$0xf]
      %v215 = vld [vmem:[%s173 + $0x74] sm:$0xf]
      %v216 = vld [vmem:[%s173 + $0x78] sm:$0xf]
      %v217 = vld [vmem:[%s173 + $0x7c] sm:$0xf]
      %v218 = vld [vmem:[%s173 + $0x80] sm:$0xf]
      %v219 = vld [vmem:[%s173 + $0x84] sm:$0xf]
      %v220 = vld [vmem:[%s173 + $0x88] sm:$0xf]
      %v221 = vld [vmem:[%s173 + $0x8c] sm:$0xf]
      %v222 = vld [vmem:[%s173 + $0x90] sm:$0xf]
      %v223 = vld [vmem:[%s173 + $0x94] sm:$0xf]
      %v224 = vld [vmem:[%s173 + $0x98] sm:$0xf]
      %v225 = vld [vmem:[%s173 + $0x9c] sm:$0xf]
      %v226 = vld [vmem:[%s173 + $0xa0] sm:$0xf]
      %v227 = vld [vmem:[%s173 + $0xa4] sm:$0xf]
      %v228 = vld [vmem:[%s173 + $0xa8] sm:$0xf]
      %v229 = vld [vmem:[%s173 + $0xac] sm:$0xf]
      %v230 = vld [vmem:[%s173 + $0xb0] sm:$0xf]
      %v231 = vld [vmem:[%s173 + $0xb4] sm:$0xf]
      %v232 = vld [vmem:[%s173 + $0xb8] sm:$0xf]
      %v233 = vld [vmem:[%s173 + $0xbc] sm:$0xf]
      %v234 = vld [vmem:[%s173 + $0xc0] sm:$0xf]
      %v235 = vld [vmem:[%s173 + $0xc4] sm:$0xf]
      %v236 = vld [vmem:[%s173 + $0xc8] sm:$0xf]
      %v237 = vld [vmem:[%s173 + $0xcc] sm:$0xf]
      %v238 = vld [vmem:[%s173 + $0xd0] sm:$0xf]
      %v239 = vld [vmem:[%s173 + $0xd4] sm:$0xf]
      %v240 = vld [vmem:[%s173 + $0xd8] sm:$0xf]
      %v241 = vld [vmem:[%s173 + $0xdc] sm:$0xf]
      %v242 = vld [vmem:[%s173 + $0xe0] sm:$0xf]
      %v243 = vld [vmem:[%s173 + $0xe4] sm:$0xf]
      %v244 = vld [vmem:[%s173 + $0xe8] sm:$0xf]
      %v245 = vld [vmem:[%s173 + $0xec] sm:$0xf]
      %v246 = vld [vmem:[%s173 + $0xf0] sm:$0xf]
      %v247 = vld [vmem:[%s173 + $0xf4] sm:$0xf]
      %v248 = vld [vmem:[%s173 + $0xf8] sm:$0xf]
      %v249 = vld [vmem:[%s173 + $0xfc] sm:$0xf]
      %v250 = vld [vmem:[%s1] sm:$0xf]
      %v251 = vld [vmem:[%s1 + $0x4] sm:$0xf]
      %v252 = vld [vmem:[%s1 + $0x8] sm:$0xf]
      %v253 = vld [vmem:[%s1 + $0xc] sm:$0xf]
      %v254 = vld [vmem:[%s1 + $0x10] sm:$0xf]
      %v255 = vld [vmem:[%s1 + $0x14] sm:$0xf]
      %v256 = vld [vmem:[%s1 + $0x18] sm:$0xf]
      %v257 = vld [vmem:[%s1 + $0x1c] sm:$0xf]
      %v258 = vld [vmem:[%s1 + $0x20] sm:$0xf]
      %v259 = vld [vmem:[%s1 + $0x24] sm:$0xf]
      %v260 = vld [vmem:[%s1 + $0x28] sm:$0xf]
      %v261 = vld [vmem:[%s1 + $0x2c] sm:$0xf]
      %v262 = vld [vmem:[%s1 + $0x30] sm:$0xf]
      %v263 = vld [vmem:[%s1 + $0x34] sm:$0x3]
      %v328 = vunpack.c.l.b16 %v186
      %v329 = vunpack.c.l.b16 %v187
      %v330 = vunpack.c.l.b16 %v188
      %v331 = vunpack.c.l.b16 %v189
      %v332 = vunpack.c.l.b16 %v190
      %v333 = vunpack.c.l.b16 %v191
      %v334 = vunpack.c.l.b16 %v192
      %v335 = vunpack.c.l.b16 %v193
      %v336 = vunpack.c.l.b16 %v194
      %v337 = vunpack.c.l.b16 %v195
      %v338 = vunpack.c.l.b16 %v196
      %v339 = vunpack.c.l.b16 %v197
      %v340 = vunpack.c.l.b16 %v198
      %v341 = vunpack.c.l.b16 %v199
      %v342 = vunpack.c.l.b16 %v200
      %v343 = vunpack.c.l.b16 %v201
      %v344 = vunpack.c.l.b16 %v202
      %v345 = vunpack.c.l.b16 %v203
      %v346 = vunpack.c.l.b16 %v204
      %v347 = vunpack.c.l.b16 %v205
      %v348 = vunpack.c.l.b16 %v206
      %v349 = vunpack.c.l.b16 %v207
      %v350 = vunpack.c.l.b16 %v208
      %v351 = vunpack.c.l.b16 %v209
      %v352 = vunpack.c.l.b16 %v210
      %v353 = vunpack.c.l.b16 %v211
      %v354 = vunpack.c.l.b16 %v212
      %v355 = vunpack.c.l.b16 %v213
      %v356 = vunpack.c.l.b16 %v214
      %v357 = vunpack.c.l.b16 %v215
      %v358 = vunpack.c.l.b16 %v216
      %v359 = vunpack.c.l.b16 %v217
      %v360 = vunpack.c.l.b16 %v218
      %v361 = vunpack.c.l.b16 %v219
      %v362 = vunpack.c.l.b16 %v220
      %v363 = vunpack.c.l.b16 %v221
      %v364 = vunpack.c.l.b16 %v222
      %v365 = vunpack.c.l.b16 %v223
      %v366 = vunpack.c.l.b16 %v224
      %v367 = vunpack.c.l.b16 %v225
      %v368 = vunpack.c.l.b16 %v226
      %v369 = vunpack.c.l.b16 %v227
      %v370 = vunpack.c.l.b16 %v228
      %v371 = vunpack.c.l.b16 %v229
      %v372 = vunpack.c.l.b16 %v230
      %v373 = vunpack.c.l.b16 %v231
      %v374 = vunpack.c.l.b16 %v232
      %v375 = vunpack.c.l.b16 %v233
      %v376 = vunpack.c.l.b16 %v234
      %v377 = vunpack.c.l.b16 %v235
      %v378 = vunpack.c.l.b16 %v236
      %v379 = vunpack.c.l.b16 %v237
      %v380 = vunpack.c.l.b16 %v238
      %v381 = vunpack.c.l.b16 %v239
      %v382 = vunpack.c.l.b16 %v240
      %v383 = vunpack.c.l.b16 %v241
      %v384 = vunpack.c.l.b16 %v242
      %v385 = vunpack.c.l.b16 %v243
      %v386 = vunpack.c.l.b16 %v244
      %v387 = vunpack.c.l.b16 %v245
      %v388 = vunpack.c.l.b16 %v246
      %v389 = vunpack.c.l.b16 %v247
      %v390 = vunpack.c.l.b16 %v248
      %v391 = vunpack.c.l.b16 %v249
      %v392 = vpack.c.b16 %v329, %v328
      %v393 = vpack.c.b16 %v331, %v330
      %v394 = vpack.c.b16 %v333, %v332
      %v395 = vpack.c.b16 %v335, %v334
      %v396 = vpack.c.b16 %v337, %v336
      %v397 = vpack.c.b16 %v339, %v338
      %v398 = vpack.c.b16 %v341, %v340
      %v399 = vpack.c.b16 %v343, %v342
      %v400 = vpack.c.b16 %v345, %v344
      %v401 = vpack.c.b16 %v347, %v346
      %v402 = vpack.c.b16 %v349, %v348
      %v403 = vpack.c.b16 %v351, %v350
      %v404 = vpack.c.b16 %v353, %v352
      %v405 = vpack.c.b16 %v355, %v354
      %v406 = vpack.c.b16 %v357, %v356
      %v407 = vpack.c.b16 %v359, %v358
      %v408 = vpack.c.b16 %v361, %v360
      %v409 = vpack.c.b16 %v363, %v362
      %v410 = vpack.c.b16 %v365, %v364
      %v411 = vpack.c.b16 %v367, %v366
      %v412 = vpack.c.b16 %v369, %v368
      %v413 = vpack.c.b16 %v371, %v370
      %v414 = vpack.c.b16 %v373, %v372
      %v415 = vpack.c.b16 %v375, %v374
      %v416 = vpack.c.b16 %v377, %v376
      %v417 = vpack.c.b16 %v379, %v378
      %v418 = vpack.c.b16 %v381, %v380
      %v419 = vpack.c.b16 %v383, %v382
      %v420 = vpack.c.b16 %v385, %v384
      %v421 = vpack.c.b16 %v387, %v386
      %v422 = vpack.c.b16 %v389, %v388
      %v423 = vpack.c.b16 %v391, %v390
      %v438 = vunpack.c.l.b16 %v250
      %v439 = vunpack.c.l.b16 %v251
      %v440 = vunpack.c.l.b16 %v252
      %v441 = vunpack.c.l.b16 %v253
      %v442 = vunpack.c.l.b16 %v254
      %v443 = vunpack.c.l.b16 %v255
      %v444 = vunpack.c.l.b16 %v256
      %v445 = vunpack.c.l.b16 %v257
      %v446 = vunpack.c.l.b16 %v258
      %v447 = vunpack.c.l.b16 %v259
      %v448 = vunpack.c.l.b16 %v260
      %v449 = vunpack.c.l.b16 %v261
      %v450 = vunpack.c.l.b16 %v262
      %v451 = vunpack.c.l.b16 %v263
      %v452 = vpack.c.b16 %v439, %v438
      %v453 = vpack.c.b16 %v441, %v440
      %v454 = vpack.c.b16 %v443, %v442
      %v455 = vpack.c.b16 %v445, %v444
      %v456 = vpack.c.b16 %v447, %v446
      %v457 = vpack.c.b16 %v449, %v448
      %v458 = vpack.c.b16 %v451, %v450
      %vm465 = vcmask 883712
      %v467 = vsel %vm465, %v392, 0
      %v470 = vsel %vm465, %v393, 0
      %v473 = vsel %vm465, %v394, 0
      %v476 = vsel %vm465, %v395, 0
      %v479 = vsel %vm465, %v396, 0
      %v482 = vsel %vm465, %v397, 0
      %v485 = vsel %vm465, %v398, 0
      %v488 = vsel %vm465, %v399, 0
      %v491 = vsel %vm465, %v400, 0
      %v494 = vsel %vm465, %v401, 0
      %v497 = vsel %vm465, %v402, 0
      %v500 = vsel %vm465, %v403, 0
      %v503 = vsel %vm465, %v404, 0
      %v506 = vsel %vm465, %v405, 0
      %v509 = vsel %vm465, %v406, 0
      %v512 = vsel %vm465, %v407, 0
      %v515 = vsel %vm465, %v408, 0
      %v518 = vsel %vm465, %v409, 0
      %v521 = vsel %vm465, %v410, 0
      %v524 = vsel %vm465, %v411, 0
      %v527 = vsel %vm465, %v412, 0
      %v530 = vsel %vm465, %v413, 0
      %v533 = vsel %vm465, %v414, 0
      %v536 = vsel %vm465, %v415, 0
      %v539 = vsel %vm465, %v416, 0
      %v542 = vsel %vm465, %v417, 0
      %v545 = vsel %vm465, %v418, 0
      %v548 = vsel %vm465, %v419, 0
      %v551 = vsel %vm465, %v420, 0
      %v554 = vsel %vm465, %v421, 0
      %v557 = vsel %vm465, %v422, 0
      %v560 = vsel %vm465, %v423, 0
      %vm562 = vcmask 1045504
      %v564 = vsel %vm562, %v458, 0
      %566 = vmatprep.subr.bf16.mxu0 0
      %567 = vmatpush1.bf16.msra.mxu0 %v452
      %568 = vmatprep.subr.bf16.mxu0 0
      %569 = vmatpush1.bf16.msra.mxu0 %v453
      %570 = vmatprep.subr.bf16.mxu0 0
      %571 = vmatpush1.bf16.msra.mxu0 %v454
      %572 = vmatprep.subr.bf16.mxu0 0
      %573 = vmatpush1.bf16.msra.mxu0 %v455
      %574 = vmatprep.subr.bf16.mxu0 0
      %575 = vmatpush1.bf16.msra.mxu0 %v456
      %576 = vmatprep.subr.bf16.mxu0 0
      %577 = vmatpush1.bf16.msra.mxu0 %v457
      %578 = vmatprep.subr.bf16.mxu0 0
      %579 = vmatpush1.bf16.msra.mxu0 %v564
      %580 = vmatprep.subr.bf16.mxu0 0
      %581 = vmatpush1.bf16.msra.mxu0 0
      %582 = vmatprep.subr.bf16.mxu0 0
      %583 = vmatpush1.bf16.msra.mxu0 0
      %584 = vmatprep.subr.bf16.mxu0 0
      %585 = vmatpush1.bf16.msra.mxu0 0
      %586 = vmatprep.subr.bf16.mxu0 0
      %587 = vmatpush1.bf16.msra.mxu0 0
      %588 = vmatprep.subr.bf16.mxu0 0
      %589 = vmatpush1.bf16.msra.mxu0 0
      %590 = vmatprep.subr.bf16.mxu0 0
      %591 = vmatpush1.bf16.msra.mxu0 0
      %592 = vmatprep.subr.bf16.mxu0 0
      %593 = vmatpush1.bf16.msra.mxu0 0
      %594 = vmatprep.subr.bf16.mxu0 0
      %595 = vmatpush1.bf16.msra.mxu0 0
      %596 = vmatprep.subr.bf16.mxu0 0
      %597 = vmatpush1.bf16.msra.mxu0 0
      %598 = vmatprep.mubr.bf16.mxu0 0
      %599 = vmatmul.mubr.bf16.gmra.mrb[0].mxu0 %v467
      %v600 = vpop.f32.mrb[0].mxu0
      %v601 = vadd.f32 0.0, %v600
      %v602 = vpop.f32.mrb[0].mxu0
      %v603 = vpop.f32.mrb[0].mxu0
      %v604 = vadd.f32 0.0, %v603
      %v605 = vpop.f32.mrb[0].mxu0
      %606 = vmatprep.mubr.bf16.mxu0 0
      %607 = vmatmul.mubr.bf16.gmra.mrb[0].mxu0 %v470
      %v608 = vpop.f32.mrb[0].mxu0
      %v609 = vadd.f32 0.0, %v608
      %v610 = vpop.f32.mrb[0].mxu0
      %v611 = vpop.f32.mrb[0].mxu0
      %v612 = vadd.f32 0.0, %v611
      %v613 = vpop.f32.mrb[0].mxu0
      %614 = vmatprep.mubr.bf16.mxu0 0
      %615 = vmatmul.mubr.bf16.gmra.mrb[0].mxu0 %v473
      %v616 = vpop.f32.mrb[0].mxu0
      %v617 = vadd.f32 0.0, %v616
      %v618 = vpop.f32.mrb[0].mxu0
      %v619 = vpop.f32.mrb[0].mxu0
      %v620 = vadd.f32 0.0, %v619
      %v621 = vpop.f32.mrb[0].mxu0
      %622 = vmatprep.mubr.bf16.mxu0 0
      %623 = vmatmul.mubr.bf16.gmra.mrb[0].mxu0 %v476
      %v624 = vpop.f32.mrb[0].mxu0
      %v625 = vadd.f32 0.0, %v624
      %v626 = vpop.f32.mrb[0].mxu0
      %v627 = vpop.f32.mrb[0].mxu0
      %v628 = vadd.f32 0.0, %v627
      %v629 = vpop.f32.mrb[0].mxu0
      %630 = vmatprep.mubr.bf16.mxu0 0
      %631 = vmatmul.mubr.bf16.gmra.mrb[0].mxu0 %v479
      %v632 = vpop.f32.mrb[0].mxu0
      %v633 = vadd.f32 0.0, %v632
      %v634 = vpop.f32.mrb[0].mxu0
      %v635 = vpop.f32.mrb[0].mxu0
      %v636 = vadd.f32 0.0, %v635
      %v637 = vpop.f32.mrb[0].mxu0
      %638 = vmatprep.mubr.bf16.mxu0 0
      %639 = vmatmul.mubr.bf16.gmra.mrb[0].mxu0 %v482
      %v640 = vpop.f32.mrb[0].mxu0
      %v641 = vadd.f32 0.0, %v640
      %v642 = vpop.f32.mrb[0].mxu0
      %v643 = vpop.f32.mrb[0].mxu0
      %v644 = vadd.f32 0.0, %v643
      %v645 = vpop.f32.mrb[0].mxu0
      %646 = vmatprep.mubr.bf16.mxu0 0
      %647 = vmatmul.mubr.bf16.gmra.mrb[0].mxu0 %v485
      %v648 = vpop.f32.mrb[0].mxu0
      %v649 = vadd.f32 0.0, %v648
      %v650 = vpop.f32.mrb[0].mxu0
      %v651 = vpop.f32.mrb[0].mxu0
      %v652 = vadd.f32 0.0, %v651
      %v653 = vpop.f32.mrb[0].mxu0
      %654 = vmatprep.mubr.bf16.mxu0 0
      %655 = vmatmul.mubr.bf16.gmra.mrb[0].mxu0 %v488
      %v656 = vpop.f32.mrb[0].mxu0
      %v657 = vadd.f32 0.0, %v656
      %v658 = vpop.f32.mrb[0].mxu0
      %v659 = vpop.f32.mrb[0].mxu0
      %v660 = vadd.f32 0.0, %v659
      %v661 = vpop.f32.mrb[0].mxu0
      %662 = vmatprep.mubr.bf16.mxu0 0
      %663 = vmatmul.mubr.bf16.gmra.mrb[0].mxu0 %v491
      %v664 = vpop.f32.mrb[0].mxu0
      %v665 = vadd.f32 0.0, %v664
      %v666 = vpop.f32.mrb[0].mxu0
      %v667 = vpop.f32.mrb[0].mxu0
      %v668 = vadd.f32 0.0, %v667
      %v669 = vpop.f32.mrb[0].mxu0
      %670 = vmatprep.mubr.bf16.mxu0 0
      %671 = vmatmul.mubr.bf16.gmra.mrb[0].mxu0 %v494
      %v672 = vpop.f32.mrb[0].mxu0
      %v673 = vadd.f32 0.0, %v672
      %v674 = vpop.f32.mrb[0].mxu0
      %v675 = vpop.f32.mrb[0].mxu0
      %v676 = vadd.f32 0.0, %v675
      %v677 = vpop.f32.mrb[0].mxu0
      %678 = vmatprep.mubr.bf16.mxu0 0
      %679 = vmatmul.mubr.bf16.gmra.mrb[0].mxu0 %v497
      %v680 = vpop.f32.mrb[0].mxu0
      %v681 = vadd.f32 0.0, %v680
      %v682 = vpop.f32.mrb[0].mxu0
      %v683 = vpop.f32.mrb[0].mxu0
      %v684 = vadd.f32 0.0, %v683
      %v685 = vpop.f32.mrb[0].mxu0
      %686 = vmatprep.mubr.bf16.mxu0 0
      %687 = vmatmul.mubr.bf16.gmra.mrb[0].mxu0 %v500
      %v688 = vpop.f32.mrb[0].mxu0
      %v689 = vadd.f32 0.0, %v688
      %v690 = vpop.f32.mrb[0].mxu0
      %v691 = vpop.f32.mrb[0].mxu0
      %v692 = vadd.f32 0.0, %v691
      %v693 = vpop.f32.mrb[0].mxu0
      %694 = vmatprep.mubr.bf16.mxu0 0
      %695 = vmatmul.mubr.bf16.gmra.mrb[0].mxu0 %v503
      %v696 = vpop.f32.mrb[0].mxu0
      %v697 = vadd.f32 0.0, %v696
      %v698 = vpop.f32.mrb[0].mxu0
      %v699 = vpop.f32.mrb[0].mxu0
      %v700 = vadd.f32 0.0, %v699
      %v701 = vpop.f32.mrb[0].mxu0
      %702 = vmatprep.mubr.bf16.mxu0 0
      %703 = vmatmul.mubr.bf16.gmra.mrb[0].mxu0 %v506
      %v704 = vpop.f32.mrb[0].mxu0
      %v705 = vadd.f32 0.0, %v704
      %v706 = vpop.f32.mrb[0].mxu0
      %v707 = vpop.f32.mrb[0].mxu0
      %v708 = vadd.f32 0.0, %v707
      %v709 = vpop.f32.mrb[0].mxu0
      %710 = vmatprep.mubr.bf16.mxu0 0
      %711 = vmatmul.mubr.bf16.gmra.mrb[0].mxu0 %v509
      %v712 = vpop.f32.mrb[0].mxu0
      %v713 = vadd.f32 0.0, %v712
      %v714 = vpop.f32.mrb[0].mxu0
      %v715 = vpop.f32.mrb[0].mxu0
      %v716 = vadd.f32 0.0, %v715
      %v717 = vpop.f32.mrb[0].mxu0
      %718 = vmatprep.mubr.bf16.mxu0 0
      %719 = vmatmul.mubr.bf16.gmra.mrb[0].mxu0 %v512
      %v720 = vpop.f32.mrb[0].mxu0
      %v721 = vadd.f32 0.0, %v720
      %v722 = vpop.f32.mrb[0].mxu0
      %v723 = vpop.f32.mrb[0].mxu0
      %v724 = vadd.f32 0.0, %v723
      %v725 = vpop.f32.mrb[0].mxu0
      %726 = vmatprep.mubr.bf16.mxu0 0
      %727 = vmatmul.mubr.bf16.gmra.mrb[0].mxu0 %v515
      %v728 = vpop.f32.mrb[0].mxu0
      %v729 = vadd.f32 0.0, %v728
      %v730 = vpop.f32.mrb[0].mxu0
      %v731 = vpop.f32.mrb[0].mxu0
      %v732 = vadd.f32 0.0, %v731
      %v733 = vpop.f32.mrb[0].mxu0
      %734 = vmatprep.mubr.bf16.mxu0 0
      %735 = vmatmul.mubr.bf16.gmra.mrb[0].mxu0 %v518
      %v736 = vpop.f32.mrb[0].mxu0
      %v737 = vadd.f32 0.0, %v736
      %v738 = vpop.f32.mrb[0].mxu0
      %v739 = vpop.f32.mrb[0].mxu0
      %v740 = vadd.f32 0.0, %v739
      %v741 = vpop.f32.mrb[0].mxu0
      %742 = vmatprep.mubr.bf16.mxu0 0
      %743 = vmatmul.mubr.bf16.gmra.mrb[0].mxu0 %v521
      %v744 = vpop.f32.mrb[0].mxu0
      %v745 = vadd.f32 0.0, %v744
      %v746 = vpop.f32.mrb[0].mxu0
      %v747 = vpop.f32.mrb[0].mxu0
      %v748 = vadd.f32 0.0, %v747
      %v749 = vpop.f32.mrb[0].mxu0
      %750 = vmatprep.mubr.bf16.mxu0 0
      %751 = vmatmul.mubr.bf16.gmra.mrb[0].mxu0 %v524
      %v752 = vpop.f32.mrb[0].mxu0
      %v753 = vadd.f32 0.0, %v752
      %v754 = vpop.f32.mrb[0].mxu0
      %v755 = vpop.f32.mrb[0].mxu0
      %v756 = vadd.f32 0.0, %v755
      %v757 = vpop.f32.mrb[0].mxu0
      %758 = vmatprep.mubr.bf16.mxu0 0
      %759 = vmatmul.mubr.bf16.gmra.mrb[0].mxu0 %v527
      %v760 = vpop.f32.mrb[0].mxu0
      %v761 = vadd.f32 0.0, %v760
      %v762 = vpop.f32.mrb[0].mxu0
      %v763 = vpop.f32.mrb[0].mxu0
      %v764 = vadd.f32 0.0, %v763
      %v765 = vpop.f32.mrb[0].mxu0
      %766 = vmatprep.mubr.bf16.mxu0 0
      %767 = vmatmul.mubr.bf16.gmra.mrb[0].mxu0 %v530
      %v768 = vpop.f32.mrb[0].mxu0
      %v769 = vadd.f32 0.0, %v768
      %v770 = vpop.f32.mrb[0].mxu0
      %v771 = vpop.f32.mrb[0].mxu0
      %v772 = vadd.f32 0.0, %v771
      %v773 = vpop.f32.mrb[0].mxu0
      %774 = vmatprep.mubr.bf16.mxu0 0
      %775 = vmatmul.mubr.bf16.gmra.mrb[0].mxu0 %v533
      %v776 = vpop.f32.mrb[0].mxu0
      %v777 = vadd.f32 0.0, %v776
      %v778 = vpop.f32.mrb[0].mxu0
      %v779 = vpop.f32.mrb[0].mxu0
      %v780 = vadd.f32 0.0, %v779
      %v781 = vpop.f32.mrb[0].mxu0
      %782 = vmatprep.mubr.bf16.mxu0 0
      %783 = vmatmul.mubr.bf16.gmra.mrb[0].mxu0 %v536
      %v784 = vpop.f32.mrb[0].mxu0
      %v785 = vadd.f32 0.0, %v784
      %v786 = vpop.f32.mrb[0].mxu0
      %v787 = vpop.f32.mrb[0].mxu0
      %v788 = vadd.f32 0.0, %v787
      %v789 = vpop.f32.mrb[0].mxu0
      %790 = vmatprep.mubr.bf16.mxu0 0
      %791 = vmatmul.mubr.bf16.gmra.mrb[0].mxu0 %v539
      %v792 = vpop.f32.mrb[0].mxu0
      %v793 = vadd.f32 0.0, %v792
      %v794 = vpop.f32.mrb[0].mxu0
      %v795 = vpop.f32.mrb[0].mxu0
      %v796 = vadd.f32 0.0, %v795
      %v797 = vpop.f32.mrb[0].mxu0
      %798 = vmatprep.mubr.bf16.mxu0 0
      %799 = vmatmul.mubr.bf16.gmra.mrb[0].mxu0 %v542
      %v800 = vpop.f32.mrb[0].mxu0
      %v801 = vadd.f32 0.0, %v800
      %v802 = vpop.f32.mrb[0].mxu0
      %v803 = vpop.f32.mrb[0].mxu0
      %v804 = vadd.f32 0.0, %v803
      %v805 = vpop.f32.mrb[0].mxu0
      %806 = vmatprep.mubr.bf16.mxu0 0
      %807 = vmatmul.mubr.bf16.gmra.mrb[0].mxu0 %v545
      %v808 = vpop.f32.mrb[0].mxu0
      %v809 = vadd.f32 0.0, %v808
      %v810 = vpop.f32.mrb[0].mxu0
      %v811 = vpop.f32.mrb[0].mxu0
      %v812 = vadd.f32 0.0, %v811
      %v813 = vpop.f32.mrb[0].mxu0
      %814 = vmatprep.mubr.bf16.mxu0 0
      %815 = vmatmul.mubr.bf16.gmra.mrb[0].mxu0 %v548
      %v816 = vpop.f32.mrb[0].mxu0
      %v817 = vadd.f32 0.0, %v816
      %v818 = vpop.f32.mrb[0].mxu0
      %v819 = vpop.f32.mrb[0].mxu0
      %v820 = vadd.f32 0.0, %v819
      %v821 = vpop.f32.mrb[0].mxu0
      %822 = vmatprep.mubr.bf16.mxu0 0
      %823 = vmatmul.mubr.bf16.gmra.mrb[0].mxu0 %v551
      %v824 = vpop.f32.mrb[0].mxu0
      %v825 = vadd.f32 0.0, %v824
      %v826 = vpop.f32.mrb[0].mxu0
      %v827 = vpop.f32.mrb[0].mxu0
      %v828 = vadd.f32 0.0, %v827
      %v829 = vpop.f32.mrb[0].mxu0
      %830 = vmatprep.mubr.bf16.mxu0 0
      %831 = vmatmul.mubr.bf16.gmra.mrb[0].mxu0 %v554
      %v832 = vpop.f32.mrb[0].mxu0
      %v833 = vadd.f32 0.0, %v832
      %v834 = vpop.f32.mrb[0].mxu0
      %v835 = vpop.f32.mrb[0].mxu0
      %v836 = vadd.f32 0.0, %v835
      %v837 = vpop.f32.mrb[0].mxu0
      %838 = vmatprep.mubr.bf16.mxu0 0
      %839 = vmatmul.mubr.bf16.gmra.mrb[0].mxu0 %v557
      %v840 = vpop.f32.mrb[0].mxu0
      %v841 = vadd.f32 0.0, %v840
      %v842 = vpop.f32.mrb[0].mxu0
      %v843 = vpop.f32.mrb[0].mxu0
      %v844 = vadd.f32 0.0, %v843
      %v845 = vpop.f32.mrb[0].mxu0
      %846 = vmatprep.mubr.bf16.mxu0 0
      %847 = vmatmul.mubr.bf16.gmra.mrb[0].mxu0 %v560
      %v848 = vpop.f32.mrb[0].mxu0
      %v849 = vadd.f32 0.0, %v848
      %v850 = vpop.f32.mrb[0].mxu0
      %v851 = vpop.f32.mrb[0].mxu0
      %v852 = vadd.f32 0.0, %v851
      %v853 = vpop.f32.mrb[0].mxu0
      %854 = vdwg.mxu0
      %855 = vst [vmem:[%s179] sm:$0xff] %v601
      %856 = vst [vmem:[%s179 + $0x8] sm:$0xff] %v604
      %857 = vst [vmem:[%s179 + $0x10] sm:$0xff] %v609
      %858 = vst [vmem:[%s179 + $0x18] sm:$0xff] %v612
      %859 = vst [vmem:[%s179 + $0x20] sm:$0xff] %v617
      %860 = vst [vmem:[%s179 + $0x28] sm:$0xff] %v620
      %861 = vst [vmem:[%s179 + $0x30] sm:$0xff] %v625
      %862 = vst [vmem:[%s179 + $0x38] sm:$0xff] %v628
      %863 = vst [vmem:[%s179 + $0x40] sm:$0xff] %v633
      %864 = vst [vmem:[%s179 + $0x48] sm:$0xff] %v636
      %865 = vst [vmem:[%s179 + $0x50] sm:$0xff] %v641
      %866 = vst [vmem:[%s179 + $0x58] sm:$0xff] %v644
      %867 = vst [vmem:[%s179 + $0x60] sm:$0xff] %v649
      %868 = vst [vmem:[%s179 + $0x68] sm:$0xff] %v652
      %869 = vst [vmem:[%s179 + $0x70] sm:$0xff] %v657
      %870 = vst [vmem:[%s179 + $0x78] sm:$0xff] %v660
      %871 = vst [vmem:[%s179 + $0x80] sm:$0xff] %v665
      %872 = vst [vmem:[%s179 + $0x88] sm:$0xff] %v668
      %873 = vst [vmem:[%s179 + $0x90] sm:$0xff] %v673
      %874 = vst [vmem:[%s179 + $0x98] sm:$0xff] %v676
      %875 = vst [vmem:[%s179 + $0xa0] sm:$0xff] %v681
      %876 = vst [vmem:[%s179 + $0xa8] sm:$0xff] %v684
      %877 = vst [vmem:[%s179 + $0xb0] sm:$0xff] %v689
      %878 = vst [vmem:[%s179 + $0xb8] sm:$0xff] %v692
      %879 = vst [vmem:[%s179 + $0xc0] sm:$0xff] %v697
      %880 = vst [vmem:[%s179 + $0xc8] sm:$0xff] %v700
      %881 = vst [vmem:[%s179 + $0xd0] sm:$0xff] %v705
      %882 = vst [vmem:[%s179 + $0xd8] sm:$0xff] %v708
      %883 = vst [vmem:[%s179 + $0xe0] sm:$0xff] %v713
      %884 = vst [vmem:[%s179 + $0xe8] sm:$0xff] %v716
      %885 = vst [vmem:[%s179 + $0xf0] sm:$0xff] %v721
      %886 = vst [vmem:[%s179 + $0xf8] sm:$0xff] %v724
      %887 = vst [vmem:[%s179 + $0x100] sm:$0xff] %v729
      %888 = vst [vmem:[%s179 + $0x108] sm:$0xff] %v732
      %889 = vst [vmem:[%s179 + $0x110] sm:$0xff] %v737
      %890 = vst [vmem:[%s179 + $0x118] sm:$0xff] %v740
      %891 = vst [vmem:[%s179 + $0x120] sm:$0xff] %v745
      %892 = vst [vmem:[%s179 + $0x128] sm:$0xff] %v748
      %893 = vst [vmem:[%s179 + $0x130] sm:$0xff] %v753
      %894 = vst [vmem:[%s179 + $0x138] sm:$0xff] %v756
      %895 = vst [vmem:[%s179 + $0x140] sm:$0xff] %v761
      %896 = vst [vmem:[%s179 + $0x148] sm:$0xff] %v764
      %897 = vst [vmem:[%s179 + $0x150] sm:$0xff] %v769
      %898 = vst [vmem:[%s179 + $0x158] sm:$0xff] %v772
      %899 = vst [vmem:[%s179 + $0x160] sm:$0xff] %v777
      %900 = vst [vmem:[%s179 + $0x168] sm:$0xff] %v780
      %901 = vst [vmem:[%s179 + $0x170] sm:$0xff] %v785
      %902 = vst [vmem:[%s179 + $0x178] sm:$0xff] %v788
      %903 = vst [vmem:[%s179 + $0x180] sm:$0xff] %v793
      %904 = vst [vmem:[%s179 + $0x188] sm:$0xff] %v796
      %905 = vst [vmem:[%s179 + $0x190] sm:$0xff] %v801
      %906 = vst [vmem:[%s179 + $0x198] sm:$0xff] %v804
      %907 = vst [vmem:[%s179 + $0x1a0] sm:$0xff] %v809
      %908 = vst [vmem:[%s179 + $0x1a8] sm:$0xff] %v812
      %909 = vst [vmem:[%s179 + $0x1b0] sm:$0xff] %v817
      %910 = vst [vmem:[%s179 + $0x1b8] sm:$0xff] %v820
      %911 = vst [vmem:[%s179 + $0x1c0] sm:$0xff] %v825
      %912 = vst [vmem:[%s179 + $0x1c8] sm:$0xff] %v828
      %913 = vst [vmem:[%s179 + $0x1d0] sm:$0xff] %v833
      %914 = vst [vmem:[%s179 + $0x1d8] sm:$0xff] %v836
      %915 = vst [vmem:[%s179 + $0x1e0] sm:$0xff] %v841
      %916 = vst [vmem:[%s179 + $0x1e8] sm:$0xff] %v844
      %917 = vst [vmem:[%s179 + $0x1f0] sm:$0xff] %v849
      %918 = vst [vmem:[%s179 + $0x1f8] sm:$0xff] %v852
      %v919 = vadd.f32 %v601, %v604
      %v920 = vadd.f32 %v919, %v609
      %v921 = vadd.f32 %v920, %v612
      %v922 = vadd.f32 %v921, %v617
      %v923 = vadd.f32 %v922, %v620
      %v924 = vadd.f32 %v923, %v625
      %v925 = vadd.f32 %v924, %v628
      %v926 = vadd.f32 %v925, %v633
      %v927 = vadd.f32 %v926, %v636
      %v928 = vadd.f32 %v927, %v641
      %v929 = vadd.f32 %v928, %v644
      %v930 = vadd.f32 %v929, %v649
      %v931 = vadd.f32 %v930, %v652
      %v932 = vadd.f32 %v931, %v657
      %v933 = vadd.f32 %v932, %v660
      %v934 = vadd.f32 %v933, %v665
      %v935 = vadd.f32 %v934, %v668
      %v936 = vadd.f32 %v935, %v673
      %v937 = vadd.f32 %v936, %v676
      %v938 = vadd.f32 %v937, %v681
      %v939 = vadd.f32 %v938, %v684
      %v940 = vadd.f32 %v939, %v689
      %v941 = vadd.f32 %v940, %v692
      %v942 = vadd.f32 %v941, %v697
      %v943 = vadd.f32 %v942, %v700
      %v944 = vadd.f32 %v943, %v705
      %v945 = vadd.f32 %v944, %v708
      %v946 = vadd.f32 %v945, %v713
      %v947 = vadd.f32 %v946, %v716
      %v948 = vadd.f32 %v947, %v721
      %v949 = vadd.f32 %v948, %v724
      %v950 = vadd.f32 %v949, %v729
      %v951 = vadd.f32 %v950, %v732
      %v952 = vadd.f32 %v951, %v737
      %v953 = vadd.f32 %v952, %v740
      %v954 = vadd.f32 %v953, %v745
      %v955 = vadd.f32 %v954, %v748
      %v956 = vadd.f32 %v955, %v753
      %v957 = vadd.f32 %v956, %v756
      %v958 = vadd.f32 %v957, %v761
      %v959 = vadd.f32 %v958, %v764
      %v960 = vadd.f32 %v959, %v769
      %v961 = vadd.f32 %v960, %v772
      %v962 = vadd.f32 %v961, %v777
      %v963 = vadd.f32 %v962, %v780
      %v964 = vadd.f32 %v963, %v785
      %v965 = vadd.f32 %v964, %v788
      %v966 = vadd.f32 %v965, %v793
      %v967 = vadd.f32 %v966, %v796
      %v968 = vadd.f32 %v967, %v801
      %v969 = vadd.f32 %v968, %v804
      %v970 = vadd.f32 %v969, %v809
      %v971 = vadd.f32 %v970, %v812
      %v972 = vadd.f32 %v971, %v817
      %v973 = vadd.f32 %v972, %v820
      %v974 = vadd.f32 %v973, %v825
      %v975 = vadd.f32 %v974, %v828
      %v976 = vadd.f32 %v975, %v833
      %v977 = vadd.f32 %v976, %v836
      %v978 = vadd.f32 %v977, %v841
      %v979 = vadd.f32 %v978, %v844
      %v980 = vadd.f32 %v979, %v849
      %v981 = vadd.f32 %v980, %v852
      %v982 = vrot.slane %v981, 4
      %v983 = vadd.f32 %v981, %v982
      %v984 = vrot.slane %v983, 2
      %v985 = vadd.f32 %v983, %v984
      %v986 = vrot.slane %v985, 1
      %v987 = vadd.f32 %v985, %v986
      %v988 = vmul.f32 %v601, %v601
      %v989 = vmul.f32 %v604, %v604
      %v990 = vmul.f32 %v609, %v609
      %v991 = vmul.f32 %v612, %v612
      %v992 = vmul.f32 %v617, %v617
      %v993 = vmul.f32 %v620, %v620
      %v994 = vmul.f32 %v625, %v625
      %v995 = vmul.f32 %v628, %v628
      %v996 = vmul.f32 %v633, %v633
      %v997 = vmul.f32 %v636, %v636
      %v998 = vmul.f32 %v641, %v641
      %v999 = vmul.f32 %v644, %v644
      %v1000 = vmul.f32 %v649, %v649
      %v1001 = vmul.f32 %v652, %v652
      %v1002 = vmul.f32 %v657, %v657
      %v1003 = vmul.f32 %v660, %v660
      %v1004 = vmul.f32 %v665, %v665
      %v1005 = vmul.f32 %v668, %v668
      %v1006 = vmul.f32 %v673, %v673
      %v1007 = vmul.f32 %v676, %v676
      %v1008 = vmul.f32 %v681, %v681
      %v1009 = vmul.f32 %v684, %v684
      %v1010 = vmul.f32 %v689, %v689
      %v1011 = vmul.f32 %v692, %v692
      %v1012 = vmul.f32 %v697, %v697
      %v1013 = vmul.f32 %v700, %v700
      %v1014 = vmul.f32 %v705, %v705
      %v1015 = vmul.f32 %v708, %v708
      %v1016 = vmul.f32 %v713, %v713
      %v1017 = vmul.f32 %v716, %v716
      %v1018 = vmul.f32 %v721, %v721
      %v1019 = vmul.f32 %v724, %v724
      %v1020 = vmul.f32 %v729, %v729
      %v1021 = vmul.f32 %v732, %v732
      %v1022 = vmul.f32 %v737, %v737
      %v1023 = vmul.f32 %v740, %v740
      %v1024 = vmul.f32 %v745, %v745
      %v1025 = vmul.f32 %v748, %v748
      %v1026 = vmul.f32 %v753, %v753
      %v1027 = vmul.f32 %v756, %v756
      %v1028 = vmul.f32 %v761, %v761
      %v1029 = vmul.f32 %v764, %v764
      %v1030 = vmul.f32 %v769, %v769
      %v1031 = vmul.f32 %v772, %v772
      %v1032 = vmul.f32 %v777, %v777
      %v1033 = vmul.f32 %v780, %v780
      %v1034 = vmul.f32 %v785, %v785
      %v1035 = vmul.f32 %v788, %v788
      %v1036 = vmul.f32 %v793, %v793
      %v1037 = vmul.f32 %v796, %v796
      %v1038 = vmul.f32 %v801, %v801
      %v1039 = vmul.f32 %v804, %v804
      %v1040 = vmul.f32 %v809, %v809
      %v1041 = vmul.f32 %v812, %v812
      %v1042 = vmul.f32 %v817, %v817
      %v1043 = vmul.f32 %v820, %v820
      %v1044 = vmul.f32 %v825, %v825
      %v1045 = vmul.f32 %v828, %v828
      %v1046 = vmul.f32 %v833, %v833
      %v1047 = vmul.f32 %v836, %v836
      %v1048 = vmul.f32 %v841, %v841
      %v1049 = vmul.f32 %v844, %v844
      %v1050 = vmul.f32 %v849, %v849
      %v1051 = vmul.f32 %v852, %v852
      %v1052 = vadd.f32 %v988, %v989
      %v1053 = vadd.f32 %v1052, %v990
      %v1054 = vadd.f32 %v1053, %v991
      %v1055 = vadd.f32 %v1054, %v992
      %v1056 = vadd.f32 %v1055, %v993
      %v1057 = vadd.f32 %v1056, %v994
      %v1058 = vadd.f32 %v1057, %v995
      %v1059 = vadd.f32 %v1058, %v996
      %v1060 = vadd.f32 %v1059, %v997
      %v1061 = vadd.f32 %v1060, %v998
      %v1062 = vadd.f32 %v1061, %v999
      %v1063 = vadd.f32 %v1062, %v1000
      %v1064 = vadd.f32 %v1063, %v1001
      %v1065 = vadd.f32 %v1064, %v1002
      %v1066 = vadd.f32 %v1065, %v1003
      %v1067 = vadd.f32 %v1066, %v1004
      %v1068 = vadd.f32 %v1067, %v1005
      %v1069 = vadd.f32 %v1068, %v1006
      %v1070 = vadd.f32 %v1069, %v1007
      %v1071 = vadd.f32 %v1070, %v1008
      %v1072 = vadd.f32 %v1071, %v1009
      %v1073 = vadd.f32 %v1072, %v1010
      %v1074 = vadd.f32 %v1073, %v1011
      %v1075 = vadd.f32 %v1074, %v1012
      %v1076 = vadd.f32 %v1075, %v1013
      %v1077 = vadd.f32 %v1076, %v1014
      %v1078 = vadd.f32 %v1077, %v1015
      %v1079 = vadd.f32 %v1078, %v1016
      %v1080 = vadd.f32 %v1079, %v1017
      %v1081 = vadd.f32 %v1080, %v1018
      %v1082 = vadd.f32 %v1081, %v1019
      %v1083 = vadd.f32 %v1082, %v1020
      %v1084 = vadd.f32 %v1083, %v1021
      %v1085 = vadd.f32 %v1084, %v1022
      %v1086 = vadd.f32 %v1085, %v1023
      %v1087 = vadd.f32 %v1086, %v1024
      %v1088 = vadd.f32 %v1087, %v1025
      %v1089 = vadd.f32 %v1088, %v1026
      %v1090 = vadd.f32 %v1089, %v1027
      %v1091 = vadd.f32 %v1090, %v1028
      %v1092 = vadd.f32 %v1091, %v1029
      %v1093 = vadd.f32 %v1092, %v1030
      %v1094 = vadd.f32 %v1093, %v1031
      %v1095 = vadd.f32 %v1094, %v1032
      %v1096 = vadd.f32 %v1095, %v1033
      %v1097 = vadd.f32 %v1096, %v1034
      %v1098 = vadd.f32 %v1097, %v1035
      %v1099 = vadd.f32 %v1098, %v1036
      %v1100 = vadd.f32 %v1099, %v1037
      %v1101 = vadd.f32 %v1100, %v1038
      %v1102 = vadd.f32 %v1101, %v1039
      %v1103 = vadd.f32 %v1102, %v1040
      %v1104 = vadd.f32 %v1103, %v1041
      %v1105 = vadd.f32 %v1104, %v1042
      %v1106 = vadd.f32 %v1105, %v1043
      %v1107 = vadd.f32 %v1106, %v1044
      %v1108 = vadd.f32 %v1107, %v1045
      %v1109 = vadd.f32 %v1108, %v1046
      %v1110 = vadd.f32 %v1109, %v1047
      %v1111 = vadd.f32 %v1110, %v1048
      %v1112 = vadd.f32 %v1111, %v1049
      %v1113 = vadd.f32 %v1112, %v1050
      %v1114 = vadd.f32 %v1113, %v1051
      %v1115 = vrot.slane %v1114, 4
      %v1116 = vadd.f32 %v1114, %v1115
      %v1117 = vrot.slane %v1116, 2
      %v1118 = vadd.f32 %v1116, %v1117
      %v1119 = vrot.slane %v1118, 1
      %v1120 = vadd.f32 %v1118, %v1119
      %v1121 = vlaneseq
      %v1122 = vshrl.u32 %v1121, 7
      %vm1123 = vcmp.eq.s32.totalorder %v1122, 0
      %vm1124 = vcmp.eq.s32.totalorder %v1122, 1
      %v1125 = vsel %vm1124, %v1120, 0.0
      %v1126 = vsel %vm1123, %v987, %v1125
      %1127 = vst [vmem:[%s184] sm:$0xff] %v1126
      %s1128 = smul.u32 64, %s15
      %p1129 = scmp.lt.s32.totalorder %s1128, 255
      %s1130 = scalar_select %p1129, %s1128, 255
      %s1131 = smul.addr %s1130, 8
      %s1132 = scalar_lea.vmem %s2, %s1131
      %p1133 = scmp.lt.s32.totalorder %s15, 3
      %s1134 = scalar_select %p1133, %s15, 3
      %s1135 = smul.addr %s1134, 8
      %s1136 = scalar_lea.vmem %s3, %s1135
      // Predicated region
      $region29: #{decoder_block_forward.6} parent=27 // pred_check
        %p1137 = pneg %p80
      $region30: #{decoder_block_forward.6} parent=27 // pred_check_branch
        %1139 = sbr.rel (%p1137) target = $region32
      $region31: #{decoder_block_forward.6} parent=27 // pred_region
        %s1140 = smul.u32 64, %s15
      $region32: #{decoder_block_forward.6} parent=27 // pred_fallthru
        _
      // Predicated region
      $region33: #{decoder_block_forward.6} parent=27 // pred_check
        %p1141 = pneg %p106
      $region34: #{decoder_block_forward.6} parent=27 // pred_check_branch
        %1143 = sbr.rel (%p1141) target = $region36
      $region35: #{decoder_block_forward.6} parent=27 // pred_region
        _
      $region36: #{decoder_block_forward.6} parent=27 // pred_fallthru
        _
    $region28: #{decoder_block_forward.6} parent=5 // pred_fallthru
      _
    %p1144 = scmp.le.s32.totalorder 2, %s10
    // Predicated region
    $region37: #{decoder_block_forward.6} parent=5 // pred_check
      %p1145 = pneg %p1144
    $region38: #{decoder_block_forward.6} parent=5 // pred_check_branch
      %1147 = sbr.rel (%p1145) target = $region40
    $region39: #{decoder_block_forward.6} parent=5 // pred_region
      %s1148 = ssub.s32 %s10, 2
      // Predicated region
      $region41: #{decoder_block_forward.6} parent=39 // pred_check
        %p1149 = pneg %p86
      $region42: #{decoder_block_forward.6} parent=39 // pred_check_branch
        %1151 = sbr.rel (%p1149) target = $region44
      $region43: #{decoder_block_forward.6} parent=39 // pred_region
        %s1152 = smul.u32 64, %s16
        %p1153 = scmp.lt.s32.totalorder %s1152, 255
        %s1154 = scalar_select %p1153, %s1152, 255
        %s1155 = smul.addr %s1154, 8
        %s1156 = scalar_lea.vmem %s2, %s1155
      $region44: #{decoder_block_forward.6} parent=39 // pred_fallthru
        _
      // Predicated region
      $region45: #{decoder_block_forward.6} parent=39 // pred_check
        %p1157 = pneg %p112
      $region46: #{decoder_block_forward.6} parent=39 // pred_check_branch
        %1159 = sbr.rel (%p1157) target = $region48
      $region47: #{decoder_block_forward.6} parent=39 // pred_region
        %p1160 = scmp.lt.s32.totalorder %s16, 3
        %s1161 = scalar_select %p1160, %s16, 3
        %s1162 = smul.addr %s1161, 8
        %s1163 = scalar_lea.vmem %s3, %s1162
      $region48: #{decoder_block_forward.6} parent=39 // pred_fallthru
        _
    $region40: #{decoder_block_forward.6} parent=5 // pred_fallthru
      _
  $region6: #{decoder_block_forward.6} parent=0 // loop_footer
    %s14 = sadd.s32 1, %s10
  $region7: #{decoder_block_forward.6} parent=0 // loop_footer_branch
    %9 = sbr.rel target = $region3
  $region8: #{decoder_block_forward.6} parent=0 // loop_exit
    _

// kernel: decoder_block_forward.7
$region0: #{decoder_block_forward.7}
  #allocation0 [shape = 'u32[]', space=smem, size = 0x4, offset = 0x4, fixed_abs, tag = 'smem constant byte address 0x4 - core index']
  #allocation1 [shape = 'u32[144,128]{1,0:T(1,128)}', space=vmem, size = 0x12000, scoped, tag = 'internal scratch']
  %s0 = inlined_call_operand.vmem [shape: f32[2048,128], index: 0, kind: input, shape index: {}]
  %s1 = inlined_call_operand.vmem [shape: f32[1,128], index: 1, kind: input, shape index: {}]
  %s2 = inlined_call_operand.vmem [shape: f32[1,128], index: 2, kind: input, shape index: {}]
  %s3 = inlined_call_operand.vmem [shape: f32[2048,128], index: 3, kind: output, shape index: {}]
  %s4 = sld [smem:[#allocation0]]
  $region45: #{decoder_block_forward.7} parent=0
    _
  %s6 = ssub.s32 1, %s4
  %s7 = scalar_select 0, %s6, %s4
  loop: start=0, step=1, limit=6
  $region2: #{decoder_block_forward.7} parent=0 // loop_pre_header
    _
  $region3: #{decoder_block_forward.7} parent=0 // loop_header
    %s9 = sphi 0, %s13
    %p10 = scmp.ge.s32.totalorder %s9, 6
    %s19 = sphi 0, %s21
    %s22 = sphi 0, %s19
    %s23 = sphi 0, %s22
    %s39 = sphi 0, %s23
    %s43 = sphi 0, %s43
    %s45 = sphi 0, %s43
    %s46 = sphi 0, %s45
    %s60 = sphi 0, %s46
    %s64 = sphi 0, %s64
    %s66 = sphi 0, %s64
    %s67 = sphi 0, %s66
    %s81 = sphi 0, %s67
    %s87 = sphi 0, %s89
    %s90 = sphi 0, %s87
    %s91 = sphi 0, %s90
    %s107 = sphi 0, %s91
  $region4: #{decoder_block_forward.7} parent=0 // loop_header_branch
    %12 = sbr.rel (%p10) target = $region8
  $region5: #{decoder_block_forward.7} parent=0 // loop_body
    %s14 = ssub.s32 %s9, 1
    %s15 = ssub.s32 %s9, 2
    %s16 = sadd.s32 %s9, 1
    %s17 = ssub.s32 %s9, %s16
    %p18 = scmp.eq.s32.totalorder %s17, 0
    %s20 = sadd.s32 %s19, 1
    %s21 = scalar_select %p18, %s19, %s20
    %p24 = pneg %p18
    %p25 = scmp.eq.s32.totalorder %s9, 3
    %p26 = por %p24, %p25
    %p27 = scmp.ne.s32.totalorder %s19, %s22
    %p28 = scmp.eq.s32.totalorder %s9, 0
    %p29 = por %p27, %p28
    %p30 = scmp.ne.s32.totalorder %s19, %s22
    %p31 = scmp.eq.s32.totalorder %s14, 3
    %p32 = por %p30, %p31
    %p33 = scmp.ne.s32.totalorder %s22, %s23
    %p34 = scmp.eq.s32.totalorder %s14, 0
    %p35 = por %p33, %p34
    %p36 = scmp.ne.s32.totalorder %s22, %s23
    %p37 = scmp.eq.s32.totalorder %s15, 3
    %p38 = por %p36, %p37
    %p40 = scmp.ne.s32.totalorder %s23, %s39
    %p41 = scmp.eq.s32.totalorder %s15, 0
    %p42 = por %p40, %p41
    %s44 = sadd.s32 %s43, 1
    %p47 = scmp.eq.s32.totalorder %s9, 3
    %p48 = scmp.ne.s32.totalorder %s43, %s45
    %p49 = scmp.eq.s32.totalorder %s9, 0
    %p50 = por %p48, %p49
    %p51 = scmp.ne.s32.totalorder %s43, %s45
    %p52 = scmp.eq.s32.totalorder %s14, 3
    %p53 = por %p51, %p52
    %p54 = scmp.ne.s32.totalorder %s45, %s46
    %p55 = scmp.eq.s32.totalorder %s14, 0
    %p56 = por %p54, %p55
    %p57 = scmp.ne.s32.totalorder %s45, %s46
    %p58 = scmp.eq.s32.totalorder %s15, 3
    %p59 = por %p57, %p58
    %p61 = scmp.ne.s32.totalorder %s46, %s60
    %p62 = scmp.eq.s32.totalorder %s15, 0
    %p63 = por %p61, %p62
    %s65 = sadd.s32 %s64, 1
    %p68 = scmp.eq.s32.totalorder %s9, 3
    %p69 = scmp.ne.s32.totalorder %s64, %s66
    %p70 = scmp.eq.s32.totalorder %s9, 0
    %p71 = por %p69, %p70
    %p72 = scmp.ne.s32.totalorder %s64, %s66
    %p73 = scmp.eq.s32.totalorder %s14, 3
    %p74 = por %p72, %p73
    %p75 = scmp.ne.s32.totalorder %s66, %s67
    %p76 = scmp.eq.s32.totalorder %s14, 0
    %p77 = por %p75, %p76
    %p78 = scmp.ne.s32.totalorder %s66, %s67
    %p79 = scmp.eq.s32.totalorder %s15, 3
    %p80 = por %p78, %p79
    %p82 = scmp.ne.s32.totalorder %s67, %s81
    %p83 = scmp.eq.s32.totalorder %s15, 0
    %p84 = por %p82, %p83
    %s85 = ssub.s32 %s9, %s16
    %p86 = scmp.eq.s32.totalorder %s85, 0
    %s88 = sadd.s32 %s87, 1
    %s89 = scalar_select %p86, %s87, %s88
    %p92 = pneg %p86
    %p93 = scmp.eq.s32.totalorder %s9, 3
    %p94 = por %p92, %p93
    %p95 = scmp.ne.s32.totalorder %s87, %s90
    %p96 = scmp.eq.s32.totalorder %s9, 0
    %p97 = por %p95, %p96
    %p98 = scmp.ne.s32.totalorder %s87, %s90
    %p99 = scmp.eq.s32.totalorder %s14, 3
    %p100 = por %p98, %p99
    %p101 = scmp.ne.s32.totalorder %s90, %s91
    %p102 = scmp.eq.s32.totalorder %s14, 0
    %p103 = por %p101, %p102
    %p104 = scmp.ne.s32.totalorder %s90, %s91
    %p105 = scmp.eq.s32.totalorder %s15, 3
    %p106 = por %p104, %p105
    %p108 = scmp.ne.s32.totalorder %s91, %s107
    %p109 = scmp.eq.s32.totalorder %s15, 0
    %p110 = por %p108, %p109
    %p111 = scmp.le.s32.totalorder 1, %s9
    %p112 = scmp.lt.s32.totalorder %s9, 5
    %p113 = pnand %p111, %p112
    %p114 = pneg %p113
    // Predicated region
    $region9: #{decoder_block_forward.7} parent=5 // pred_check
      _
    $region10: #{decoder_block_forward.7} parent=5 // pred_check_branch
      %116 = sbr.rel (%p113) target = $region12
    $region11: #{decoder_block_forward.7} parent=5 // pred_region
      %s117 = ssub.s32 %s9, 1
      // Predicated region
      $region13: #{decoder_block_forward.7} parent=11 // pred_check
        %p118 = pneg %p56
      $region14: #{decoder_block_forward.7} parent=11 // pred_check_branch
        %120 = sbr.rel (%p118) target = $region16
      $region15: #{decoder_block_forward.7} parent=11 // pred_region
        _
      $region16: #{decoder_block_forward.7} parent=11 // pred_fallthru
        _
      // Predicated region
      $region17: #{decoder_block_forward.7} parent=11 // pred_check
        %p121 = pneg %p77
      $region18: #{decoder_block_forward.7} parent=11 // pred_check_branch
        %123 = sbr.rel (%p121) target = $region20
      $region19: #{decoder_block_forward.7} parent=11 // pred_region
        _
      $region20: #{decoder_block_forward.7} parent=11 // pred_fallthru
        _
    $region12: #{decoder_block_forward.7} parent=5 // pred_fallthru
      _
    %p124 = scmp.lt.s32.totalorder %s9, 4
    // Predicated region
    $region21: #{decoder_block_forward.7} parent=5 // pred_check
      %p125 = pneg %p124
    $region22: #{decoder_block_forward.7} parent=5 // pred_check_branch
      %127 = sbr.rel (%p125) target = $region24
    $region23: #{decoder_block_forward.7} parent=5 // pred_region
      // Predicated region
      $region25: #{decoder_block_forward.7} parent=23 // pred_check
        %p128 = pneg %p29
      $region26: #{decoder_block_forward.7} parent=23 // pred_check_branch
        %130 = sbr.rel (%p128) target = $region28
      $region27: #{decoder_block_forward.7} parent=23 // pred_region
        %s131 = smul.u32 64, %s9
        %p132 = scmp.lt.s32.totalorder %s131, 255
        %s133 = scalar_select %p132, %s131, 255
        %s134 = smul.addr %s133, 8
        %s135 = scalar_lea.vmem %s0, %s134
        %s136 = smul.u32 64, %s9
      $region28: #{decoder_block_forward.7} parent=23 // pred_fallthru
        _
    $region24: #{decoder_block_forward.7} parent=5 // pred_fallthru
      _
    %p137 = scmp.le.s32.totalorder 1, %s9
    %p138 = scmp.lt.s32.totalorder %s9, 5
    %p139 = pnand %p137, %p138
    %p140 = pneg %p139
    // Predicated region
    $region29: #{decoder_block_forward.7} parent=5 // pred_check
      _
    $region30: #{decoder_block_forward.7} parent=5 // pred_check_branch
      %142 = sbr.rel (%p139) target = $region32
    $region31: #{decoder_block_forward.7} parent=5 // pred_region
      %s143 = ssub.s32 %s9, 1
      %s144 = smul.u32 64, %s14
      %p145 = scmp.lt.s32.totalorder %s144, 255
      %s146 = scalar_select %p145, %s144, 255
      %s147 = smul.addr %s146, 8
      %s148 = scalar_lea.vmem %s0, %s147
      %p149 = pneg %p35
      %p150 = pneg %p32
      %p151 = pneg %p56
      %p152 = pneg %p53
      %p153 = pneg %p77
      %p154 = pneg %p74
      %p155 = pneg %p103
      %p156 = pneg %p100
      %s157 = smul.u32 64, %s14
      %p158 = scmp.lt.s32.totalorder %s157, 255
      %s159 = scalar_select %p158, %s157, 255
      %s160 = smul.addr %s159, 8
      %s161 = scalar_lea.vmem %s3, %s160
      %s162 = smul.u32 64, %s14
      %p163 = scmp.lt.s32.totalorder %s162, 255
      %s164 = scalar_select %p163, %s162, 255
      %s165 = smul.addr %s164, 8
      %s166 = scalar_lea.vmem %s0, %s165
      %s167 = smul.u32 64, %s14
      %s168 = smul.u32 64, %s14
      %p169 = scmp.lt.s32.totalorder %s168, 255
      %s170 = scalar_select %p169, %s168, 255
      %s171 = smul.addr %s170, 8
      %s172 = scalar_lea.vmem %s3, %s171
      %s173 = smul.u32 64, %s14
      %v174 = vld [vmem:[%s166] sm:$0xff]
      %v175 = vld [vmem:[%s166 + $0x8] sm:$0xff]
      %v176 = vld [vmem:[%s166 + $0x10] sm:$0xff]
      %v177 = vld [vmem:[%s166 + $0x18] sm:$0xff]
      %v178 = vld [vmem:[%s166 + $0x20] sm:$0xff]
      %v179 = vld [vmem:[%s166 + $0x28] sm:$0xff]
      %v180 = vld [vmem:[%s166 + $0x30] sm:$0xff]
      %v181 = vld [vmem:[%s166 + $0x38] sm:$0xff]
      %v182 = vld [vmem:[%s166 + $0x40] sm:$0xff]
      %v183 = vld [vmem:[%s166 + $0x48] sm:$0xff]
      %v184 = vld [vmem:[%s166 + $0x50] sm:$0xff]
      %v185 = vld [vmem:[%s166 + $0x58] sm:$0xff]
      %v186 = vld [vmem:[%s166 + $0x60] sm:$0xff]
      %v187 = vld [vmem:[%s166 + $0x68] sm:$0xff]
      %v188 = vld [vmem:[%s166 + $0x70] sm:$0xff]
      %v189 = vld [vmem:[%s166 + $0x78] sm:$0xff]
      %v190 = vld [vmem:[%s166 + $0x80] sm:$0xff]
      %v191 = vld [vmem:[%s166 + $0x88] sm:$0xff]
      %v192 = vld [vmem:[%s166 + $0x90] sm:$0xff]
      %v193 = vld [vmem:[%s166 + $0x98] sm:$0xff]
      %v194 = vld [vmem:[%s166 + $0xa0] sm:$0xff]
      %v195 = vld [vmem:[%s166 + $0xa8] sm:$0xff]
      %v196 = vld [vmem:[%s166 + $0xb0] sm:$0xff]
      %v197 = vld [vmem:[%s166 + $0xb8] sm:$0xff]
      %v198 = vld [vmem:[%s166 + $0xc0] sm:$0xff]
      %v199 = vld [vmem:[%s166 + $0xc8] sm:$0xff]
      %v200 = vld [vmem:[%s166 + $0xd0] sm:$0xff]
      %v201 = vld [vmem:[%s166 + $0xd8] sm:$0xff]
      %v202 = vld [vmem:[%s166 + $0xe0] sm:$0xff]
      %v203 = vld [vmem:[%s166 + $0xe8] sm:$0xff]
      %v204 = vld [vmem:[%s166 + $0xf0] sm:$0xff]
      %v205 = vld [vmem:[%s166 + $0xf8] sm:$0xff]
      %v206 = vld [vmem:[%s166 + $0x100] sm:$0xff]
      %v207 = vld [vmem:[%s166 + $0x108] sm:$0xff]
      %v208 = vld [vmem:[%s166 + $0x110] sm:$0xff]
      %v209 = vld [vmem:[%s166 + $0x118] sm:$0xff]
      %v210 = vld [vmem:[%s166 + $0x120] sm:$0xff]
      %v211 = vld [vmem:[%s166 + $0x128] sm:$0xff]
      %v212 = vld [vmem:[%s166 + $0x130] sm:$0xff]
      %v213 = vld [vmem:[%s166 + $0x138] sm:$0xff]
      %v214 = vld [vmem:[%s166 + $0x140] sm:$0xff]
      %v215 = vld [vmem:[%s166 + $0x148] sm:$0xff]
      %v216 = vld [vmem:[%s166 + $0x150] sm:$0xff]
      %v217 = vld [vmem:[%s166 + $0x158] sm:$0xff]
      %v218 = vld [vmem:[%s166 + $0x160] sm:$0xff]
      %v219 = vld [vmem:[%s166 + $0x168] sm:$0xff]
      %v220 = vld [vmem:[%s166 + $0x170] sm:$0xff]
      %v221 = vld [vmem:[%s166 + $0x178] sm:$0xff]
      %v222 = vld [vmem:[%s166 + $0x180] sm:$0xff]
      %v223 = vld [vmem:[%s166 + $0x188] sm:$0xff]
      %v224 = vld [vmem:[%s166 + $0x190] sm:$0xff]
      %v225 = vld [vmem:[%s166 + $0x198] sm:$0xff]
      %v226 = vld [vmem:[%s166 + $0x1a0] sm:$0xff]
      %v227 = vld [vmem:[%s166 + $0x1a8] sm:$0xff]
      %v228 = vld [vmem:[%s166 + $0x1b0] sm:$0xff]
      %v229 = vld [vmem:[%s166 + $0x1b8] sm:$0xff]
      %v230 = vld [vmem:[%s166 + $0x1c0] sm:$0xff]
      %v231 = vld [vmem:[%s166 + $0x1c8] sm:$0xff]
      %v232 = vld [vmem:[%s166 + $0x1d0] sm:$0xff]
      %v233 = vld [vmem:[%s166 + $0x1d8] sm:$0xff]
      %v234 = vld [vmem:[%s166 + $0x1e0] sm:$0xff]
      %v235 = vld [vmem:[%s166 + $0x1e8] sm:$0xff]
      %v236 = vld [vmem:[%s166 + $0x1f0] sm:$0xff]
      %v237 = vld [vmem:[%s166 + $0x1f8] sm:$0xff]
      %v238 = vld [vmem:[%s1] sm:$0x1]
      %v240 = vlaneseq
      %v241 = vshrl.u32 %v240, 7
      %v242 = vsub.s32 0, %v241
      %v243 = vrot.slane %v238, %v242
      %v245 = vmul.f32 %v174, %v243
      %v246 = vmul.f32 %v175, %v243
      %v247 = vmul.f32 %v176, %v243
      %v248 = vmul.f32 %v177, %v243
      %v249 = vmul.f32 %v178, %v243
      %v250 = vmul.f32 %v179, %v243
      %v251 = vmul.f32 %v180, %v243
      %v252 = vmul.f32 %v181, %v243
      %v253 = vmul.f32 %v182, %v243
      %v254 = vmul.f32 %v183, %v243
      %v255 = vmul.f32 %v184, %v243
      %v256 = vmul.f32 %v185, %v243
      %v257 = vmul.f32 %v186, %v243
      %v258 = vmul.f32 %v187, %v243
      %v259 = vmul.f32 %v188, %v243
      %v260 = vmul.f32 %v189, %v243
      %v261 = vmul.f32 %v190, %v243
      %v262 = vmul.f32 %v191, %v243
      %v263 = vmul.f32 %v192, %v243
      %v264 = vmul.f32 %v193, %v243
      %v265 = vmul.f32 %v194, %v243
      %v266 = vmul.f32 %v195, %v243
      %v267 = vmul.f32 %v196, %v243
      %v268 = vmul.f32 %v197, %v243
      %v269 = vmul.f32 %v198, %v243
      %v270 = vmul.f32 %v199, %v243
      %v271 = vmul.f32 %v200, %v243
      %v272 = vmul.f32 %v201, %v243
      %v273 = vmul.f32 %v202, %v243
      %v274 = vmul.f32 %v203, %v243
      %v275 = vmul.f32 %v204, %v243
      %v276 = vmul.f32 %v205, %v243
      %v277 = vmul.f32 %v206, %v243
      %v278 = vmul.f32 %v207, %v243
      %v279 = vmul.f32 %v208, %v243
      %v280 = vmul.f32 %v209, %v243
      %v281 = vmul.f32 %v210, %v243
      %v282 = vmul.f32 %v211, %v243
      %v283 = vmul.f32 %v212, %v243
      %v284 = vmul.f32 %v213, %v243
      %v285 = vmul.f32 %v214, %v243
      %v286 = vmul.f32 %v215, %v243
      %v287 = vmul.f32 %v216, %v243
      %v288 = vmul.f32 %v217, %v243
      %v289 = vmul.f32 %v218, %v243
      %v290 = vmul.f32 %v219, %v243
      %v291 = vmul.f32 %v220, %v243
      %v292 = vmul.f32 %v221, %v243
      %v293 = vmul.f32 %v222, %v243
      %v294 = vmul.f32 %v223, %v243
      %v295 = vmul.f32 %v224, %v243
      %v296 = vmul.f32 %v225, %v243
      %v297 = vmul.f32 %v226, %v243
      %v298 = vmul.f32 %v227, %v243
      %v299 = vmul.f32 %v228, %v243
      %v300 = vmul.f32 %v229, %v243
      %v301 = vmul.f32 %v230, %v243
      %v302 = vmul.f32 %v231, %v243
      %v303 = vmul.f32 %v232, %v243
      %v304 = vmul.f32 %v233, %v243
      %v305 = vmul.f32 %v234, %v243
      %v306 = vmul.f32 %v235, %v243
      %v307 = vmul.f32 %v236, %v243
      %v308 = vmul.f32 %v237, %v243
      %v309 = vld [vmem:[%s2] sm:$0x1]
      %v311 = vlaneseq
      %v312 = vshrl.u32 %v311, 7
      %v313 = vsub.s32 0, %v312
      %v314 = vrot.slane %v309, %v313
      %v316 = vadd.f32 %v245, %v314
      %v317 = vadd.f32 %v246, %v314
      %v318 = vadd.f32 %v247, %v314
      %v319 = vadd.f32 %v248, %v314
      %v320 = vadd.f32 %v249, %v314
      %v321 = vadd.f32 %v250, %v314
      %v322 = vadd.f32 %v251, %v314
      %v323 = vadd.f32 %v252, %v314
      %v324 = vadd.f32 %v253, %v314
      %v325 = vadd.f32 %v254, %v314
      %v326 = vadd.f32 %v255, %v314
      %v327 = vadd.f32 %v256, %v314
      %v328 = vadd.f32 %v257, %v314
      %v329 = vadd.f32 %v258, %v314
      %v330 = vadd.f32 %v259, %v314
      %v331 = vadd.f32 %v260, %v314
      %v332 = vadd.f32 %v261, %v314
      %v333 = vadd.f32 %v262, %v314
      %v334 = vadd.f32 %v263, %v314
      %v335 = vadd.f32 %v264, %v314
      %v336 = vadd.f32 %v265, %v314
      %v337 = vadd.f32 %v266, %v314
      %v338 = vadd.f32 %v267, %v314
      %v339 = vadd.f32 %v268, %v314
      %v340 = vadd.f32 %v269, %v314
      %v341 = vadd.f32 %v270, %v314
      %v342 = vadd.f32 %v271, %v314
      %v343 = vadd.f32 %v272, %v314
      %v344 = vadd.f32 %v273, %v314
      %v345 = vadd.f32 %v274, %v314
      %v346 = vadd.f32 %v275, %v314
      %v347 = vadd.f32 %v276, %v314
      %v348 = vadd.f32 %v277, %v314
      %v349 = vadd.f32 %v278, %v314
      %v350 = vadd.f32 %v279, %v314
      %v351 = vadd.f32 %v280, %v314
      %v352 = vadd.f32 %v281, %v314
      %v353 = vadd.f32 %v282, %v314
      %v354 = vadd.f32 %v283, %v314
      %v355 = vadd.f32 %v284, %v314
      %v356 = vadd.f32 %v285, %v314
      %v357 = vadd.f32 %v286, %v314
      %v358 = vadd.f32 %v287, %v314
      %v359 = vadd.f32 %v288, %v314
      %v360 = vadd.f32 %v289, %v314
      %v361 = vadd.f32 %v290, %v314
      %v362 = vadd.f32 %v291, %v314
      %v363 = vadd.f32 %v292, %v314
      %v364 = vadd.f32 %v293, %v314
      %v365 = vadd.f32 %v294, %v314
      %v366 = vadd.f32 %v295, %v314
      %v367 = vadd.f32 %v296, %v314
      %v368 = vadd.f32 %v297, %v314
      %v369 = vadd.f32 %v298, %v314
      %v370 = vadd.f32 %v299, %v314
      %v371 = vadd.f32 %v300, %v314
      %v372 = vadd.f32 %v301, %v314
      %v373 = vadd.f32 %v302, %v314
      %v374 = vadd.f32 %v303, %v314
      %v375 = vadd.f32 %v304, %v314
      %v376 = vadd.f32 %v305, %v314
      %v377 = vadd.f32 %v306, %v314
      %v378 = vadd.f32 %v307, %v314
      %v379 = vadd.f32 %v308, %v314
      %vm380 = vcmp.gt.f32.partialorder %v316, 0.0
      %vm381 = vcmp.gt.f32.partialorder %v317, 0.0
      %vm382 = vcmp.gt.f32.partialorder %v318, 0.0
      %vm383 = vcmp.gt.f32.partialorder %v319, 0.0
      %vm384 = vcmp.gt.f32.partialorder %v320, 0.0
      %vm385 = vcmp.gt.f32.partialorder %v321, 0.0
      %vm386 = vcmp.gt.f32.partialorder %v322, 0.0
      %vm387 = vcmp.gt.f32.partialorder %v323, 0.0
      %vm388 = vcmp.gt.f32.partialorder %v324, 0.0
      %vm389 = vcmp.gt.f32.partialorder %v325, 0.0
      %vm390 = vcmp.gt.f32.partialorder %v326, 0.0
      %vm391 = vcmp.gt.f32.partialorder %v327, 0.0
      %vm392 = vcmp.gt.f32.partialorder %v328, 0.0
      %vm393 = vcmp.gt.f32.partialorder %v329, 0.0
      %vm394 = vcmp.gt.f32.partialorder %v330, 0.0
      %vm395 = vcmp.gt.f32.partialorder %v331, 0.0
      %vm396 = vcmp.gt.f32.partialorder %v332, 0.0
      %vm397 = vcmp.gt.f32.partialorder %v333, 0.0
      %vm398 = vcmp.gt.f32.partialorder %v334, 0.0
      %vm399 = vcmp.gt.f32.partialorder %v335, 0.0
      %vm400 = vcmp.gt.f32.partialorder %v336, 0.0
      %vm401 = vcmp.gt.f32.partialorder %v337, 0.0
      %vm402 = vcmp.gt.f32.partialorder %v338, 0.0
      %vm403 = vcmp.gt.f32.partialorder %v339, 0.0
      %vm404 = vcmp.gt.f32.partialorder %v340, 0.0
      %vm405 = vcmp.gt.f32.partialorder %v341, 0.0
      %vm406 = vcmp.gt.f32.partialorder %v342, 0.0
      %vm407 = vcmp.gt.f32.partialorder %v343, 0.0
      %vm408 = vcmp.gt.f32.partialorder %v344, 0.0
      %vm409 = vcmp.gt.f32.partialorder %v345, 0.0
      %vm410 = vcmp.gt.f32.partialorder %v346, 0.0
      %vm411 = vcmp.gt.f32.partialorder %v347, 0.0
      %vm412 = vcmp.gt.f32.partialorder %v348, 0.0
      %vm413 = vcmp.gt.f32.partialorder %v349, 0.0
      %vm414 = vcmp.gt.f32.partialorder %v350, 0.0
      %vm415 = vcmp.gt.f32.partialorder %v351, 0.0
      %vm416 = vcmp.gt.f32.partialorder %v352, 0.0
      %vm417 = vcmp.gt.f32.partialorder %v353, 0.0
      %vm418 = vcmp.gt.f32.partialorder %v354, 0.0
      %vm419 = vcmp.gt.f32.partialorder %v355, 0.0
      %vm420 = vcmp.gt.f32.partialorder %v356, 0.0
      %vm421 = vcmp.gt.f32.partialorder %v357, 0.0
      %vm422 = vcmp.gt.f32.partialorder %v358, 0.0
      %vm423 = vcmp.gt.f32.partialorder %v359, 0.0
      %vm424 = vcmp.gt.f32.partialorder %v360, 0.0
      %vm425 = vcmp.gt.f32.partialorder %v361, 0.0
      %vm426 = vcmp.gt.f32.partialorder %v362, 0.0
      %vm427 = vcmp.gt.f32.partialorder %v363, 0.0
      %vm428 = vcmp.gt.f32.partialorder %v364, 0.0
      %vm429 = vcmp.gt.f32.partialorder %v365, 0.0
      %vm430 = vcmp.gt.f32.partialorder %v366, 0.0
      %vm431 = vcmp.gt.f32.partialorder %v367, 0.0
      %vm432 = vcmp.gt.f32.partialorder %v368, 0.0
      %vm433 = vcmp.gt.f32.partialorder %v369, 0.0
      %vm434 = vcmp.gt.f32.partialorder %v370, 0.0
      %vm435 = vcmp.gt.f32.partialorder %v371, 0.0
      %vm436 = vcmp.gt.f32.partialorder %v372, 0.0
      %vm437 = vcmp.gt.f32.partialorder %v373, 0.0
      %vm438 = vcmp.gt.f32.partialorder %v374, 0.0
      %vm439 = vcmp.gt.f32.partialorder %v375, 0.0
      %vm440 = vcmp.gt.f32.partialorder %v376, 0.0
      %vm441 = vcmp.gt.f32.partialorder %v377, 0.0
      %vm442 = vcmp.gt.f32.partialorder %v378, 0.0
      %vm443 = vcmp.gt.f32.partialorder %v379, 0.0
      %v444 = vmul.f32 %v316, 0.1
      %v445 = vmul.f32 %v317, 0.1
      %v446 = vmul.f32 %v318, 0.1
      %v447 = vmul.f32 %v319, 0.1
      %v448 = vmul.f32 %v320, 0.1
      %v449 = vmul.f32 %v321, 0.1
      %v450 = vmul.f32 %v322, 0.1
      %v451 = vmul.f32 %v323, 0.1
      %v452 = vmul.f32 %v324, 0.1
      %v453 = vmul.f32 %v325, 0.1
      %v454 = vmul.f32 %v326, 0.1
      %v455 = vmul.f32 %v327, 0.1
      %v456 = vmul.f32 %v328, 0.1
      %v457 = vmul.f32 %v329, 0.1
      %v458 = vmul.f32 %v330, 0.1
      %v459 = vmul.f32 %v331, 0.1
      %v460 = vmul.f32 %v332, 0.1
      %v461 = vmul.f32 %v333, 0.1
      %v462 = vmul.f32 %v334, 0.1
      %v463 = vmul.f32 %v335, 0.1
      %v464 = vmul.f32 %v336, 0.1
      %v465 = vmul.f32 %v337, 0.1
      %v466 = vmul.f32 %v338, 0.1
      %v467 = vmul.f32 %v339, 0.1
      %v468 = vmul.f32 %v340, 0.1
      %v469 = vmul.f32 %v341, 0.1
      %v470 = vmul.f32 %v342, 0.1
      %v471 = vmul.f32 %v343, 0.1
      %v472 = vmul.f32 %v344, 0.1
      %v473 = vmul.f32 %v345, 0.1
      %v474 = vmul.f32 %v346, 0.1
      %v475 = vmul.f32 %v347, 0.1
      %v476 = vmul.f32 %v348, 0.1
      %v477 = vmul.f32 %v349, 0.1
      %v478 = vmul.f32 %v350, 0.1
      %v479 = vmul.f32 %v351, 0.1
      %v480 = vmul.f32 %v352, 0.1
      %v481 = vmul.f32 %v353, 0.1
      %v482 = vmul.f32 %v354, 0.1
      %v483 = vmul.f32 %v355, 0.1
      %v484 = vmul.f32 %v356, 0.1
      %v485 = vmul.f32 %v357, 0.1
      %v486 = vmul.f32 %v358, 0.1
      %v487 = vmul.f32 %v359, 0.1
      %v488 = vmul.f32 %v360, 0.1
      %v489 = vmul.f32 %v361, 0.1
      %v490 = vmul.f32 %v362, 0.1
      %v491 = vmul.f32 %v363, 0.1
      %v492 = vmul.f32 %v364, 0.1
      %v493 = vmul.f32 %v365, 0.1
      %v494 = vmul.f32 %v366, 0.1
      %v495 = vmul.f32 %v367, 0.1
      %v496 = vmul.f32 %v368, 0.1
      %v497 = vmul.f32 %v369, 0.1
      %v498 = vmul.f32 %v370, 0.1
      %v499 = vmul.f32 %v371, 0.1
      %v500 = vmul.f32 %v372, 0.1
      %v501 = vmul.f32 %v373, 0.1
      %v502 = vmul.f32 %v374, 0.1
      %v503 = vmul.f32 %v375, 0.1
      %v504 = vmul.f32 %v376, 0.1
      %v505 = vmul.f32 %v377, 0.1
      %v506 = vmul.f32 %v378, 0.1
      %v507 = vmul.f32 %v379, 0.1
      %v508 = vsel %vm380, %v316, %v444
      %v509 = vsel %vm381, %v317, %v445
      %v510 = vsel %vm382, %v318, %v446
      %v511 = vsel %vm383, %v319, %v447
      %v512 = vsel %vm384, %v320, %v448
      %v513 = vsel %vm385, %v321, %v449
      %v514 = vsel %vm386, %v322, %v450
      %v515 = vsel %vm387, %v323, %v451
      %v516 = vsel %vm388, %v324, %v452
      %v517 = vsel %vm389, %v325, %v453
      %v518 = vsel %vm390, %v326, %v454
      %v519 = vsel %vm391, %v327, %v455
      %v520 = vsel %vm392, %v328, %v456
      %v521 = vsel %vm393, %v329, %v457
      %v522 = vsel %vm394, %v330, %v458
      %v523 = vsel %vm395, %v331, %v459
      %v524 = vsel %vm396, %v332, %v460
      %v525 = vsel %vm397, %v333, %v461
      %v526 = vsel %vm398, %v334, %v462
      %v527 = vsel %vm399, %v335, %v463
      %v528 = vsel %vm400, %v336, %v464
      %v529 = vsel %vm401, %v337, %v465
      %v530 = vsel %vm402, %v338, %v466
      %v531 = vsel %vm403, %v339, %v467
      %v532 = vsel %vm404, %v340, %v468
      %v533 = vsel %vm405, %v341, %v469
      %v534 = vsel %vm406, %v342, %v470
      %v535 = vsel %vm407, %v343, %v471
      %v536 = vsel %vm408, %v344, %v472
      %v537 = vsel %vm409, %v345, %v473
      %v538 = vsel %vm410, %v346, %v474
      %v539 = vsel %vm411, %v347, %v475
      %v540 = vsel %vm412, %v348, %v476
      %v541 = vsel %vm413, %v349, %v477
      %v542 = vsel %vm414, %v350, %v478
      %v543 = vsel %vm415, %v351, %v479
      %v544 = vsel %vm416, %v352, %v480
      %v545 = vsel %vm417, %v353, %v481
      %v546 = vsel %vm418, %v354, %v482
      %v547 = vsel %vm419, %v355, %v483
      %v548 = vsel %vm420, %v356, %v484
      %v549 = vsel %vm421, %v357, %v485
      %v550 = vsel %vm422, %v358, %v486
      %v551 = vsel %vm423, %v359, %v487
      %v552 = vsel %vm424, %v360, %v488
      %v553 = vsel %vm425, %v361, %v489
      %v554 = vsel %vm426, %v362, %v490
      %v555 = vsel %vm427, %v363, %v491
      %v556 = vsel %vm428, %v364, %v492
      %v557 = vsel %vm429, %v365, %v493
      %v558 = vsel %vm430, %v366, %v494
      %v559 = vsel %vm431, %v367, %v495
      %v560 = vsel %vm432, %v368, %v496
      %v561 = vsel %vm433, %v369, %v497
      %v562 = vsel %vm434, %v370, %v498
      %v563 = vsel %vm435, %v371, %v499
      %v564 = vsel %vm436, %v372, %v500
      %v565 = vsel %vm437, %v373, %v501
      %v566 = vsel %vm438, %v374, %v502
      %v567 = vsel %vm439, %v375, %v503
      %v568 = vsel %vm440, %v376, %v504
      %v569 = vsel %vm441, %v377, %v505
      %v570 = vsel %vm442, %v378, %v506
      %v571 = vsel %vm443, %v379, %v507
      %572 = vst [vmem:[%s172] sm:$0xff] %v508
      %573 = vst [vmem:[%s172 + $0x8] sm:$0xff] %v509
      %574 = vst [vmem:[%s172 + $0x10] sm:$0xff] %v510
      %575 = vst [vmem:[%s172 + $0x18] sm:$0xff] %v511
      %576 = vst [vmem:[%s172 + $0x20] sm:$0xff] %v512
      %577 = vst [vmem:[%s172 + $0x28] sm:$0xff] %v513
      %578 = vst [vmem:[%s172 + $0x30] sm:$0xff] %v514
      %579 = vst [vmem:[%s172 + $0x38] sm:$0xff] %v515
      %580 = vst [vmem:[%s172 + $0x40] sm:$0xff] %v516
      %581 = vst [vmem:[%s172 + $0x48] sm:$0xff] %v517
      %582 = vst [vmem:[%s172 + $0x50] sm:$0xff] %v518
      %583 = vst [vmem:[%s172 + $0x58] sm:$0xff] %v519
      %584 = vst [vmem:[%s172 + $0x60] sm:$0xff] %v520
      %585 = vst [vmem:[%s172 + $0x68] sm:$0xff] %v521
      %586 = vst [vmem:[%s172 + $0x70] sm:$0xff] %v522
      %587 = vst [vmem:[%s172 + $0x78] sm:$0xff] %v523
      %588 = vst [vmem:[%s172 + $0x80] sm:$0xff] %v524
      %589 = vst [vmem:[%s172 + $0x88] sm:$0xff] %v525
      %590 = vst [vmem:[%s172 + $0x90] sm:$0xff] %v526
      %591 = vst [vmem:[%s172 + $0x98] sm:$0xff] %v527
      %592 = vst [vmem:[%s172 + $0xa0] sm:$0xff] %v528
      %593 = vst [vmem:[%s172 + $0xa8] sm:$0xff] %v529
      %594 = vst [vmem:[%s172 + $0xb0] sm:$0xff] %v530
      %595 = vst [vmem:[%s172 + $0xb8] sm:$0xff] %v531
      %596 = vst [vmem:[%s172 + $0xc0] sm:$0xff] %v532
      %597 = vst [vmem:[%s172 + $0xc8] sm:$0xff] %v533
      %598 = vst [vmem:[%s172 + $0xd0] sm:$0xff] %v534
      %599 = vst [vmem:[%s172 + $0xd8] sm:$0xff] %v535
      %600 = vst [vmem:[%s172 + $0xe0] sm:$0xff] %v536
      %601 = vst [vmem:[%s172 + $0xe8] sm:$0xff] %v537
      %602 = vst [vmem:[%s172 + $0xf0] sm:$0xff] %v538
      %603 = vst [vmem:[%s172 + $0xf8] sm:$0xff] %v539
      %604 = vst [vmem:[%s172 + $0x100] sm:$0xff] %v540
      %605 = vst [vmem:[%s172 + $0x108] sm:$0xff] %v541
      %606 = vst [vmem:[%s172 + $0x110] sm:$0xff] %v542
      %607 = vst [vmem:[%s172 + $0x118] sm:$0xff] %v543
      %608 = vst [vmem:[%s172 + $0x120] sm:$0xff] %v544
      %609 = vst [vmem:[%s172 + $0x128] sm:$0xff] %v545
      %610 = vst [vmem:[%s172 + $0x130] sm:$0xff] %v546
      %611 = vst [vmem:[%s172 + $0x138] sm:$0xff] %v547
      %612 = vst [vmem:[%s172 + $0x140] sm:$0xff] %v548
      %613 = vst [vmem:[%s172 + $0x148] sm:$0xff] %v549
      %614 = vst [vmem:[%s172 + $0x150] sm:$0xff] %v550
      %615 = vst [vmem:[%s172 + $0x158] sm:$0xff] %v551
      %616 = vst [vmem:[%s172 + $0x160] sm:$0xff] %v552
      %617 = vst [vmem:[%s172 + $0x168] sm:$0xff] %v553
      %618 = vst [vmem:[%s172 + $0x170] sm:$0xff] %v554
      %619 = vst [vmem:[%s172 + $0x178] sm:$0xff] %v555
      %620 = vst [vmem:[%s172 + $0x180] sm:$0xff] %v556
      %621 = vst [vmem:[%s172 + $0x188] sm:$0xff] %v557
      %622 = vst [vmem:[%s172 + $0x190] sm:$0xff] %v558
      %623 = vst [vmem:[%s172 + $0x198] sm:$0xff] %v559
      %624 = vst [vmem:[%s172 + $0x1a0] sm:$0xff] %v560
      %625 = vst [vmem:[%s172 + $0x1a8] sm:$0xff] %v561
      %626 = vst [vmem:[%s172 + $0x1b0] sm:$0xff] %v562
      %627 = vst [vmem:[%s172 + $0x1b8] sm:$0xff] %v563
      %628 = vst [vmem:[%s172 + $0x1c0] sm:$0xff] %v564
      %629 = vst [vmem:[%s172 + $0x1c8] sm:$0xff] %v565
      %630 = vst [vmem:[%s172 + $0x1d0] sm:$0xff] %v566
      %631 = vst [vmem:[%s172 + $0x1d8] sm:$0xff] %v567
      %632 = vst [vmem:[%s172 + $0x1e0] sm:$0xff] %v568
      %633 = vst [vmem:[%s172 + $0x1e8] sm:$0xff] %v569
      %634 = vst [vmem:[%s172 + $0x1f0] sm:$0xff] %v570
      %635 = vst [vmem:[%s172 + $0x1f8] sm:$0xff] %v571
      %s636 = smul.u32 64, %s14
      %p637 = scmp.lt.s32.totalorder %s636, 255
      %s638 = scalar_select %p637, %s636, 255
      %s639 = smul.addr %s638, 8
      %s640 = scalar_lea.vmem %s3, %s639
      // Predicated region
      $region33: #{decoder_block_forward.7} parent=31 // pred_check
        %p641 = pneg %p100
      $region34: #{decoder_block_forward.7} parent=31 // pred_check_branch
        %643 = sbr.rel (%p641) target = $region36
      $region35: #{decoder_block_forward.7} parent=31 // pred_region
        %s644 = smul.u32 64, %s14
      $region36: #{decoder_block_forward.7} parent=31 // pred_fallthru
        _
    $region32: #{decoder_block_forward.7} parent=5 // pred_fallthru
      _
    %p645 = scmp.le.s32.totalorder 2, %s9
    // Predicated region
    $region37: #{decoder_block_forward.7} parent=5 // pred_check
      %p646 = pneg %p645
    $region38: #{decoder_block_forward.7} parent=5 // pred_check_branch
      %648 = sbr.rel (%p646) target = $region40
    $region39: #{decoder_block_forward.7} parent=5 // pred_region
      %s649 = ssub.s32 %s9, 2
      // Predicated region
      $region41: #{decoder_block_forward.7} parent=39 // pred_check
        %p650 = pneg %p106
      $region42: #{decoder_block_forward.7} parent=39 // pred_check_branch
        %652 = sbr.rel (%p650) target = $region44
      $region43: #{decoder_block_forward.7} parent=39 // pred_region
        %s653 = smul.u32 64, %s15
        %p654 = scmp.lt.s32.totalorder %s653, 255
        %s655 = scalar_select %p654, %s653, 255
        %s656 = smul.addr %s655, 8
        %s657 = scalar_lea.vmem %s3, %s656
      $region44: #{decoder_block_forward.7} parent=39 // pred_fallthru
        _
    $region40: #{decoder_block_forward.7} parent=5 // pred_fallthru
      _
  $region6: #{decoder_block_forward.7} parent=0 // loop_footer
    %s13 = sadd.s32 1, %s9
  $region7: #{decoder_block_forward.7} parent=0 // loop_footer_branch
    %8 = sbr.rel target = $region3
  $region8: #{decoder_block_forward.7} parent=0 // loop_exit
    _

</llo_original>
